<compile_context>
chip_gen: v7x
topology: tpu7x:2x2x1
jax: 0.10.0
libtpu: 0.0.40
codegen_flags: <defaults>
</compile_context>

<pallas_src>
import functools

import jax
import jax.numpy as jnp
import numpy as np
from jax.experimental import pallas as pl
from jax.experimental.pallas import tpu as pltpu


# ---------------------------------------------------------------------------
# Diffusion schedule buffers (mirrors GaussianDiffusion.__init__, linear betas)
# ---------------------------------------------------------------------------
def make_schedule(timesteps: int = 1000):
    betas = np.linspace(1e-4, 0.02, timesteps, dtype=np.float64)
    alphas = 1.0 - betas
    alphas_cumprod = np.cumprod(alphas)
    alphas_cumprod_prev = np.concatenate([np.ones(1), alphas_cumprod[:-1]])
    posterior_variance = betas * (1.0 - alphas_cumprod_prev) / (1.0 - alphas_cumprod)
    posterior_log_variance_clipped = np.log(
        np.concatenate([posterior_variance[1:2], posterior_variance[1:]]))
    posterior_mean_coef1 = betas * np.sqrt(alphas_cumprod_prev) / (1.0 - alphas_cumprod)
    posterior_mean_coef2 = (1.0 - alphas_cumprod_prev) * np.sqrt(alphas) / (1.0 - alphas_cumprod)
    buf = dict(
        betas=betas, alphas=alphas, alphas_cumprod=alphas_cumprod,
        alphas_cumprod_prev=alphas_cumprod_prev,
        posterior_variance=posterior_variance,
        posterior_log_variance_clipped=posterior_log_variance_clipped,
        posterior_mean_coef1=posterior_mean_coef1,
        posterior_mean_coef2=posterior_mean_coef2,
    )
    return {k: jnp.asarray(v, jnp.float32) for k, v in buf.items()}


# ---------------------------------------------------------------------------
# Fused p_losses kernel
#   per batch element b:
#     x_noisy = sqrt(acp[t_b]) * x_start + sqrt(1-acp[t_b]) * noise   (q_sample)
#     pred    = conv3x3(x_noisy) + tbias[b]                           (model)
#     partial = sum((pred - noise)^2)                                 (l2)
# ---------------------------------------------------------------------------
def _fused_p_losses_kernel(ca_ref, cb_ref, tb_ref, w_ref, xp_ref, np_ref,
                           out_ref, *, H, W, C):
    b = pl.program_id(0)
    ca = ca_ref[b]                    # sqrt(alphas_cumprod[t_b])      (SMEM scalar)
    cb = cb_ref[b]                    # sqrt(1 - alphas_cumprod[t_b])  (SMEM scalar)

    xp = xp_ref[0]                    # (C, H+2, W+2) padded x_start
    nd = np_ref[0]                    # (C, H+2, W+2) padded noise

    # q_sample on the padded tile (zero padding is invariant under the combo).
    xn = ca * xp + cb * nd            # (C, H+2, W+2) in VMEM/vregs only

    # Pre-slice the 9*C shifted taps once (trace-time unrolled static slices);
    # each tap is reused for every output channel.
    taps = [[[xn[ci, dh:dh + H, dw:dw + W] for dw in range(3)]
             for dh in range(3)]
            for ci in range(C)]

    # Conv3x3 + bias as scalar-weighted VPU MACs, fused with the squared error.
    dsq = jnp.zeros((H, W), jnp.float32)
    for co in range(C):
        acc = jnp.zeros((H, W), jnp.float32) + tb_ref[b * C + co]
        for dh in range(3):
            for dw in range(3):
                for ci in range(C):
                    # HWIO row-major flat index
                    wv = w_ref[((dh * 3 + dw) * C + ci) * C + co]
                    acc = acc + wv * taps[ci][dh][dw]
        d = acc - nd[co, 1:1 + H, 1:1 + W]      # target = noise (interior)
        dsq = dsq + d * d

    # Exactly one cross-lane reduce per batch element; lane-dense store.
    s = jnp.sum(dsq)
    out_ref[...] = jnp.ones((1, 1, 128), jnp.float32) * s


def fused_p_losses_pallas(sqrt_acp, sqrt_om, tbias_flat, w_flat, xp, npd):
    # sqrt_acp, sqrt_om: (B,)   tbias_flat: (B*C,)   w_flat: (9*C*C,)
    # xp, npd: (B, C, H+2, W+2)  -> per-batch sum-of-squared-error partials
    B, C, Hp, Wp = xp.shape
    H, W = Hp - 2, Wp - 2
    kernel = functools.partial(_fused_p_losses_kernel, H=H, W=W, C=C)
    return pl.pallas_call(
        kernel,
        out_shape=jax.ShapeDtypeStruct((B, 1, 128), jnp.float32),
        grid=(B,),
        in_specs=[
            pl.BlockSpec(memory_space=pltpu.MemorySpace.SMEM),   # sqrt_acp
            pl.BlockSpec(memory_space=pltpu.MemorySpace.SMEM),   # sqrt_om
            pl.BlockSpec(memory_space=pltpu.MemorySpace.SMEM),   # tbias (B*C,)
            pl.BlockSpec(memory_space=pltpu.MemorySpace.SMEM),   # conv weights (9*C*C,)
            pl.BlockSpec((1, C, Hp, Wp), lambda b: (b, 0, 0, 0)),
            pl.BlockSpec((1, C, Hp, Wp), lambda b: (b, 0, 0, 0)),
        ],
        out_specs=pl.BlockSpec((1, 1, 128), lambda b: (b, 0, 0)),
        compiler_params=pltpu.CompilerParams(
            dimension_semantics=("parallel",),
            vmem_limit_bytes=32 * 1024 * 1024,
        ),
    )(sqrt_acp, sqrt_om, tbias_flat, w_flat, xp, npd)


# ---------------------------------------------------------------------------
# Synthetic denoiser model parameters (the `model` passed to GaussianDiffusion)
#   model(x, t) = conv3x3(x) + Linear(sin_emb(t)) broadcast over spatial dims
# ---------------------------------------------------------------------------
def init_model_params(key, C, temb_dim=32):
    k1, k2, k3, k4 = jax.random.split(key, 4)
    return dict(
        w_conv=jax.random.normal(k1, (3, 3, C, C), jnp.float32) * 0.1,   # HWIO
        b_conv=jax.random.normal(k2, (C,), jnp.float32) * 0.1,
        w_t=jax.random.normal(k3, (temb_dim, C), jnp.float32) * 0.1,
        b_t=jax.random.normal(k4, (C,), jnp.float32) * 0.1,
    )


def time_embedding(t, dim):
    half = dim // 2
    freqs = jnp.exp(-jnp.log(10000.0) * jnp.arange(half, dtype=jnp.float32) / half)
    args = t.astype(jnp.float32)[:, None] * freqs[None, :]
    return jnp.concatenate([jnp.sin(args), jnp.cos(args)], axis=-1)


# ---------------------------------------------------------------------------
# GaussianDiffusion.forward == p_losses (objective='pred_noise', loss='l2')
#   x_start, noise: (B, C, H, W)  NCHW (same layout as the PyTorch module)
# ---------------------------------------------------------------------------
@jax.jit
def gaussian_diffusion_forward(params, schedule, x_start, t, noise):
    B, C, H, W = x_start.shape
    acp_t = schedule["alphas_cumprod"][t]                 # (B,)
    sqrt_acp = jnp.sqrt(acp_t)
    sqrt_om = jnp.sqrt(1.0 - acp_t)

    # tiny time-MLP -> per-batch per-channel bias (glue)
    temb = time_embedding(t, params["w_t"].shape[0])      # (B, 32)
    tbias = temb @ params["w_t"] + params["b_t"] + params["b_conv"]   # (B, C)

    # 1-pixel zero pad for 'SAME' 3x3 conv (glue); linear q_sample keeps pad zero
    xp = jnp.pad(x_start, ((0, 0), (0, 0), (1, 1), (1, 1)))
    npd = jnp.pad(noise, ((0, 0), (0, 0), (1, 1), (1, 1)))

    partials = fused_p_losses_pallas(
        sqrt_acp, sqrt_om, tbias.reshape(-1),
        params["w_conv"].reshape(-1), xp, npd)            # (B, 1, 128)

    # tiny final combine of B partial sums -> mean squared error
    return jnp.sum(partials[:, 0, 0]) / (B * C * H * W)


# ---------------------------------------------------------------------------
# Pure-JAX reference for verification
# ---------------------------------------------------------------------------
def reference_forward(params, schedule, x_start, t, noise):
    acp_t = schedule["alphas_cumprod"][t]
    x_noisy = (jnp.sqrt(acp_t)[:, None, None, None] * x_start
               + jnp.sqrt(1.0 - acp_t)[:, None, None, None] * noise)
    conv = jax.lax.conv_general_dilated(
        x_noisy, params["w_conv"], (1, 1), "SAME",
        dimension_numbers=("NCHW", "HWIO", "NCHW"))
    temb = time_embedding(t, params["w_t"].shape[0])
    tbias = temb @ params["w_t"] + params["b_t"] + params["b_conv"]
    pred = conv + tbias[:, :, None, None]
    return jnp.mean((pred - noise) ** 2)


if __name__ == "__main__":
    B, C, H, W = 2, 4, 16, 16
    timesteps = 1000

    key = jax.random.PRNGKey(0)
    k_x, k_n, k_t, k_p = jax.random.split(key, 4)

    x_start = jax.random.normal(k_x, (B, C, H, W), jnp.float32)   # NCHW
    noise = jax.random.normal(k_n, (B, C, H, W), jnp.float32)
    t = jax.random.randint(k_t, (B,), 0, timesteps, jnp.int32)

    schedule = make_schedule(timesteps)
    params = init_model_params(k_p, C)

    loss = gaussian_diffusion_forward(params, schedule, x_start, t, noise)
    loss = jax.block_until_ready(loss)

    ref = jax.block_until_ready(reference_forward(params, schedule, x_start, t, noise))
    assert np.allclose(np.asarray(loss), np.asarray(ref), rtol=1e-4, atol=1e-5), (loss, ref)

    print("KERNEL_OK")
</pallas_src>

<mosaic_0001>
module attributes {stable_mosaic.version = 11 : i64} {
  func.func @_fused_p_losses_kernel(%arg0: i32, %arg1: memref<2xf32, #tpu.memory_space<smem>>, %arg2: memref<2xf32, #tpu.memory_space<smem>>, %arg3: memref<8xf32, #tpu.memory_space<smem>>, %arg4: memref<144xf32, #tpu.memory_space<smem>>, %arg5: memref<1x4x18x18xf32, #tpu.memory_space<vmem>>, %arg6: memref<1x4x18x18xf32, #tpu.memory_space<vmem>>, %arg7: memref<1x1x128xf32, #tpu.memory_space<vmem>>) attributes {dimension_semantics = [#tpu.dimension_semantics<parallel>], iteration_bounds = array<i64: 2>, scalar_prefetch = 0 : i64, scratch_operands = 0 : i64, tpu.core_type = #tpu.core_type<tc>, window_params = [{transform_indices = @transform_0, window_bounds = array<i64: 2>}, {transform_indices = @transform_1, window_bounds = array<i64: 2>}, {transform_indices = @transform_2, window_bounds = array<i64: 8>}, {transform_indices = @transform_3, window_bounds = array<i64: 144>}, {transform_indices = @transform_4, window_bounds = array<i64: 1, 4, 18, 18>}, {transform_indices = @transform_5, window_bounds = array<i64: 1, 4, 18, 18>}, {transform_indices = @transform_6, window_bounds = array<i64: 1, 1, 128>}]} {
    %0 = arith.index_cast %arg0 : i32 to index
    %1 = memref.load %arg1[%0] : memref<2xf32, #tpu.memory_space<smem>>
    %2 = arith.index_cast %arg0 : i32 to index
    %3 = memref.load %arg2[%2] : memref<2xf32, #tpu.memory_space<smem>>
    %c0 = arith.constant 0 : index
    %c0_0 = arith.constant 0 : index
    %c0_1 = arith.constant 0 : index
    %c0_2 = arith.constant 0 : index
    %4 = vector.load %arg5[%c0, %c0_0, %c0_1, %c0_2] : memref<1x4x18x18xf32, #tpu.memory_space<vmem>>, vector<1x4x18x18xf32>
    %5 = vector.shape_cast %4 : vector<1x4x18x18xf32> to vector<4x18x18xf32>
    %c0_3 = arith.constant 0 : index
    %c0_4 = arith.constant 0 : index
    %c0_5 = arith.constant 0 : index
    %c0_6 = arith.constant 0 : index
    %6 = vector.load %arg6[%c0_3, %c0_4, %c0_5, %c0_6] : memref<1x4x18x18xf32, #tpu.memory_space<vmem>>, vector<1x4x18x18xf32>
    %7 = vector.shape_cast %6 : vector<1x4x18x18xf32> to vector<4x18x18xf32>
    %8 = vector.broadcast %1 : f32 to vector<4x18x18xf32>
    %9 = arith.mulf %8, %5 : vector<4x18x18xf32>
    %10 = vector.broadcast %3 : f32 to vector<4x18x18xf32>
    %11 = arith.mulf %10, %7 : vector<4x18x18xf32>
    %12 = arith.addf %9, %11 : vector<4x18x18xf32>
    %13 = vector.extract_strided_slice %12 {offsets = [0, 0, 0], sizes = [1, 16, 16], strides = [1, 1, 1]} : vector<4x18x18xf32> to vector<1x16x16xf32>
    %14 = vector.shape_cast %13 : vector<1x16x16xf32> to vector<16x16xf32>
    %15 = vector.extract_strided_slice %12 {offsets = [0, 0, 1], sizes = [1, 16, 16], strides = [1, 1, 1]} : vector<4x18x18xf32> to vector<1x16x16xf32>
    %16 = vector.shape_cast %15 : vector<1x16x16xf32> to vector<16x16xf32>
    %17 = vector.extract_strided_slice %12 {offsets = [0, 0, 2], sizes = [1, 16, 16], strides = [1, 1, 1]} : vector<4x18x18xf32> to vector<1x16x16xf32>
    %18 = vector.shape_cast %17 : vector<1x16x16xf32> to vector<16x16xf32>
    %19 = vector.extract_strided_slice %12 {offsets = [0, 1, 0], sizes = [1, 16, 16], strides = [1, 1, 1]} : vector<4x18x18xf32> to vector<1x16x16xf32>
    %20 = vector.shape_cast %19 : vector<1x16x16xf32> to vector<16x16xf32>
    %21 = vector.extract_strided_slice %12 {offsets = [0, 1, 1], sizes = [1, 16, 16], strides = [1, 1, 1]} : vector<4x18x18xf32> to vector<1x16x16xf32>
    %22 = vector.shape_cast %21 : vector<1x16x16xf32> to vector<16x16xf32>
    %23 = vector.extract_strided_slice %12 {offsets = [0, 1, 2], sizes = [1, 16, 16], strides = [1, 1, 1]} : vector<4x18x18xf32> to vector<1x16x16xf32>
    %24 = vector.shape_cast %23 : vector<1x16x16xf32> to vector<16x16xf32>
    %25 = vector.extract_strided_slice %12 {offsets = [0, 2, 0], sizes = [1, 16, 16], strides = [1, 1, 1]} : vector<4x18x18xf32> to vector<1x16x16xf32>
    %26 = vector.shape_cast %25 : vector<1x16x16xf32> to vector<16x16xf32>
    %27 = vector.extract_strided_slice %12 {offsets = [0, 2, 1], sizes = [1, 16, 16], strides = [1, 1, 1]} : vector<4x18x18xf32> to vector<1x16x16xf32>
    %28 = vector.shape_cast %27 : vector<1x16x16xf32> to vector<16x16xf32>
    %29 = vector.extract_strided_slice %12 {offsets = [0, 2, 2], sizes = [1, 16, 16], strides = [1, 1, 1]} : vector<4x18x18xf32> to vector<1x16x16xf32>
    %30 = vector.shape_cast %29 : vector<1x16x16xf32> to vector<16x16xf32>
    %31 = vector.extract_strided_slice %12 {offsets = [1, 0, 0], sizes = [1, 16, 16], strides = [1, 1, 1]} : vector<4x18x18xf32> to vector<1x16x16xf32>
    %32 = vector.shape_cast %31 : vector<1x16x16xf32> to vector<16x16xf32>
    %33 = vector.extract_strided_slice %12 {offsets = [1, 0, 1], sizes = [1, 16, 16], strides = [1, 1, 1]} : vector<4x18x18xf32> to vector<1x16x16xf32>
    %34 = vector.shape_cast %33 : vector<1x16x16xf32> to vector<16x16xf32>
    %35 = vector.extract_strided_slice %12 {offsets = [1, 0, 2], sizes = [1, 16, 16], strides = [1, 1, 1]} : vector<4x18x18xf32> to vector<1x16x16xf32>
    %36 = vector.shape_cast %35 : vector<1x16x16xf32> to vector<16x16xf32>
    %37 = vector.extract_strided_slice %12 {offsets = [1, 1, 0], sizes = [1, 16, 16], strides = [1, 1, 1]} : vector<4x18x18xf32> to vector<1x16x16xf32>
    %38 = vector.shape_cast %37 : vector<1x16x16xf32> to vector<16x16xf32>
    %39 = vector.extract_strided_slice %12 {offsets = [1, 1, 1], sizes = [1, 16, 16], strides = [1, 1, 1]} : vector<4x18x18xf32> to vector<1x16x16xf32>
    %40 = vector.shape_cast %39 : vector<1x16x16xf32> to vector<16x16xf32>
    %41 = vector.extract_strided_slice %12 {offsets = [1, 1, 2], sizes = [1, 16, 16], strides = [1, 1, 1]} : vector<4x18x18xf32> to vector<1x16x16xf32>
    %42 = vector.shape_cast %41 : vector<1x16x16xf32> to vector<16x16xf32>
    %43 = vector.extract_strided_slice %12 {offsets = [1, 2, 0], sizes = [1, 16, 16], strides = [1, 1, 1]} : vector<4x18x18xf32> to vector<1x16x16xf32>
    %44 = vector.shape_cast %43 : vector<1x16x16xf32> to vector<16x16xf32>
    %45 = vector.extract_strided_slice %12 {offsets = [1, 2, 1], sizes = [1, 16, 16], strides = [1, 1, 1]} : vector<4x18x18xf32> to vector<1x16x16xf32>
    %46 = vector.shape_cast %45 : vector<1x16x16xf32> to vector<16x16xf32>
    %47 = vector.extract_strided_slice %12 {offsets = [1, 2, 2], sizes = [1, 16, 16], strides = [1, 1, 1]} : vector<4x18x18xf32> to vector<1x16x16xf32>
    %48 = vector.shape_cast %47 : vector<1x16x16xf32> to vector<16x16xf32>
    %49 = vector.extract_strided_slice %12 {offsets = [2, 0, 0], sizes = [1, 16, 16], strides = [1, 1, 1]} : vector<4x18x18xf32> to vector<1x16x16xf32>
    %50 = vector.shape_cast %49 : vector<1x16x16xf32> to vector<16x16xf32>
    %51 = vector.extract_strided_slice %12 {offsets = [2, 0, 1], sizes = [1, 16, 16], strides = [1, 1, 1]} : vector<4x18x18xf32> to vector<1x16x16xf32>
    %52 = vector.shape_cast %51 : vector<1x16x16xf32> to vector<16x16xf32>
    %53 = vector.extract_strided_slice %12 {offsets = [2, 0, 2], sizes = [1, 16, 16], strides = [1, 1, 1]} : vector<4x18x18xf32> to vector<1x16x16xf32>
    %54 = vector.shape_cast %53 : vector<1x16x16xf32> to vector<16x16xf32>
    %55 = vector.extract_strided_slice %12 {offsets = [2, 1, 0], sizes = [1, 16, 16], strides = [1, 1, 1]} : vector<4x18x18xf32> to vector<1x16x16xf32>
    %56 = vector.shape_cast %55 : vector<1x16x16xf32> to vector<16x16xf32>
    %57 = vector.extract_strided_slice %12 {offsets = [2, 1, 1], sizes = [1, 16, 16], strides = [1, 1, 1]} : vector<4x18x18xf32> to vector<1x16x16xf32>
    %58 = vector.shape_cast %57 : vector<1x16x16xf32> to vector<16x16xf32>
    %59 = vector.extract_strided_slice %12 {offsets = [2, 1, 2], sizes = [1, 16, 16], strides = [1, 1, 1]} : vector<4x18x18xf32> to vector<1x16x16xf32>
    %60 = vector.shape_cast %59 : vector<1x16x16xf32> to vector<16x16xf32>
    %61 = vector.extract_strided_slice %12 {offsets = [2, 2, 0], sizes = [1, 16, 16], strides = [1, 1, 1]} : vector<4x18x18xf32> to vector<1x16x16xf32>
    %62 = vector.shape_cast %61 : vector<1x16x16xf32> to vector<16x16xf32>
    %63 = vector.extract_strided_slice %12 {offsets = [2, 2, 1], sizes = [1, 16, 16], strides = [1, 1, 1]} : vector<4x18x18xf32> to vector<1x16x16xf32>
    %64 = vector.shape_cast %63 : vector<1x16x16xf32> to vector<16x16xf32>
    %65 = vector.extract_strided_slice %12 {offsets = [2, 2, 2], sizes = [1, 16, 16], strides = [1, 1, 1]} : vector<4x18x18xf32> to vector<1x16x16xf32>
    %66 = vector.shape_cast %65 : vector<1x16x16xf32> to vector<16x16xf32>
    %67 = vector.extract_strided_slice %12 {offsets = [3, 0, 0], sizes = [1, 16, 16], strides = [1, 1, 1]} : vector<4x18x18xf32> to vector<1x16x16xf32>
    %68 = vector.shape_cast %67 : vector<1x16x16xf32> to vector<16x16xf32>
    %69 = vector.extract_strided_slice %12 {offsets = [3, 0, 1], sizes = [1, 16, 16], strides = [1, 1, 1]} : vector<4x18x18xf32> to vector<1x16x16xf32>
    %70 = vector.shape_cast %69 : vector<1x16x16xf32> to vector<16x16xf32>
    %71 = vector.extract_strided_slice %12 {offsets = [3, 0, 2], sizes = [1, 16, 16], strides = [1, 1, 1]} : vector<4x18x18xf32> to vector<1x16x16xf32>
    %72 = vector.shape_cast %71 : vector<1x16x16xf32> to vector<16x16xf32>
    %73 = vector.extract_strided_slice %12 {offsets = [3, 1, 0], sizes = [1, 16, 16], strides = [1, 1, 1]} : vector<4x18x18xf32> to vector<1x16x16xf32>
    %74 = vector.shape_cast %73 : vector<1x16x16xf32> to vector<16x16xf32>
    %75 = vector.extract_strided_slice %12 {offsets = [3, 1, 1], sizes = [1, 16, 16], strides = [1, 1, 1]} : vector<4x18x18xf32> to vector<1x16x16xf32>
    %76 = vector.shape_cast %75 : vector<1x16x16xf32> to vector<16x16xf32>
    %77 = vector.extract_strided_slice %12 {offsets = [3, 1, 2], sizes = [1, 16, 16], strides = [1, 1, 1]} : vector<4x18x18xf32> to vector<1x16x16xf32>
    %78 = vector.shape_cast %77 : vector<1x16x16xf32> to vector<16x16xf32>
    %79 = vector.extract_strided_slice %12 {offsets = [3, 2, 0], sizes = [1, 16, 16], strides = [1, 1, 1]} : vector<4x18x18xf32> to vector<1x16x16xf32>
    %80 = vector.shape_cast %79 : vector<1x16x16xf32> to vector<16x16xf32>
    %81 = vector.extract_strided_slice %12 {offsets = [3, 2, 1], sizes = [1, 16, 16], strides = [1, 1, 1]} : vector<4x18x18xf32> to vector<1x16x16xf32>
    %82 = vector.shape_cast %81 : vector<1x16x16xf32> to vector<16x16xf32>
    %83 = vector.extract_strided_slice %12 {offsets = [3, 2, 2], sizes = [1, 16, 16], strides = [1, 1, 1]} : vector<4x18x18xf32> to vector<1x16x16xf32>
    %84 = vector.shape_cast %83 : vector<1x16x16xf32> to vector<16x16xf32>
    %cst = arith.constant 0.000000e+00 : f32
    %85 = vector.broadcast %cst : f32 to vector<16x16xf32>
    %cst_7 = arith.constant 0.000000e+00 : f32
    %86 = vector.broadcast %cst_7 : f32 to vector<16x16xf32>
    %c4_i32 = arith.constant 4 : i32
    %87 = arith.muli %arg0, %c4_i32 : i32
    %c0_i32 = arith.constant 0 : i32
    %88 = arith.addi %87, %c0_i32 : i32
    %89 = arith.index_cast %88 : i32 to index
    %90 = memref.load %arg3[%89] : memref<8xf32, #tpu.memory_space<smem>>
    %91 = vector.broadcast %90 : f32 to vector<16x16xf32>
    %92 = arith.addf %86, %91 : vector<16x16xf32>
    %c0_8 = arith.constant 0 : index
    %93 = memref.load %arg4[%c0_8] : memref<144xf32, #tpu.memory_space<smem>>
    %94 = vector.broadcast %93 : f32 to vector<16x16xf32>
    %95 = arith.mulf %94, %14 : vector<16x16xf32>
    %96 = arith.addf %92, %95 : vector<16x16xf32>
    %c4 = arith.constant 4 : index
    %97 = memref.load %arg4[%c4] : memref<144xf32, #tpu.memory_space<smem>>
    %98 = vector.broadcast %97 : f32 to vector<16x16xf32>
    %99 = arith.mulf %98, %32 : vector<16x16xf32>
    %100 = arith.addf %96, %99 : vector<16x16xf32>
    %c8 = arith.constant 8 : index
    %101 = memref.load %arg4[%c8] : memref<144xf32, #tpu.memory_space<smem>>
    %102 = vector.broadcast %101 : f32 to vector<16x16xf32>
    %103 = arith.mulf %102, %50 : vector<16x16xf32>
    %104 = arith.addf %100, %103 : vector<16x16xf32>
    %c12 = arith.constant 12 : index
    %105 = memref.load %arg4[%c12] : memref<144xf32, #tpu.memory_space<smem>>
    %106 = vector.broadcast %105 : f32 to vector<16x16xf32>
    %107 = arith.mulf %106, %68 : vector<16x16xf32>
    %108 = arith.addf %104, %107 : vector<16x16xf32>
    %c16 = arith.constant 16 : index
    %109 = memref.load %arg4[%c16] : memref<144xf32, #tpu.memory_space<smem>>
    %110 = vector.broadcast %109 : f32 to vector<16x16xf32>
    %111 = arith.mulf %110, %16 : vector<16x16xf32>
    %112 = arith.addf %108, %111 : vector<16x16xf32>
    %c20 = arith.constant 20 : index
    %113 = memref.load %arg4[%c20] : memref<144xf32, #tpu.memory_space<smem>>
    %114 = vector.broadcast %113 : f32 to vector<16x16xf32>
    %115 = arith.mulf %114, %34 : vector<16x16xf32>
    %116 = arith.addf %112, %115 : vector<16x16xf32>
    %c24 = arith.constant 24 : index
    %117 = memref.load %arg4[%c24] : memref<144xf32, #tpu.memory_space<smem>>
    %118 = vector.broadcast %117 : f32 to vector<16x16xf32>
    %119 = arith.mulf %118, %52 : vector<16x16xf32>
    %120 = arith.addf %116, %119 : vector<16x16xf32>
    %c28 = arith.constant 28 : index
    %121 = memref.load %arg4[%c28] : memref<144xf32, #tpu.memory_space<smem>>
    %122 = vector.broadcast %121 : f32 to vector<16x16xf32>
    %123 = arith.mulf %122, %70 : vector<16x16xf32>
    %124 = arith.addf %120, %123 : vector<16x16xf32>
    %c32 = arith.constant 32 : index
    %125 = memref.load %arg4[%c32] : memref<144xf32, #tpu.memory_space<smem>>
    %126 = vector.broadcast %125 : f32 to vector<16x16xf32>
    %127 = arith.mulf %126, %18 : vector<16x16xf32>
    %128 = arith.addf %124, %127 : vector<16x16xf32>
    %c36 = arith.constant 36 : index
    %129 = memref.load %arg4[%c36] : memref<144xf32, #tpu.memory_space<smem>>
    %130 = vector.broadcast %129 : f32 to vector<16x16xf32>
    %131 = arith.mulf %130, %36 : vector<16x16xf32>
    %132 = arith.addf %128, %131 : vector<16x16xf32>
    %c40 = arith.constant 40 : index
    %133 = memref.load %arg4[%c40] : memref<144xf32, #tpu.memory_space<smem>>
    %134 = vector.broadcast %133 : f32 to vector<16x16xf32>
    %135 = arith.mulf %134, %54 : vector<16x16xf32>
    %136 = arith.addf %132, %135 : vector<16x16xf32>
    %c44 = arith.constant 44 : index
    %137 = memref.load %arg4[%c44] : memref<144xf32, #tpu.memory_space<smem>>
    %138 = vector.broadcast %137 : f32 to vector<16x16xf32>
    %139 = arith.mulf %138, %72 : vector<16x16xf32>
    %140 = arith.addf %136, %139 : vector<16x16xf32>
    %c48 = arith.constant 48 : index
    %141 = memref.load %arg4[%c48] : memref<144xf32, #tpu.memory_space<smem>>
    %142 = vector.broadcast %141 : f32 to vector<16x16xf32>
    %143 = arith.mulf %142, %20 : vector<16x16xf32>
    %144 = arith.addf %140, %143 : vector<16x16xf32>
    %c52 = arith.constant 52 : index
    %145 = memref.load %arg4[%c52] : memref<144xf32, #tpu.memory_space<smem>>
    %146 = vector.broadcast %145 : f32 to vector<16x16xf32>
    %147 = arith.mulf %146, %38 : vector<16x16xf32>
    %148 = arith.addf %144, %147 : vector<16x16xf32>
    %c56 = arith.constant 56 : index
    %149 = memref.load %arg4[%c56] : memref<144xf32, #tpu.memory_space<smem>>
    %150 = vector.broadcast %149 : f32 to vector<16x16xf32>
    %151 = arith.mulf %150, %56 : vector<16x16xf32>
    %152 = arith.addf %148, %151 : vector<16x16xf32>
    %c60 = arith.constant 60 : index
    %153 = memref.load %arg4[%c60] : memref<144xf32, #tpu.memory_space<smem>>
    %154 = vector.broadcast %153 : f32 to vector<16x16xf32>
    %155 = arith.mulf %154, %74 : vector<16x16xf32>
    %156 = arith.addf %152, %155 : vector<16x16xf32>
    %c64 = arith.constant 64 : index
    %157 = memref.load %arg4[%c64] : memref<144xf32, #tpu.memory_space<smem>>
    %158 = vector.broadcast %157 : f32 to vector<16x16xf32>
    %159 = arith.mulf %158, %22 : vector<16x16xf32>
    %160 = arith.addf %156, %159 : vector<16x16xf32>
    %c68 = arith.constant 68 : index
    %161 = memref.load %arg4[%c68] : memref<144xf32, #tpu.memory_space<smem>>
    %162 = vector.broadcast %161 : f32 to vector<16x16xf32>
    %163 = arith.mulf %162, %40 : vector<16x16xf32>
    %164 = arith.addf %160, %163 : vector<16x16xf32>
    %c72 = arith.constant 72 : index
    %165 = memref.load %arg4[%c72] : memref<144xf32, #tpu.memory_space<smem>>
    %166 = vector.broadcast %165 : f32 to vector<16x16xf32>
    %167 = arith.mulf %166, %58 : vector<16x16xf32>
    %168 = arith.addf %164, %167 : vector<16x16xf32>
    %c76 = arith.constant 76 : index
    %169 = memref.load %arg4[%c76] : memref<144xf32, #tpu.memory_space<smem>>
    %170 = vector.broadcast %169 : f32 to vector<16x16xf32>
    %171 = arith.mulf %170, %76 : vector<16x16xf32>
    %172 = arith.addf %168, %171 : vector<16x16xf32>
    %c80 = arith.constant 80 : index
    %173 = memref.load %arg4[%c80] : memref<144xf32, #tpu.memory_space<smem>>
    %174 = vector.broadcast %173 : f32 to vector<16x16xf32>
    %175 = arith.mulf %174, %24 : vector<16x16xf32>
    %176 = arith.addf %172, %175 : vector<16x16xf32>
    %c84 = arith.constant 84 : index
    %177 = memref.load %arg4[%c84] : memref<144xf32, #tpu.memory_space<smem>>
    %178 = vector.broadcast %177 : f32 to vector<16x16xf32>
    %179 = arith.mulf %178, %42 : vector<16x16xf32>
    %180 = arith.addf %176, %179 : vector<16x16xf32>
    %c88 = arith.constant 88 : index
    %181 = memref.load %arg4[%c88] : memref<144xf32, #tpu.memory_space<smem>>
    %182 = vector.broadcast %181 : f32 to vector<16x16xf32>
    %183 = arith.mulf %182, %60 : vector<16x16xf32>
    %184 = arith.addf %180, %183 : vector<16x16xf32>
    %c92 = arith.constant 92 : index
    %185 = memref.load %arg4[%c92] : memref<144xf32, #tpu.memory_space<smem>>
    %186 = vector.broadcast %185 : f32 to vector<16x16xf32>
    %187 = arith.mulf %186, %78 : vector<16x16xf32>
    %188 = arith.addf %184, %187 : vector<16x16xf32>
    %c96 = arith.constant 96 : index
    %189 = memref.load %arg4[%c96] : memref<144xf32, #tpu.memory_space<smem>>
    %190 = vector.broadcast %189 : f32 to vector<16x16xf32>
    %191 = arith.mulf %190, %26 : vector<16x16xf32>
    %192 = arith.addf %188, %191 : vector<16x16xf32>
    %c100 = arith.constant 100 : index
    %193 = memref.load %arg4[%c100] : memref<144xf32, #tpu.memory_space<smem>>
    %194 = vector.broadcast %193 : f32 to vector<16x16xf32>
    %195 = arith.mulf %194, %44 : vector<16x16xf32>
    %196 = arith.addf %192, %195 : vector<16x16xf32>
    %c104 = arith.constant 104 : index
    %197 = memref.load %arg4[%c104] : memref<144xf32, #tpu.memory_space<smem>>
    %198 = vector.broadcast %197 : f32 to vector<16x16xf32>
    %199 = arith.mulf %198, %62 : vector<16x16xf32>
    %200 = arith.addf %196, %199 : vector<16x16xf32>
    %c108 = arith.constant 108 : index
    %201 = memref.load %arg4[%c108] : memref<144xf32, #tpu.memory_space<smem>>
    %202 = vector.broadcast %201 : f32 to vector<16x16xf32>
    %203 = arith.mulf %202, %80 : vector<16x16xf32>
    %204 = arith.addf %200, %203 : vector<16x16xf32>
    %c112 = arith.constant 112 : index
    %205 = memref.load %arg4[%c112] : memref<144xf32, #tpu.memory_space<smem>>
    %206 = vector.broadcast %205 : f32 to vector<16x16xf32>
    %207 = arith.mulf %206, %28 : vector<16x16xf32>
    %208 = arith.addf %204, %207 : vector<16x16xf32>
    %c116 = arith.constant 116 : index
    %209 = memref.load %arg4[%c116] : memref<144xf32, #tpu.memory_space<smem>>
    %210 = vector.broadcast %209 : f32 to vector<16x16xf32>
    %211 = arith.mulf %210, %46 : vector<16x16xf32>
    %212 = arith.addf %208, %211 : vector<16x16xf32>
    %c120 = arith.constant 120 : index
    %213 = memref.load %arg4[%c120] : memref<144xf32, #tpu.memory_space<smem>>
    %214 = vector.broadcast %213 : f32 to vector<16x16xf32>
    %215 = arith.mulf %214, %64 : vector<16x16xf32>
    %216 = arith.addf %212, %215 : vector<16x16xf32>
    %c124 = arith.constant 124 : index
    %217 = memref.load %arg4[%c124] : memref<144xf32, #tpu.memory_space<smem>>
    %218 = vector.broadcast %217 : f32 to vector<16x16xf32>
    %219 = arith.mulf %218, %82 : vector<16x16xf32>
    %220 = arith.addf %216, %219 : vector<16x16xf32>
    %c128 = arith.constant 128 : index
    %221 = memref.load %arg4[%c128] : memref<144xf32, #tpu.memory_space<smem>>
    %222 = vector.broadcast %221 : f32 to vector<16x16xf32>
    %223 = arith.mulf %222, %30 : vector<16x16xf32>
    %224 = arith.addf %220, %223 : vector<16x16xf32>
    %c132 = arith.constant 132 : index
    %225 = memref.load %arg4[%c132] : memref<144xf32, #tpu.memory_space<smem>>
    %226 = vector.broadcast %225 : f32 to vector<16x16xf32>
    %227 = arith.mulf %226, %48 : vector<16x16xf32>
    %228 = arith.addf %224, %227 : vector<16x16xf32>
    %c136 = arith.constant 136 : index
    %229 = memref.load %arg4[%c136] : memref<144xf32, #tpu.memory_space<smem>>
    %230 = vector.broadcast %229 : f32 to vector<16x16xf32>
    %231 = arith.mulf %230, %66 : vector<16x16xf32>
    %232 = arith.addf %228, %231 : vector<16x16xf32>
    %c140 = arith.constant 140 : index
    %233 = memref.load %arg4[%c140] : memref<144xf32, #tpu.memory_space<smem>>
    %234 = vector.broadcast %233 : f32 to vector<16x16xf32>
    %235 = arith.mulf %234, %84 : vector<16x16xf32>
    %236 = arith.addf %232, %235 : vector<16x16xf32>
    %237 = vector.extract_strided_slice %7 {offsets = [0, 1, 1], sizes = [1, 16, 16], strides = [1, 1, 1]} : vector<4x18x18xf32> to vector<1x16x16xf32>
    %238 = vector.shape_cast %237 : vector<1x16x16xf32> to vector<16x16xf32>
    %239 = arith.subf %236, %238 : vector<16x16xf32>
    %240 = arith.mulf %239, %239 : vector<16x16xf32>
    %241 = arith.addf %85, %240 : vector<16x16xf32>
    %cst_9 = arith.constant 0.000000e+00 : f32
    %242 = vector.broadcast %cst_9 : f32 to vector<16x16xf32>
    %c4_i32_10 = arith.constant 4 : i32
    %243 = arith.muli %arg0, %c4_i32_10 : i32
    %c1_i32 = arith.constant 1 : i32
    %244 = arith.addi %243, %c1_i32 : i32
    %245 = arith.index_cast %244 : i32 to index
    %246 = memref.load %arg3[%245] : memref<8xf32, #tpu.memory_space<smem>>
    %247 = vector.broadcast %246 : f32 to vector<16x16xf32>
    %248 = arith.addf %242, %247 : vector<16x16xf32>
    %c1 = arith.constant 1 : index
    %249 = memref.load %arg4[%c1] : memref<144xf32, #tpu.memory_space<smem>>
    %250 = vector.broadcast %249 : f32 to vector<16x16xf32>
    %251 = arith.mulf %250, %14 : vector<16x16xf32>
    %252 = arith.addf %248, %251 : vector<16x16xf32>
    %c5 = arith.constant 5 : index
    %253 = memref.load %arg4[%c5] : memref<144xf32, #tpu.memory_space<smem>>
    %254 = vector.broadcast %253 : f32 to vector<16x16xf32>
    %255 = arith.mulf %254, %32 : vector<16x16xf32>
    %256 = arith.addf %252, %255 : vector<16x16xf32>
    %c9 = arith.constant 9 : index
    %257 = memref.load %arg4[%c9] : memref<144xf32, #tpu.memory_space<smem>>
    %258 = vector.broadcast %257 : f32 to vector<16x16xf32>
    %259 = arith.mulf %258, %50 : vector<16x16xf32>
    %260 = arith.addf %256, %259 : vector<16x16xf32>
    %c13 = arith.constant 13 : index
    %261 = memref.load %arg4[%c13] : memref<144xf32, #tpu.memory_space<smem>>
    %262 = vector.broadcast %261 : f32 to vector<16x16xf32>
    %263 = arith.mulf %262, %68 : vector<16x16xf32>
    %264 = arith.addf %260, %263 : vector<16x16xf32>
    %c17 = arith.constant 17 : index
    %265 = memref.load %arg4[%c17] : memref<144xf32, #tpu.memory_space<smem>>
    %266 = vector.broadcast %265 : f32 to vector<16x16xf32>
    %267 = arith.mulf %266, %16 : vector<16x16xf32>
    %268 = arith.addf %264, %267 : vector<16x16xf32>
    %c21 = arith.constant 21 : index
    %269 = memref.load %arg4[%c21] : memref<144xf32, #tpu.memory_space<smem>>
    %270 = vector.broadcast %269 : f32 to vector<16x16xf32>
    %271 = arith.mulf %270, %34 : vector<16x16xf32>
    %272 = arith.addf %268, %271 : vector<16x16xf32>
    %c25 = arith.constant 25 : index
    %273 = memref.load %arg4[%c25] : memref<144xf32, #tpu.memory_space<smem>>
    %274 = vector.broadcast %273 : f32 to vector<16x16xf32>
    %275 = arith.mulf %274, %52 : vector<16x16xf32>
    %276 = arith.addf %272, %275 : vector<16x16xf32>
    %c29 = arith.constant 29 : index
    %277 = memref.load %arg4[%c29] : memref<144xf32, #tpu.memory_space<smem>>
    %278 = vector.broadcast %277 : f32 to vector<16x16xf32>
    %279 = arith.mulf %278, %70 : vector<16x16xf32>
    %280 = arith.addf %276, %279 : vector<16x16xf32>
    %c33 = arith.constant 33 : index
    %281 = memref.load %arg4[%c33] : memref<144xf32, #tpu.memory_space<smem>>
    %282 = vector.broadcast %281 : f32 to vector<16x16xf32>
    %283 = arith.mulf %282, %18 : vector<16x16xf32>
    %284 = arith.addf %280, %283 : vector<16x16xf32>
    %c37 = arith.constant 37 : index
    %285 = memref.load %arg4[%c37] : memref<144xf32, #tpu.memory_space<smem>>
    %286 = vector.broadcast %285 : f32 to vector<16x16xf32>
    %287 = arith.mulf %286, %36 : vector<16x16xf32>
    %288 = arith.addf %284, %287 : vector<16x16xf32>
    %c41 = arith.constant 41 : index
    %289 = memref.load %arg4[%c41] : memref<144xf32, #tpu.memory_space<smem>>
    %290 = vector.broadcast %289 : f32 to vector<16x16xf32>
    %291 = arith.mulf %290, %54 : vector<16x16xf32>
    %292 = arith.addf %288, %291 : vector<16x16xf32>
    %c45 = arith.constant 45 : index
    %293 = memref.load %arg4[%c45] : memref<144xf32, #tpu.memory_space<smem>>
    %294 = vector.broadcast %293 : f32 to vector<16x16xf32>
    %295 = arith.mulf %294, %72 : vector<16x16xf32>
    %296 = arith.addf %292, %295 : vector<16x16xf32>
    %c49 = arith.constant 49 : index
    %297 = memref.load %arg4[%c49] : memref<144xf32, #tpu.memory_space<smem>>
    %298 = vector.broadcast %297 : f32 to vector<16x16xf32>
    %299 = arith.mulf %298, %20 : vector<16x16xf32>
    %300 = arith.addf %296, %299 : vector<16x16xf32>
    %c53 = arith.constant 53 : index
    %301 = memref.load %arg4[%c53] : memref<144xf32, #tpu.memory_space<smem>>
    %302 = vector.broadcast %301 : f32 to vector<16x16xf32>
    %303 = arith.mulf %302, %38 : vector<16x16xf32>
    %304 = arith.addf %300, %303 : vector<16x16xf32>
    %c57 = arith.constant 57 : index
    %305 = memref.load %arg4[%c57] : memref<144xf32, #tpu.memory_space<smem>>
    %306 = vector.broadcast %305 : f32 to vector<16x16xf32>
    %307 = arith.mulf %306, %56 : vector<16x16xf32>
    %308 = arith.addf %304, %307 : vector<16x16xf32>
    %c61 = arith.constant 61 : index
    %309 = memref.load %arg4[%c61] : memref<144xf32, #tpu.memory_space<smem>>
    %310 = vector.broadcast %309 : f32 to vector<16x16xf32>
    %311 = arith.mulf %310, %74 : vector<16x16xf32>
    %312 = arith.addf %308, %311 : vector<16x16xf32>
    %c65 = arith.constant 65 : index
    %313 = memref.load %arg4[%c65] : memref<144xf32, #tpu.memory_space<smem>>
    %314 = vector.broadcast %313 : f32 to vector<16x16xf32>
    %315 = arith.mulf %314, %22 : vector<16x16xf32>
    %316 = arith.addf %312, %315 : vector<16x16xf32>
    %c69 = arith.constant 69 : index
    %317 = memref.load %arg4[%c69] : memref<144xf32, #tpu.memory_space<smem>>
    %318 = vector.broadcast %317 : f32 to vector<16x16xf32>
    %319 = arith.mulf %318, %40 : vector<16x16xf32>
    %320 = arith.addf %316, %319 : vector<16x16xf32>
    %c73 = arith.constant 73 : index
    %321 = memref.load %arg4[%c73] : memref<144xf32, #tpu.memory_space<smem>>
    %322 = vector.broadcast %321 : f32 to vector<16x16xf32>
    %323 = arith.mulf %322, %58 : vector<16x16xf32>
    %324 = arith.addf %320, %323 : vector<16x16xf32>
    %c77 = arith.constant 77 : index
    %325 = memref.load %arg4[%c77] : memref<144xf32, #tpu.memory_space<smem>>
    %326 = vector.broadcast %325 : f32 to vector<16x16xf32>
    %327 = arith.mulf %326, %76 : vector<16x16xf32>
    %328 = arith.addf %324, %327 : vector<16x16xf32>
    %c81 = arith.constant 81 : index
    %329 = memref.load %arg4[%c81] : memref<144xf32, #tpu.memory_space<smem>>
    %330 = vector.broadcast %329 : f32 to vector<16x16xf32>
    %331 = arith.mulf %330, %24 : vector<16x16xf32>
    %332 = arith.addf %328, %331 : vector<16x16xf32>
    %c85 = arith.constant 85 : index
    %333 = memref.load %arg4[%c85] : memref<144xf32, #tpu.memory_space<smem>>
    %334 = vector.broadcast %333 : f32 to vector<16x16xf32>
    %335 = arith.mulf %334, %42 : vector<16x16xf32>
    %336 = arith.addf %332, %335 : vector<16x16xf32>
    %c89 = arith.constant 89 : index
    %337 = memref.load %arg4[%c89] : memref<144xf32, #tpu.memory_space<smem>>
    %338 = vector.broadcast %337 : f32 to vector<16x16xf32>
    %339 = arith.mulf %338, %60 : vector<16x16xf32>
    %340 = arith.addf %336, %339 : vector<16x16xf32>
    %c93 = arith.constant 93 : index
    %341 = memref.load %arg4[%c93] : memref<144xf32, #tpu.memory_space<smem>>
    %342 = vector.broadcast %341 : f32 to vector<16x16xf32>
    %343 = arith.mulf %342, %78 : vector<16x16xf32>
    %344 = arith.addf %340, %343 : vector<16x16xf32>
    %c97 = arith.constant 97 : index
    %345 = memref.load %arg4[%c97] : memref<144xf32, #tpu.memory_space<smem>>
    %346 = vector.broadcast %345 : f32 to vector<16x16xf32>
    %347 = arith.mulf %346, %26 : vector<16x16xf32>
    %348 = arith.addf %344, %347 : vector<16x16xf32>
    %c101 = arith.constant 101 : index
    %349 = memref.load %arg4[%c101] : memref<144xf32, #tpu.memory_space<smem>>
    %350 = vector.broadcast %349 : f32 to vector<16x16xf32>
    %351 = arith.mulf %350, %44 : vector<16x16xf32>
    %352 = arith.addf %348, %351 : vector<16x16xf32>
    %c105 = arith.constant 105 : index
    %353 = memref.load %arg4[%c105] : memref<144xf32, #tpu.memory_space<smem>>
    %354 = vector.broadcast %353 : f32 to vector<16x16xf32>
    %355 = arith.mulf %354, %62 : vector<16x16xf32>
    %356 = arith.addf %352, %355 : vector<16x16xf32>
    %c109 = arith.constant 109 : index
    %357 = memref.load %arg4[%c109] : memref<144xf32, #tpu.memory_space<smem>>
    %358 = vector.broadcast %357 : f32 to vector<16x16xf32>
    %359 = arith.mulf %358, %80 : vector<16x16xf32>
    %360 = arith.addf %356, %359 : vector<16x16xf32>
    %c113 = arith.constant 113 : index
    %361 = memref.load %arg4[%c113] : memref<144xf32, #tpu.memory_space<smem>>
    %362 = vector.broadcast %361 : f32 to vector<16x16xf32>
    %363 = arith.mulf %362, %28 : vector<16x16xf32>
    %364 = arith.addf %360, %363 : vector<16x16xf32>
    %c117 = arith.constant 117 : index
    %365 = memref.load %arg4[%c117] : memref<144xf32, #tpu.memory_space<smem>>
    %366 = vector.broadcast %365 : f32 to vector<16x16xf32>
    %367 = arith.mulf %366, %46 : vector<16x16xf32>
    %368 = arith.addf %364, %367 : vector<16x16xf32>
    %c121 = arith.constant 121 : index
    %369 = memref.load %arg4[%c121] : memref<144xf32, #tpu.memory_space<smem>>
    %370 = vector.broadcast %369 : f32 to vector<16x16xf32>
    %371 = arith.mulf %370, %64 : vector<16x16xf32>
    %372 = arith.addf %368, %371 : vector<16x16xf32>
    %c125 = arith.constant 125 : index
    %373 = memref.load %arg4[%c125] : memref<144xf32, #tpu.memory_space<smem>>
    %374 = vector.broadcast %373 : f32 to vector<16x16xf32>
    %375 = arith.mulf %374, %82 : vector<16x16xf32>
    %376 = arith.addf %372, %375 : vector<16x16xf32>
    %c129 = arith.constant 129 : index
    %377 = memref.load %arg4[%c129] : memref<144xf32, #tpu.memory_space<smem>>
    %378 = vector.broadcast %377 : f32 to vector<16x16xf32>
    %379 = arith.mulf %378, %30 : vector<16x16xf32>
    %380 = arith.addf %376, %379 : vector<16x16xf32>
    %c133 = arith.constant 133 : index
    %381 = memref.load %arg4[%c133] : memref<144xf32, #tpu.memory_space<smem>>
    %382 = vector.broadcast %381 : f32 to vector<16x16xf32>
    %383 = arith.mulf %382, %48 : vector<16x16xf32>
    %384 = arith.addf %380, %383 : vector<16x16xf32>
    %c137 = arith.constant 137 : index
    %385 = memref.load %arg4[%c137] : memref<144xf32, #tpu.memory_space<smem>>
    %386 = vector.broadcast %385 : f32 to vector<16x16xf32>
    %387 = arith.mulf %386, %66 : vector<16x16xf32>
    %388 = arith.addf %384, %387 : vector<16x16xf32>
    %c141 = arith.constant 141 : index
    %389 = memref.load %arg4[%c141] : memref<144xf32, #tpu.memory_space<smem>>
    %390 = vector.broadcast %389 : f32 to vector<16x16xf32>
    %391 = arith.mulf %390, %84 : vector<16x16xf32>
    %392 = arith.addf %388, %391 : vector<16x16xf32>
    %393 = vector.extract_strided_slice %7 {offsets = [1, 1, 1], sizes = [1, 16, 16], strides = [1, 1, 1]} : vector<4x18x18xf32> to vector<1x16x16xf32>
    %394 = vector.shape_cast %393 : vector<1x16x16xf32> to vector<16x16xf32>
    %395 = arith.subf %392, %394 : vector<16x16xf32>
    %396 = arith.mulf %395, %395 : vector<16x16xf32>
    %397 = arith.addf %241, %396 : vector<16x16xf32>
    %cst_11 = arith.constant 0.000000e+00 : f32
    %398 = vector.broadcast %cst_11 : f32 to vector<16x16xf32>
    %c4_i32_12 = arith.constant 4 : i32
    %399 = arith.muli %arg0, %c4_i32_12 : i32
    %c2_i32 = arith.constant 2 : i32
    %400 = arith.addi %399, %c2_i32 : i32
    %401 = arith.index_cast %400 : i32 to index
    %402 = memref.load %arg3[%401] : memref<8xf32, #tpu.memory_space<smem>>
    %403 = vector.broadcast %402 : f32 to vector<16x16xf32>
    %404 = arith.addf %398, %403 : vector<16x16xf32>
    %c2 = arith.constant 2 : index
    %405 = memref.load %arg4[%c2] : memref<144xf32, #tpu.memory_space<smem>>
    %406 = vector.broadcast %405 : f32 to vector<16x16xf32>
    %407 = arith.mulf %406, %14 : vector<16x16xf32>
    %408 = arith.addf %404, %407 : vector<16x16xf32>
    %c6 = arith.constant 6 : index
    %409 = memref.load %arg4[%c6] : memref<144xf32, #tpu.memory_space<smem>>
    %410 = vector.broadcast %409 : f32 to vector<16x16xf32>
    %411 = arith.mulf %410, %32 : vector<16x16xf32>
    %412 = arith.addf %408, %411 : vector<16x16xf32>
    %c10 = arith.constant 10 : index
    %413 = memref.load %arg4[%c10] : memref<144xf32, #tpu.memory_space<smem>>
    %414 = vector.broadcast %413 : f32 to vector<16x16xf32>
    %415 = arith.mulf %414, %50 : vector<16x16xf32>
    %416 = arith.addf %412, %415 : vector<16x16xf32>
    %c14 = arith.constant 14 : index
    %417 = memref.load %arg4[%c14] : memref<144xf32, #tpu.memory_space<smem>>
    %418 = vector.broadcast %417 : f32 to vector<16x16xf32>
    %419 = arith.mulf %418, %68 : vector<16x16xf32>
    %420 = arith.addf %416, %419 : vector<16x16xf32>
    %c18 = arith.constant 18 : index
    %421 = memref.load %arg4[%c18] : memref<144xf32, #tpu.memory_space<smem>>
    %422 = vector.broadcast %421 : f32 to vector<16x16xf32>
    %423 = arith.mulf %422, %16 : vector<16x16xf32>
    %424 = arith.addf %420, %423 : vector<16x16xf32>
    %c22 = arith.constant 22 : index
    %425 = memref.load %arg4[%c22] : memref<144xf32, #tpu.memory_space<smem>>
    %426 = vector.broadcast %425 : f32 to vector<16x16xf32>
    %427 = arith.mulf %426, %34 : vector<16x16xf32>
    %428 = arith.addf %424, %427 : vector<16x16xf32>
    %c26 = arith.constant 26 : index
    %429 = memref.load %arg4[%c26] : memref<144xf32, #tpu.memory_space<smem>>
    %430 = vector.broadcast %429 : f32 to vector<16x16xf32>
    %431 = arith.mulf %430, %52 : vector<16x16xf32>
    %432 = arith.addf %428, %431 : vector<16x16xf32>
    %c30 = arith.constant 30 : index
    %433 = memref.load %arg4[%c30] : memref<144xf32, #tpu.memory_space<smem>>
    %434 = vector.broadcast %433 : f32 to vector<16x16xf32>
    %435 = arith.mulf %434, %70 : vector<16x16xf32>
    %436 = arith.addf %432, %435 : vector<16x16xf32>
    %c34 = arith.constant 34 : index
    %437 = memref.load %arg4[%c34] : memref<144xf32, #tpu.memory_space<smem>>
    %438 = vector.broadcast %437 : f32 to vector<16x16xf32>
    %439 = arith.mulf %438, %18 : vector<16x16xf32>
    %440 = arith.addf %436, %439 : vector<16x16xf32>
    %c38 = arith.constant 38 : index
    %441 = memref.load %arg4[%c38] : memref<144xf32, #tpu.memory_space<smem>>
    %442 = vector.broadcast %441 : f32 to vector<16x16xf32>
    %443 = arith.mulf %442, %36 : vector<16x16xf32>
    %444 = arith.addf %440, %443 : vector<16x16xf32>
    %c42 = arith.constant 42 : index
    %445 = memref.load %arg4[%c42] : memref<144xf32, #tpu.memory_space<smem>>
    %446 = vector.broadcast %445 : f32 to vector<16x16xf32>
    %447 = arith.mulf %446, %54 : vector<16x16xf32>
    %448 = arith.addf %444, %447 : vector<16x16xf32>
    %c46 = arith.constant 46 : index
    %449 = memref.load %arg4[%c46] : memref<144xf32, #tpu.memory_space<smem>>
    %450 = vector.broadcast %449 : f32 to vector<16x16xf32>
    %451 = arith.mulf %450, %72 : vector<16x16xf32>
    %452 = arith.addf %448, %451 : vector<16x16xf32>
    %c50 = arith.constant 50 : index
    %453 = memref.load %arg4[%c50] : memref<144xf32, #tpu.memory_space<smem>>
    %454 = vector.broadcast %453 : f32 to vector<16x16xf32>
    %455 = arith.mulf %454, %20 : vector<16x16xf32>
    %456 = arith.addf %452, %455 : vector<16x16xf32>
    %c54 = arith.constant 54 : index
    %457 = memref.load %arg4[%c54] : memref<144xf32, #tpu.memory_space<smem>>
    %458 = vector.broadcast %457 : f32 to vector<16x16xf32>
    %459 = arith.mulf %458, %38 : vector<16x16xf32>
    %460 = arith.addf %456, %459 : vector<16x16xf32>
    %c58 = arith.constant 58 : index
    %461 = memref.load %arg4[%c58] : memref<144xf32, #tpu.memory_space<smem>>
    %462 = vector.broadcast %461 : f32 to vector<16x16xf32>
    %463 = arith.mulf %462, %56 : vector<16x16xf32>
    %464 = arith.addf %460, %463 : vector<16x16xf32>
    %c62 = arith.constant 62 : index
    %465 = memref.load %arg4[%c62] : memref<144xf32, #tpu.memory_space<smem>>
    %466 = vector.broadcast %465 : f32 to vector<16x16xf32>
    %467 = arith.mulf %466, %74 : vector<16x16xf32>
    %468 = arith.addf %464, %467 : vector<16x16xf32>
    %c66 = arith.constant 66 : index
    %469 = memref.load %arg4[%c66] : memref<144xf32, #tpu.memory_space<smem>>
    %470 = vector.broadcast %469 : f32 to vector<16x16xf32>
    %471 = arith.mulf %470, %22 : vector<16x16xf32>
    %472 = arith.addf %468, %471 : vector<16x16xf32>
    %c70 = arith.constant 70 : index
    %473 = memref.load %arg4[%c70] : memref<144xf32, #tpu.memory_space<smem>>
    %474 = vector.broadcast %473 : f32 to vector<16x16xf32>
    %475 = arith.mulf %474, %40 : vector<16x16xf32>
    %476 = arith.addf %472, %475 : vector<16x16xf32>
    %c74 = arith.constant 74 : index
    %477 = memref.load %arg4[%c74] : memref<144xf32, #tpu.memory_space<smem>>
    %478 = vector.broadcast %477 : f32 to vector<16x16xf32>
    %479 = arith.mulf %478, %58 : vector<16x16xf32>
    %480 = arith.addf %476, %479 : vector<16x16xf32>
    %c78 = arith.constant 78 : index
    %481 = memref.load %arg4[%c78] : memref<144xf32, #tpu.memory_space<smem>>
    %482 = vector.broadcast %481 : f32 to vector<16x16xf32>
    %483 = arith.mulf %482, %76 : vector<16x16xf32>
    %484 = arith.addf %480, %483 : vector<16x16xf32>
    %c82 = arith.constant 82 : index
    %485 = memref.load %arg4[%c82] : memref<144xf32, #tpu.memory_space<smem>>
    %486 = vector.broadcast %485 : f32 to vector<16x16xf32>
    %487 = arith.mulf %486, %24 : vector<16x16xf32>
    %488 = arith.addf %484, %487 : vector<16x16xf32>
    %c86 = arith.constant 86 : index
    %489 = memref.load %arg4[%c86] : memref<144xf32, #tpu.memory_space<smem>>
    %490 = vector.broadcast %489 : f32 to vector<16x16xf32>
    %491 = arith.mulf %490, %42 : vector<16x16xf32>
    %492 = arith.addf %488, %491 : vector<16x16xf32>
    %c90 = arith.constant 90 : index
    %493 = memref.load %arg4[%c90] : memref<144xf32, #tpu.memory_space<smem>>
    %494 = vector.broadcast %493 : f32 to vector<16x16xf32>
    %495 = arith.mulf %494, %60 : vector<16x16xf32>
    %496 = arith.addf %492, %495 : vector<16x16xf32>
    %c94 = arith.constant 94 : index
    %497 = memref.load %arg4[%c94] : memref<144xf32, #tpu.memory_space<smem>>
    %498 = vector.broadcast %497 : f32 to vector<16x16xf32>
    %499 = arith.mulf %498, %78 : vector<16x16xf32>
    %500 = arith.addf %496, %499 : vector<16x16xf32>
    %c98 = arith.constant 98 : index
    %501 = memref.load %arg4[%c98] : memref<144xf32, #tpu.memory_space<smem>>
    %502 = vector.broadcast %501 : f32 to vector<16x16xf32>
    %503 = arith.mulf %502, %26 : vector<16x16xf32>
    %504 = arith.addf %500, %503 : vector<16x16xf32>
    %c102 = arith.constant 102 : index
    %505 = memref.load %arg4[%c102] : memref<144xf32, #tpu.memory_space<smem>>
    %506 = vector.broadcast %505 : f32 to vector<16x16xf32>
    %507 = arith.mulf %506, %44 : vector<16x16xf32>
    %508 = arith.addf %504, %507 : vector<16x16xf32>
    %c106 = arith.constant 106 : index
    %509 = memref.load %arg4[%c106] : memref<144xf32, #tpu.memory_space<smem>>
    %510 = vector.broadcast %509 : f32 to vector<16x16xf32>
    %511 = arith.mulf %510, %62 : vector<16x16xf32>
    %512 = arith.addf %508, %511 : vector<16x16xf32>
    %c110 = arith.constant 110 : index
    %513 = memref.load %arg4[%c110] : memref<144xf32, #tpu.memory_space<smem>>
    %514 = vector.broadcast %513 : f32 to vector<16x16xf32>
    %515 = arith.mulf %514, %80 : vector<16x16xf32>
    %516 = arith.addf %512, %515 : vector<16x16xf32>
    %c114 = arith.constant 114 : index
    %517 = memref.load %arg4[%c114] : memref<144xf32, #tpu.memory_space<smem>>
    %518 = vector.broadcast %517 : f32 to vector<16x16xf32>
    %519 = arith.mulf %518, %28 : vector<16x16xf32>
    %520 = arith.addf %516, %519 : vector<16x16xf32>
    %c118 = arith.constant 118 : index
    %521 = memref.load %arg4[%c118] : memref<144xf32, #tpu.memory_space<smem>>
    %522 = vector.broadcast %521 : f32 to vector<16x16xf32>
    %523 = arith.mulf %522, %46 : vector<16x16xf32>
    %524 = arith.addf %520, %523 : vector<16x16xf32>
    %c122 = arith.constant 122 : index
    %525 = memref.load %arg4[%c122] : memref<144xf32, #tpu.memory_space<smem>>
    %526 = vector.broadcast %525 : f32 to vector<16x16xf32>
    %527 = arith.mulf %526, %64 : vector<16x16xf32>
    %528 = arith.addf %524, %527 : vector<16x16xf32>
    %c126 = arith.constant 126 : index
    %529 = memref.load %arg4[%c126] : memref<144xf32, #tpu.memory_space<smem>>
    %530 = vector.broadcast %529 : f32 to vector<16x16xf32>
    %531 = arith.mulf %530, %82 : vector<16x16xf32>
    %532 = arith.addf %528, %531 : vector<16x16xf32>
    %c130 = arith.constant 130 : index
    %533 = memref.load %arg4[%c130] : memref<144xf32, #tpu.memory_space<smem>>
    %534 = vector.broadcast %533 : f32 to vector<16x16xf32>
    %535 = arith.mulf %534, %30 : vector<16x16xf32>
    %536 = arith.addf %532, %535 : vector<16x16xf32>
    %c134 = arith.constant 134 : index
    %537 = memref.load %arg4[%c134] : memref<144xf32, #tpu.memory_space<smem>>
    %538 = vector.broadcast %537 : f32 to vector<16x16xf32>
    %539 = arith.mulf %538, %48 : vector<16x16xf32>
    %540 = arith.addf %536, %539 : vector<16x16xf32>
    %c138 = arith.constant 138 : index
    %541 = memref.load %arg4[%c138] : memref<144xf32, #tpu.memory_space<smem>>
    %542 = vector.broadcast %541 : f32 to vector<16x16xf32>
    %543 = arith.mulf %542, %66 : vector<16x16xf32>
    %544 = arith.addf %540, %543 : vector<16x16xf32>
    %c142 = arith.constant 142 : index
    %545 = memref.load %arg4[%c142] : memref<144xf32, #tpu.memory_space<smem>>
    %546 = vector.broadcast %545 : f32 to vector<16x16xf32>
    %547 = arith.mulf %546, %84 : vector<16x16xf32>
    %548 = arith.addf %544, %547 : vector<16x16xf32>
    %549 = vector.extract_strided_slice %7 {offsets = [2, 1, 1], sizes = [1, 16, 16], strides = [1, 1, 1]} : vector<4x18x18xf32> to vector<1x16x16xf32>
    %550 = vector.shape_cast %549 : vector<1x16x16xf32> to vector<16x16xf32>
    %551 = arith.subf %548, %550 : vector<16x16xf32>
    %552 = arith.mulf %551, %551 : vector<16x16xf32>
    %553 = arith.addf %397, %552 : vector<16x16xf32>
    %cst_13 = arith.constant 0.000000e+00 : f32
    %554 = vector.broadcast %cst_13 : f32 to vector<16x16xf32>
    %c4_i32_14 = arith.constant 4 : i32
    %555 = arith.muli %arg0, %c4_i32_14 : i32
    %c3_i32 = arith.constant 3 : i32
    %556 = arith.addi %555, %c3_i32 : i32
    %557 = arith.index_cast %556 : i32 to index
    %558 = memref.load %arg3[%557] : memref<8xf32, #tpu.memory_space<smem>>
    %559 = vector.broadcast %558 : f32 to vector<16x16xf32>
    %560 = arith.addf %554, %559 : vector<16x16xf32>
    %c3 = arith.constant 3 : index
    %561 = memref.load %arg4[%c3] : memref<144xf32, #tpu.memory_space<smem>>
    %562 = vector.broadcast %561 : f32 to vector<16x16xf32>
    %563 = arith.mulf %562, %14 : vector<16x16xf32>
    %564 = arith.addf %560, %563 : vector<16x16xf32>
    %c7 = arith.constant 7 : index
    %565 = memref.load %arg4[%c7] : memref<144xf32, #tpu.memory_space<smem>>
    %566 = vector.broadcast %565 : f32 to vector<16x16xf32>
    %567 = arith.mulf %566, %32 : vector<16x16xf32>
    %568 = arith.addf %564, %567 : vector<16x16xf32>
    %c11 = arith.constant 11 : index
    %569 = memref.load %arg4[%c11] : memref<144xf32, #tpu.memory_space<smem>>
    %570 = vector.broadcast %569 : f32 to vector<16x16xf32>
    %571 = arith.mulf %570, %50 : vector<16x16xf32>
    %572 = arith.addf %568, %571 : vector<16x16xf32>
    %c15 = arith.constant 15 : index
    %573 = memref.load %arg4[%c15] : memref<144xf32, #tpu.memory_space<smem>>
    %574 = vector.broadcast %573 : f32 to vector<16x16xf32>
    %575 = arith.mulf %574, %68 : vector<16x16xf32>
    %576 = arith.addf %572, %575 : vector<16x16xf32>
    %c19 = arith.constant 19 : index
    %577 = memref.load %arg4[%c19] : memref<144xf32, #tpu.memory_space<smem>>
    %578 = vector.broadcast %577 : f32 to vector<16x16xf32>
    %579 = arith.mulf %578, %16 : vector<16x16xf32>
    %580 = arith.addf %576, %579 : vector<16x16xf32>
    %c23 = arith.constant 23 : index
    %581 = memref.load %arg4[%c23] : memref<144xf32, #tpu.memory_space<smem>>
    %582 = vector.broadcast %581 : f32 to vector<16x16xf32>
    %583 = arith.mulf %582, %34 : vector<16x16xf32>
    %584 = arith.addf %580, %583 : vector<16x16xf32>
    %c27 = arith.constant 27 : index
    %585 = memref.load %arg4[%c27] : memref<144xf32, #tpu.memory_space<smem>>
    %586 = vector.broadcast %585 : f32 to vector<16x16xf32>
    %587 = arith.mulf %586, %52 : vector<16x16xf32>
    %588 = arith.addf %584, %587 : vector<16x16xf32>
    %c31 = arith.constant 31 : index
    %589 = memref.load %arg4[%c31] : memref<144xf32, #tpu.memory_space<smem>>
    %590 = vector.broadcast %589 : f32 to vector<16x16xf32>
    %591 = arith.mulf %590, %70 : vector<16x16xf32>
    %592 = arith.addf %588, %591 : vector<16x16xf32>
    %c35 = arith.constant 35 : index
    %593 = memref.load %arg4[%c35] : memref<144xf32, #tpu.memory_space<smem>>
    %594 = vector.broadcast %593 : f32 to vector<16x16xf32>
    %595 = arith.mulf %594, %18 : vector<16x16xf32>
    %596 = arith.addf %592, %595 : vector<16x16xf32>
    %c39 = arith.constant 39 : index
    %597 = memref.load %arg4[%c39] : memref<144xf32, #tpu.memory_space<smem>>
    %598 = vector.broadcast %597 : f32 to vector<16x16xf32>
    %599 = arith.mulf %598, %36 : vector<16x16xf32>
    %600 = arith.addf %596, %599 : vector<16x16xf32>
    %c43 = arith.constant 43 : index
    %601 = memref.load %arg4[%c43] : memref<144xf32, #tpu.memory_space<smem>>
    %602 = vector.broadcast %601 : f32 to vector<16x16xf32>
    %603 = arith.mulf %602, %54 : vector<16x16xf32>
    %604 = arith.addf %600, %603 : vector<16x16xf32>
    %c47 = arith.constant 47 : index
    %605 = memref.load %arg4[%c47] : memref<144xf32, #tpu.memory_space<smem>>
    %606 = vector.broadcast %605 : f32 to vector<16x16xf32>
    %607 = arith.mulf %606, %72 : vector<16x16xf32>
    %608 = arith.addf %604, %607 : vector<16x16xf32>
    %c51 = arith.constant 51 : index
    %609 = memref.load %arg4[%c51] : memref<144xf32, #tpu.memory_space<smem>>
    %610 = vector.broadcast %609 : f32 to vector<16x16xf32>
    %611 = arith.mulf %610, %20 : vector<16x16xf32>
    %612 = arith.addf %608, %611 : vector<16x16xf32>
    %c55 = arith.constant 55 : index
    %613 = memref.load %arg4[%c55] : memref<144xf32, #tpu.memory_space<smem>>
    %614 = vector.broadcast %613 : f32 to vector<16x16xf32>
    %615 = arith.mulf %614, %38 : vector<16x16xf32>
    %616 = arith.addf %612, %615 : vector<16x16xf32>
    %c59 = arith.constant 59 : index
    %617 = memref.load %arg4[%c59] : memref<144xf32, #tpu.memory_space<smem>>
    %618 = vector.broadcast %617 : f32 to vector<16x16xf32>
    %619 = arith.mulf %618, %56 : vector<16x16xf32>
    %620 = arith.addf %616, %619 : vector<16x16xf32>
    %c63 = arith.constant 63 : index
    %621 = memref.load %arg4[%c63] : memref<144xf32, #tpu.memory_space<smem>>
    %622 = vector.broadcast %621 : f32 to vector<16x16xf32>
    %623 = arith.mulf %622, %74 : vector<16x16xf32>
    %624 = arith.addf %620, %623 : vector<16x16xf32>
    %c67 = arith.constant 67 : index
    %625 = memref.load %arg4[%c67] : memref<144xf32, #tpu.memory_space<smem>>
    %626 = vector.broadcast %625 : f32 to vector<16x16xf32>
    %627 = arith.mulf %626, %22 : vector<16x16xf32>
    %628 = arith.addf %624, %627 : vector<16x16xf32>
    %c71 = arith.constant 71 : index
    %629 = memref.load %arg4[%c71] : memref<144xf32, #tpu.memory_space<smem>>
    %630 = vector.broadcast %629 : f32 to vector<16x16xf32>
    %631 = arith.mulf %630, %40 : vector<16x16xf32>
    %632 = arith.addf %628, %631 : vector<16x16xf32>
    %c75 = arith.constant 75 : index
    %633 = memref.load %arg4[%c75] : memref<144xf32, #tpu.memory_space<smem>>
    %634 = vector.broadcast %633 : f32 to vector<16x16xf32>
    %635 = arith.mulf %634, %58 : vector<16x16xf32>
    %636 = arith.addf %632, %635 : vector<16x16xf32>
    %c79 = arith.constant 79 : index
    %637 = memref.load %arg4[%c79] : memref<144xf32, #tpu.memory_space<smem>>
    %638 = vector.broadcast %637 : f32 to vector<16x16xf32>
    %639 = arith.mulf %638, %76 : vector<16x16xf32>
    %640 = arith.addf %636, %639 : vector<16x16xf32>
    %c83 = arith.constant 83 : index
    %641 = memref.load %arg4[%c83] : memref<144xf32, #tpu.memory_space<smem>>
    %642 = vector.broadcast %641 : f32 to vector<16x16xf32>
    %643 = arith.mulf %642, %24 : vector<16x16xf32>
    %644 = arith.addf %640, %643 : vector<16x16xf32>
    %c87 = arith.constant 87 : index
    %645 = memref.load %arg4[%c87] : memref<144xf32, #tpu.memory_space<smem>>
    %646 = vector.broadcast %645 : f32 to vector<16x16xf32>
    %647 = arith.mulf %646, %42 : vector<16x16xf32>
    %648 = arith.addf %644, %647 : vector<16x16xf32>
    %c91 = arith.constant 91 : index
    %649 = memref.load %arg4[%c91] : memref<144xf32, #tpu.memory_space<smem>>
    %650 = vector.broadcast %649 : f32 to vector<16x16xf32>
    %651 = arith.mulf %650, %60 : vector<16x16xf32>
    %652 = arith.addf %648, %651 : vector<16x16xf32>
    %c95 = arith.constant 95 : index
    %653 = memref.load %arg4[%c95] : memref<144xf32, #tpu.memory_space<smem>>
    %654 = vector.broadcast %653 : f32 to vector<16x16xf32>
    %655 = arith.mulf %654, %78 : vector<16x16xf32>
    %656 = arith.addf %652, %655 : vector<16x16xf32>
    %c99 = arith.constant 99 : index
    %657 = memref.load %arg4[%c99] : memref<144xf32, #tpu.memory_space<smem>>
    %658 = vector.broadcast %657 : f32 to vector<16x16xf32>
    %659 = arith.mulf %658, %26 : vector<16x16xf32>
    %660 = arith.addf %656, %659 : vector<16x16xf32>
    %c103 = arith.constant 103 : index
    %661 = memref.load %arg4[%c103] : memref<144xf32, #tpu.memory_space<smem>>
    %662 = vector.broadcast %661 : f32 to vector<16x16xf32>
    %663 = arith.mulf %662, %44 : vector<16x16xf32>
    %664 = arith.addf %660, %663 : vector<16x16xf32>
    %c107 = arith.constant 107 : index
    %665 = memref.load %arg4[%c107] : memref<144xf32, #tpu.memory_space<smem>>
    %666 = vector.broadcast %665 : f32 to vector<16x16xf32>
    %667 = arith.mulf %666, %62 : vector<16x16xf32>
    %668 = arith.addf %664, %667 : vector<16x16xf32>
    %c111 = arith.constant 111 : index
    %669 = memref.load %arg4[%c111] : memref<144xf32, #tpu.memory_space<smem>>
    %670 = vector.broadcast %669 : f32 to vector<16x16xf32>
    %671 = arith.mulf %670, %80 : vector<16x16xf32>
    %672 = arith.addf %668, %671 : vector<16x16xf32>
    %c115 = arith.constant 115 : index
    %673 = memref.load %arg4[%c115] : memref<144xf32, #tpu.memory_space<smem>>
    %674 = vector.broadcast %673 : f32 to vector<16x16xf32>
    %675 = arith.mulf %674, %28 : vector<16x16xf32>
    %676 = arith.addf %672, %675 : vector<16x16xf32>
    %c119 = arith.constant 119 : index
    %677 = memref.load %arg4[%c119] : memref<144xf32, #tpu.memory_space<smem>>
    %678 = vector.broadcast %677 : f32 to vector<16x16xf32>
    %679 = arith.mulf %678, %46 : vector<16x16xf32>
    %680 = arith.addf %676, %679 : vector<16x16xf32>
    %c123 = arith.constant 123 : index
    %681 = memref.load %arg4[%c123] : memref<144xf32, #tpu.memory_space<smem>>
    %682 = vector.broadcast %681 : f32 to vector<16x16xf32>
    %683 = arith.mulf %682, %64 : vector<16x16xf32>
    %684 = arith.addf %680, %683 : vector<16x16xf32>
    %c127 = arith.constant 127 : index
    %685 = memref.load %arg4[%c127] : memref<144xf32, #tpu.memory_space<smem>>
    %686 = vector.broadcast %685 : f32 to vector<16x16xf32>
    %687 = arith.mulf %686, %82 : vector<16x16xf32>
    %688 = arith.addf %684, %687 : vector<16x16xf32>
    %c131 = arith.constant 131 : index
    %689 = memref.load %arg4[%c131] : memref<144xf32, #tpu.memory_space<smem>>
    %690 = vector.broadcast %689 : f32 to vector<16x16xf32>
    %691 = arith.mulf %690, %30 : vector<16x16xf32>
    %692 = arith.addf %688, %691 : vector<16x16xf32>
    %c135 = arith.constant 135 : index
    %693 = memref.load %arg4[%c135] : memref<144xf32, #tpu.memory_space<smem>>
    %694 = vector.broadcast %693 : f32 to vector<16x16xf32>
    %695 = arith.mulf %694, %48 : vector<16x16xf32>
    %696 = arith.addf %692, %695 : vector<16x16xf32>
    %c139 = arith.constant 139 : index
    %697 = memref.load %arg4[%c139] : memref<144xf32, #tpu.memory_space<smem>>
    %698 = vector.broadcast %697 : f32 to vector<16x16xf32>
    %699 = arith.mulf %698, %66 : vector<16x16xf32>
    %700 = arith.addf %696, %699 : vector<16x16xf32>
    %c143 = arith.constant 143 : index
    %701 = memref.load %arg4[%c143] : memref<144xf32, #tpu.memory_space<smem>>
    %702 = vector.broadcast %701 : f32 to vector<16x16xf32>
    %703 = arith.mulf %702, %84 : vector<16x16xf32>
    %704 = arith.addf %700, %703 : vector<16x16xf32>
    %705 = vector.extract_strided_slice %7 {offsets = [3, 1, 1], sizes = [1, 16, 16], strides = [1, 1, 1]} : vector<4x18x18xf32> to vector<1x16x16xf32>
    %706 = vector.shape_cast %705 : vector<1x16x16xf32> to vector<16x16xf32>
    %707 = arith.subf %704, %706 : vector<16x16xf32>
    %708 = arith.mulf %707, %707 : vector<16x16xf32>
    %709 = arith.addf %553, %708 : vector<16x16xf32>
    %710 = vector.shape_cast %709 : vector<16x16xf32> to vector<1x16x16xf32>
    %cst_15 = arith.constant dense<0.000000e+00> : vector<1xf32>
    %711 = vector.multi_reduction <add>, %710, %cst_15 [1, 2] : vector<1x16x16xf32> to vector<1xf32>
    %712 = vector.shape_cast %711 : vector<1xf32> to vector<1x1x1xf32>
    %713 = vector.extract %712[0, 0, 0] : f32 from vector<1x1x1xf32>
    %cst_16 = arith.constant 1.000000e+00 : f32
    %714 = vector.broadcast %cst_16 : f32 to vector<1x1x128xf32>
    %715 = vector.broadcast %713 : f32 to vector<1x1x128xf32>
    %716 = arith.mulf %714, %715 : vector<1x1x128xf32>
    %c0_17 = arith.constant 0 : index
    %c0_18 = arith.constant 0 : index
    %c0_19 = arith.constant 0 : index
    %717 = vector.load %arg7[%c0_17, %c0_18, %c0_19] : memref<1x1x128xf32, #tpu.memory_space<vmem>>, vector<1x1x128xf32>
    tpu.vector_store %arg7[%c0_17, %c0_18, %c0_19], %716 {strides = array<i32>} : memref<1x1x128xf32, #tpu.memory_space<vmem>>, vector<1x1x128xf32>,
    return
  }
  func.func @transform_0(%arg0: i32) -> i32 {
    %c0_i32 = arith.constant 0 : i32
    %c0_i32_0 = arith.constant 0 : i32
    return %c0_i32 : i32
  }
  func.func @transform_1(%arg0: i32) -> i32 {
    %c0_i32 = arith.constant 0 : i32
    %c0_i32_0 = arith.constant 0 : i32
    return %c0_i32 : i32
  }
  func.func @transform_2(%arg0: i32) -> i32 {
    %c0_i32 = arith.constant 0 : i32
    %c0_i32_0 = arith.constant 0 : i32
    return %c0_i32 : i32
  }
  func.func @transform_3(%arg0: i32) -> i32 {
    %c0_i32 = arith.constant 0 : i32
    %c0_i32_0 = arith.constant 0 : i32
    return %c0_i32 : i32
  }
  func.func @transform_4(%arg0: i32) -> (i32, i32, i32, i32) {
    %c0_i32 = arith.constant 0 : i32
    %c0_i32_0 = arith.constant 0 : i32
    %c0_i32_1 = arith.constant 0 : i32
    %c0_i32_2 = arith.constant 0 : i32
    return %arg0, %c0_i32, %c0_i32_0, %c0_i32_1 : i32, i32, i32, i32
  }
  func.func @transform_5(%arg0: i32) -> (i32, i32, i32, i32) {
    %c0_i32 = arith.constant 0 : i32
    %c0_i32_0 = arith.constant 0 : i32
    %c0_i32_1 = arith.constant 0 : i32
    %c0_i32_2 = arith.constant 0 : i32
    return %arg0, %c0_i32, %c0_i32_0, %c0_i32_1 : i32, i32, i32, i32
  }
  func.func @transform_6(%arg0: i32) -> (i32, i32, i32) {
    %c0_i32 = arith.constant 0 : i32
    %c0_i32_0 = arith.constant 0 : i32
    %c0_i32_1 = arith.constant 0 : i32
    return %arg0, %c0_i32, %c0_i32_0 : i32, i32, i32
  }
}

</mosaic_0001>

<llo_original>
// kernel: gaussian_diffusion_forward.1
$region0: #{gaussian_diffusion_forward.1}
  #allocation0 [shape = 'u32[]', space=smem, size = 0x4, offset = 0x4, fixed_abs, tag = 'smem constant byte address 0x4 - core index']
  #allocation1 [shape = 'u32[144,128]{1,0:T(1,128)}', space=vmem, size = 0x12000, scoped, tag = 'internal scratch']
  %s0 = inlined_call_operand.vmem [shape: f32[2], index: 0, kind: input, shape index: {}]
  %s1 = inlined_call_operand.vmem [shape: f32[2], index: 1, kind: input, shape index: {}]
  %s2 = inlined_call_operand.vmem [shape: f32[8], index: 2, kind: input, shape index: {}]
  %s3 = inlined_call_operand.vmem [shape: f32[144], index: 3, kind: input, shape index: {}]
  %s4 = inlined_call_operand.vmem [shape: f32[2,4,18,18], index: 4, kind: input, shape index: {}]
  %s5 = inlined_call_operand.vmem [shape: f32[2,4,18,18], index: 5, kind: input, shape index: {}]
  %s6 = inlined_call_operand.vmem [shape: f32[2,1,128], index: 6, kind: output, shape index: {}]
  %s7 = sld [smem:[#allocation0]]
  $region73: #{gaussian_diffusion_forward.1} parent=0
    _
  %s9 = ssub.s32 1, %s7
  %s10 = scalar_select 0, %s9, %s7
  $region1: #{gaussian_diffusion_forward.1} parent=0
    #allocation2 [shape = 'u8[512]{0}', space=smem, size = 0x200, scoped, tag = 'input window, operand 0, single buffered']
    #allocation3 [shape = 's32[2]{0}', space=sflag, size = 0x8, scoped, tag = 'scoped memory for gaussian_diffusion_forward.1']
    #allocation4 [shape = 'u8[512]{0}', space=smem, size = 0x200, scoped, tag = 'input window, operand 1, single buffered']
    #allocation5 [shape = 's32[1]{0}', space=sflag, size = 0x4, scoped, tag = 'scoped memory for gaussian_diffusion_forward.1']
    #allocation6 [shape = 'u8[512]{0}', space=smem, size = 0x200, scoped, tag = 'input window, operand 2, single buffered']
    #allocation7 [shape = 'u8[1024]{0}', space=smem, size = 0x400, scoped, tag = 'input window, operand 3, single buffered']
    #allocation8 [shape = 's32[1]{0}', space=sflag, size = 0x4, scoped, tag = 'scoped memory for gaussian_diffusion_forward.1']
    %11 = vsyncpa [#allocation3], 0
    %12 = vsyncpa [#allocation5], 0
    %13 = vsyncpa [#allocation8], 0
    loop: start=0, step=1, limit=4
    $region2: #{gaussian_diffusion_forward.1} parent=1 // loop_pre_header
      _
    $region3: #{gaussian_diffusion_forward.1} parent=1 // loop_header
      %s15 = sphi 0, %s19
      %p16 = scmp.ge.s32.totalorder %s15, 4
      %s23 = sphi 0, %s23
      %s25 = sphi 0, %s23
      %s26 = sphi 0, %s25
      %s40 = sphi 0, %s26
      %s44 = sphi 0, %s44
      %s46 = sphi 0, %s44
      %s47 = sphi 0, %s46
      %s61 = sphi 0, %s47
      %s65 = sphi 0, %s65
      %s67 = sphi 0, %s65
      %s68 = sphi 0, %s67
      %s82 = sphi 0, %s68
      %s86 = sphi 0, %s86
      %s88 = sphi 0, %s86
      %s89 = sphi 0, %s88
      %s103 = sphi 0, %s89
      %s109 = sphi 0, %s111
      %s112 = sphi 0, %s109
      %s113 = sphi 0, %s112
      %s129 = sphi 0, %s113
      %s135 = sphi 0, %s137
      %s138 = sphi 0, %s135
      %s139 = sphi 0, %s138
      %s155 = sphi 0, %s139
      %s161 = sphi 0, %s163
      %s164 = sphi 0, %s161
      %s165 = sphi 0, %s164
      %s181 = sphi 0, %s165
    $region4: #{gaussian_diffusion_forward.1} parent=1 // loop_header_branch
      %18 = sbr.rel (%p16) target = $region8
    $region5: #{gaussian_diffusion_forward.1} parent=1 // loop_body
      %s20 = ssub.s32 %s15, 1
      %s21 = ssub.s32 %s15, 2
      %s22 = sadd.s32 %s15, 1
      %s24 = sadd.s32 %s23, 1
      %p27 = scmp.eq.s32.totalorder %s15, 1
      %p28 = scmp.ne.s32.totalorder %s23, %s25
      %p29 = scmp.eq.s32.totalorder %s15, 0
      %p30 = por %p28, %p29
      %p31 = scmp.ne.s32.totalorder %s23, %s25
      %p32 = scmp.eq.s32.totalorder %s20, 1
      %p33 = por %p31, %p32
      %p34 = scmp.ne.s32.totalorder %s25, %s26
      %p35 = scmp.eq.s32.totalorder %s20, 0
      %p36 = por %p34, %p35
      %p37 = scmp.ne.s32.totalorder %s25, %s26
      %p38 = scmp.eq.s32.totalorder %s21, 1
      %p39 = por %p37, %p38
      %p41 = scmp.ne.s32.totalorder %s26, %s40
      %p42 = scmp.eq.s32.totalorder %s21, 0
      %p43 = por %p41, %p42
      %s45 = sadd.s32 %s44, 1
      %p48 = scmp.eq.s32.totalorder %s15, 1
      %p49 = scmp.ne.s32.totalorder %s44, %s46
      %p50 = scmp.eq.s32.totalorder %s15, 0
      %p51 = por %p49, %p50
      %p52 = scmp.ne.s32.totalorder %s44, %s46
      %p53 = scmp.eq.s32.totalorder %s20, 1
      %p54 = por %p52, %p53
      %p55 = scmp.ne.s32.totalorder %s46, %s47
      %p56 = scmp.eq.s32.totalorder %s20, 0
      %p57 = por %p55, %p56
      %p58 = scmp.ne.s32.totalorder %s46, %s47
      %p59 = scmp.eq.s32.totalorder %s21, 1
      %p60 = por %p58, %p59
      %p62 = scmp.ne.s32.totalorder %s47, %s61
      %p63 = scmp.eq.s32.totalorder %s21, 0
      %p64 = por %p62, %p63
      %s66 = sadd.s32 %s65, 1
      %p69 = scmp.eq.s32.totalorder %s15, 1
      %p70 = scmp.ne.s32.totalorder %s65, %s67
      %p71 = scmp.eq.s32.totalorder %s15, 0
      %p72 = por %p70, %p71
      %p73 = scmp.ne.s32.totalorder %s65, %s67
      %p74 = scmp.eq.s32.totalorder %s20, 1
      %p75 = por %p73, %p74
      %p76 = scmp.ne.s32.totalorder %s67, %s68
      %p77 = scmp.eq.s32.totalorder %s20, 0
      %p78 = por %p76, %p77
      %p79 = scmp.ne.s32.totalorder %s67, %s68
      %p80 = scmp.eq.s32.totalorder %s21, 1
      %p81 = por %p79, %p80
      %p83 = scmp.ne.s32.totalorder %s68, %s82
      %p84 = scmp.eq.s32.totalorder %s21, 0
      %p85 = por %p83, %p84
      %s87 = sadd.s32 %s86, 1
      %p90 = scmp.eq.s32.totalorder %s15, 1
      %p91 = scmp.ne.s32.totalorder %s86, %s88
      %p92 = scmp.eq.s32.totalorder %s15, 0
      %p93 = por %p91, %p92
      %p94 = scmp.ne.s32.totalorder %s86, %s88
      %p95 = scmp.eq.s32.totalorder %s20, 1
      %p96 = por %p94, %p95
      %p97 = scmp.ne.s32.totalorder %s88, %s89
      %p98 = scmp.eq.s32.totalorder %s20, 0
      %p99 = por %p97, %p98
      %p100 = scmp.ne.s32.totalorder %s88, %s89
      %p101 = scmp.eq.s32.totalorder %s21, 1
      %p102 = por %p100, %p101
      %p104 = scmp.ne.s32.totalorder %s89, %s103
      %p105 = scmp.eq.s32.totalorder %s21, 0
      %p106 = por %p104, %p105
      %s107 = ssub.s32 %s15, %s22
      %p108 = scmp.eq.s32.totalorder %s107, 0
      %s110 = sadd.s32 %s109, 1
      %s111 = scalar_select %p108, %s109, %s110
      %p114 = pneg %p108
      %p115 = scmp.eq.s32.totalorder %s15, 1
      %p116 = por %p114, %p115
      %p117 = scmp.ne.s32.totalorder %s109, %s112
      %p118 = scmp.eq.s32.totalorder %s15, 0
      %p119 = por %p117, %p118
      %p120 = scmp.ne.s32.totalorder %s109, %s112
      %p121 = scmp.eq.s32.totalorder %s20, 1
      %p122 = por %p120, %p121
      %p123 = scmp.ne.s32.totalorder %s112, %s113
      %p124 = scmp.eq.s32.totalorder %s20, 0
      %p125 = por %p123, %p124
      %p126 = scmp.ne.s32.totalorder %s112, %s113
      %p127 = scmp.eq.s32.totalorder %s21, 1
      %p128 = por %p126, %p127
      %p130 = scmp.ne.s32.totalorder %s113, %s129
      %p131 = scmp.eq.s32.totalorder %s21, 0
      %p132 = por %p130, %p131
      %s133 = ssub.s32 %s15, %s22
      %p134 = scmp.eq.s32.totalorder %s133, 0
      %s136 = sadd.s32 %s135, 1
      %s137 = scalar_select %p134, %s135, %s136
      %p140 = pneg %p134
      %p141 = scmp.eq.s32.totalorder %s15, 1
      %p142 = por %p140, %p141
      %p143 = scmp.ne.s32.totalorder %s135, %s138
      %p144 = scmp.eq.s32.totalorder %s15, 0
      %p145 = por %p143, %p144
      %p146 = scmp.ne.s32.totalorder %s135, %s138
      %p147 = scmp.eq.s32.totalorder %s20, 1
      %p148 = por %p146, %p147
      %p149 = scmp.ne.s32.totalorder %s138, %s139
      %p150 = scmp.eq.s32.totalorder %s20, 0
      %p151 = por %p149, %p150
      %p152 = scmp.ne.s32.totalorder %s138, %s139
      %p153 = scmp.eq.s32.totalorder %s21, 1
      %p154 = por %p152, %p153
      %p156 = scmp.ne.s32.totalorder %s139, %s155
      %p157 = scmp.eq.s32.totalorder %s21, 0
      %p158 = por %p156, %p157
      %s159 = ssub.s32 %s15, %s22
      %p160 = scmp.eq.s32.totalorder %s159, 0
      %s162 = sadd.s32 %s161, 1
      %s163 = scalar_select %p160, %s161, %s162
      %p166 = pneg %p160
      %p167 = scmp.eq.s32.totalorder %s15, 1
      %p168 = por %p166, %p167
      %p169 = scmp.ne.s32.totalorder %s161, %s164
      %p170 = scmp.eq.s32.totalorder %s15, 0
      %p171 = por %p169, %p170
      %p172 = scmp.ne.s32.totalorder %s161, %s164
      %p173 = scmp.eq.s32.totalorder %s20, 1
      %p174 = por %p172, %p173
      %p175 = scmp.ne.s32.totalorder %s164, %s165
      %p176 = scmp.eq.s32.totalorder %s20, 0
      %p177 = por %p175, %p176
      %p178 = scmp.ne.s32.totalorder %s164, %s165
      %p179 = scmp.eq.s32.totalorder %s21, 1
      %p180 = por %p178, %p179
      %p182 = scmp.ne.s32.totalorder %s165, %s181
      %p183 = scmp.eq.s32.totalorder %s21, 0
      %p184 = por %p182, %p183
      %p185 = scmp.le.s32.totalorder 1, %s15
      %p186 = scmp.lt.s32.totalorder %s15, 3
      %p187 = pnand %p185, %p186
      %p188 = pneg %p187
      // Predicated region
      $region9: #{gaussian_diffusion_forward.1} parent=5 // pred_check
        _
      $region10: #{gaussian_diffusion_forward.1} parent=5 // pred_check_branch
        %190 = sbr.rel (%p187) target = $region12
      $region11: #{gaussian_diffusion_forward.1} parent=5 // pred_region
        %s191 = ssub.s32 %s15, 1
        // Predicated region
        $region13: #{gaussian_diffusion_forward.1} parent=11 // pred_check
          %p192 = pneg %p36
        $region14: #{gaussian_diffusion_forward.1} parent=11 // pred_check_branch
          %194 = sbr.rel (%p192) target = $region16
        $region15: #{gaussian_diffusion_forward.1} parent=11 // pred_region
          %s196 = ssub.s32 16, 16
          %197 = vsyncadd [#allocation3], %s196
          %s199 = sshll.u32 %s0, 4
          %s200 = int_to_ptr.vmem [resolvable:$true] %s199
          %202 = dma.vmem_to_smem %s200, 16, [#allocation2], [#allocation3]
        $region16: #{gaussian_diffusion_forward.1} parent=11 // pred_fallthru
          _
        // Predicated region
        $region17: #{gaussian_diffusion_forward.1} parent=11 // pred_check
          %p203 = pneg %p57
        $region18: #{gaussian_diffusion_forward.1} parent=11 // pred_check_branch
          %205 = sbr.rel (%p203) target = $region20
        $region19: #{gaussian_diffusion_forward.1} parent=11 // pred_region
          %s207 = ssub.s32 16, 16
          %208 = vsyncadd [#allocation5], %s207
          %s210 = sshll.u32 %s1, 4
          %s211 = int_to_ptr.vmem [resolvable:$true] %s210
          %213 = dma.vmem_to_smem %s211, 16, [#allocation4], [#allocation5]
        $region20: #{gaussian_diffusion_forward.1} parent=11 // pred_fallthru
          _
        // Predicated region
        $region21: #{gaussian_diffusion_forward.1} parent=11 // pred_check
          %p214 = pneg %p78
        $region22: #{gaussian_diffusion_forward.1} parent=11 // pred_check_branch
          %216 = sbr.rel (%p214) target = $region24
        $region23: #{gaussian_diffusion_forward.1} parent=11 // pred_region
          %s218 = ssub.s32 16, 16
          %219 = vsyncadd [#allocation5], %s218
          %s221 = sshll.u32 %s2, 4
          %s222 = int_to_ptr.vmem [resolvable:$true] %s221
          %224 = dma.vmem_to_smem %s222, 16, [#allocation6], [#allocation5]
        $region24: #{gaussian_diffusion_forward.1} parent=11 // pred_fallthru
          _
        // Predicated region
        $region25: #{gaussian_diffusion_forward.1} parent=11 // pred_check
          %p225 = pneg %p99
        $region26: #{gaussian_diffusion_forward.1} parent=11 // pred_check_branch
          %227 = sbr.rel (%p225) target = $region28
        $region27: #{gaussian_diffusion_forward.1} parent=11 // pred_region
          %s229 = ssub.s32 32, 32
          %230 = vsyncadd [#allocation8], %s229
          %s232 = sshll.u32 %s3, 4
          %s233 = int_to_ptr.vmem [resolvable:$true] %s232
          %235 = dma.vmem_to_smem %s233, 32, [#allocation7], [#allocation8]
        $region28: #{gaussian_diffusion_forward.1} parent=11 // pred_fallthru
          _
      $region12: #{gaussian_diffusion_forward.1} parent=5 // pred_fallthru
        _
      %p236 = scmp.lt.s32.totalorder %s15, 2
      // Predicated region
      $region29: #{gaussian_diffusion_forward.1} parent=5 // pred_check
        %p237 = pneg %p236
      $region30: #{gaussian_diffusion_forward.1} parent=5 // pred_check_branch
        %239 = sbr.rel (%p237) target = $region32
      $region31: #{gaussian_diffusion_forward.1} parent=5 // pred_region
        // Predicated region
        $region33: #{gaussian_diffusion_forward.1} parent=31 // pred_check
          %p240 = pneg %p119
        $region34: #{gaussian_diffusion_forward.1} parent=31 // pred_check_branch
          %242 = sbr.rel (%p240) target = $region36
        $region35: #{gaussian_diffusion_forward.1} parent=31 // pred_region
          %p243 = scmp.lt.s32.totalorder %s15, 1
          %s244 = scalar_select %p243, %s15, 1
          %s245 = smul.addr %s244, 12
          %s246 = smul.addr %s245, 8
          %s247 = scalar_lea.vmem %s4, %s246
        $region36: #{gaussian_diffusion_forward.1} parent=31 // pred_fallthru
          _
        // Predicated region
        $region37: #{gaussian_diffusion_forward.1} parent=31 // pred_check
          %p248 = pneg %p145
        $region38: #{gaussian_diffusion_forward.1} parent=31 // pred_check_branch
          %250 = sbr.rel (%p248) target = $region40
        $region39: #{gaussian_diffusion_forward.1} parent=31 // pred_region
          %p251 = scmp.lt.s32.totalorder %s15, 1
          %s252 = scalar_select %p251, %s15, 1
          %s253 = smul.addr %s252, 12
          %s254 = smul.addr %s253, 8
          %s255 = scalar_lea.vmem %s5, %s254
        $region40: #{gaussian_diffusion_forward.1} parent=31 // pred_fallthru
          _
      $region32: #{gaussian_diffusion_forward.1} parent=5 // pred_fallthru
        _
      %p256 = scmp.le.s32.totalorder 1, %s15
      %p257 = scmp.lt.s32.totalorder %s15, 3
      %p258 = pnand %p256, %p257
      %p259 = pneg %p258
      // Predicated region
      $region41: #{gaussian_diffusion_forward.1} parent=5 // pred_check
        _
      $region42: #{gaussian_diffusion_forward.1} parent=5 // pred_check_branch
        %261 = sbr.rel (%p258) target = $region44
      $region43: #{gaussian_diffusion_forward.1} parent=5 // pred_region
        %s262 = ssub.s32 %s15, 1
        // Predicated region
        $region45: #{gaussian_diffusion_forward.1} parent=43 // pred_check
          %p263 = pneg %p36
        $region46: #{gaussian_diffusion_forward.1} parent=43 // pred_check_branch
          %265 = sbr.rel (%p263) target = $region48
        $region47: #{gaussian_diffusion_forward.1} parent=43 // pred_region
          %266 = dma.done [#allocation3], 16
        $region48: #{gaussian_diffusion_forward.1} parent=43 // pred_fallthru
          _
        // Predicated region
        $region49: #{gaussian_diffusion_forward.1} parent=43 // pred_check
          %p267 = pneg %p57
        $region50: #{gaussian_diffusion_forward.1} parent=43 // pred_check_branch
          %269 = sbr.rel (%p267) target = $region52
        $region51: #{gaussian_diffusion_forward.1} parent=43 // pred_region
          %270 = dma.done [#allocation5], 16
        $region52: #{gaussian_diffusion_forward.1} parent=43 // pred_fallthru
          _
        // Predicated region
        $region53: #{gaussian_diffusion_forward.1} parent=43 // pred_check
          %p271 = pneg %p78
        $region54: #{gaussian_diffusion_forward.1} parent=43 // pred_check_branch
          %273 = sbr.rel (%p271) target = $region56
        $region55: #{gaussian_diffusion_forward.1} parent=43 // pred_region
          %274 = dma.done [#allocation5], 16
        $region56: #{gaussian_diffusion_forward.1} parent=43 // pred_fallthru
          _
        // Predicated region
        $region57: #{gaussian_diffusion_forward.1} parent=43 // pred_check
          %p275 = pneg %p99
        $region58: #{gaussian_diffusion_forward.1} parent=43 // pred_check_branch
          %277 = sbr.rel (%p275) target = $region60
        $region59: #{gaussian_diffusion_forward.1} parent=43 // pred_region
          %278 = dma.done [#allocation8], 32
        $region60: #{gaussian_diffusion_forward.1} parent=43 // pred_fallthru
          _
        %279 = sfence
        %p280 = pneg %p36
        %p281 = pneg %p33
        %p282 = pneg %p57
        %p283 = pneg %p54
        %p284 = pneg %p78
        %p285 = pneg %p75
        %p286 = pneg %p99
        %p287 = pneg %p96
        %p288 = scmp.lt.s32.totalorder %s20, 1
        %s289 = scalar_select %p288, %s20, 1
        %s290 = smul.addr %s289, 12
        %s291 = smul.addr %s290, 8
        %s292 = scalar_lea.vmem %s4, %s291
        %p293 = pneg %p125
        %p294 = pneg %p122
        %p295 = scmp.lt.s32.totalorder %s20, 1
        %s296 = scalar_select %p295, %s20, 1
        %s297 = smul.addr %s296, 12
        %s298 = smul.addr %s297, 8
        %s299 = scalar_lea.vmem %s5, %s298
        %p300 = pneg %p151
        %p301 = pneg %p148
        %p302 = pneg %p177
        %p303 = pneg %p174
        %p304 = scmp.lt.s32.totalorder %s20, 1
        %s305 = scalar_select %p304, %s20, 1
        %s306 = scalar_lea.vmem %s6, %s305
        %p307 = scmp.lt.s32.totalorder %s20, 1
        %s308 = scalar_select %p307, %s20, 1
        %s309 = smul.addr %s308, 12
        %s310 = smul.addr %s309, 8
        %s311 = scalar_lea.vmem %s4, %s310
        %p312 = scmp.lt.s32.totalorder %s20, 1
        %s313 = scalar_select %p312, %s20, 1
        %s314 = smul.addr %s313, 12
        %s315 = smul.addr %s314, 8
        %s316 = scalar_lea.vmem %s5, %s315
        %p317 = scmp.lt.s32.totalorder %s20, 1
        %s318 = scalar_select %p317, %s20, 1
        %s319 = scalar_lea.vmem %s6, %s318
        %s320 = sld [smem:[#allocation2 + %s20]]
        %s321 = sld [smem:[#allocation4 + %s20]]
        %v322 = vld [vmem:[%s311] sm:$0xff]
        %v323 = vld [vmem:[%s311 + $0x8] sm:$0xff]
        %v324 = vld [vmem:[%s311 + $0x10] sm:$0x3]
        %v325 = vld [vmem:[%s311 + $0x18] sm:$0xff]
        %v326 = vld [vmem:[%s311 + $0x20] sm:$0xff]
        %v327 = vld [vmem:[%s311 + $0x28] sm:$0x3]
        %v328 = vld [vmem:[%s311 + $0x30] sm:$0xff]
        %v329 = vld [vmem:[%s311 + $0x38] sm:$0xff]
        %v330 = vld [vmem:[%s311 + $0x40] sm:$0x3]
        %v331 = vld [vmem:[%s311 + $0x48] sm:$0xff]
        %v332 = vld [vmem:[%s311 + $0x50] sm:$0xff]
        %v333 = vld [vmem:[%s311 + $0x58] sm:$0x3]
        %v334 = vld [vmem:[%s316] sm:$0xff]
        %v335 = vld [vmem:[%s316 + $0x8] sm:$0xff]
        %v336 = vld [vmem:[%s316 + $0x10] sm:$0x3]
        %v337 = vld [vmem:[%s316 + $0x18] sm:$0xff]
        %v338 = vld [vmem:[%s316 + $0x20] sm:$0xff]
        %v339 = vld [vmem:[%s316 + $0x28] sm:$0x3]
        %v340 = vld [vmem:[%s316 + $0x30] sm:$0xff]
        %v341 = vld [vmem:[%s316 + $0x38] sm:$0xff]
        %v342 = vld [vmem:[%s316 + $0x40] sm:$0x3]
        %v343 = vld [vmem:[%s316 + $0x48] sm:$0xff]
        %v344 = vld [vmem:[%s316 + $0x50] sm:$0xff]
        %v345 = vld [vmem:[%s316 + $0x58] sm:$0x3]
        %v346 = vstv %s320
        %v347 = vmul.f32 %v346, %v322
        %v348 = vmul.f32 %v346, %v323
        %v349 = vmul.f32 %v346, %v324
        %v350 = vmul.f32 %v346, %v325
        %v351 = vmul.f32 %v346, %v326
        %v352 = vmul.f32 %v346, %v327
        %v353 = vmul.f32 %v346, %v328
        %v354 = vmul.f32 %v346, %v329
        %v355 = vmul.f32 %v346, %v330
        %v356 = vmul.f32 %v346, %v331
        %v357 = vmul.f32 %v346, %v332
        %v358 = vmul.f32 %v346, %v333
        %v359 = vstv %s321
        %v360 = vmul.f32 %v359, %v334
        %v361 = vmul.f32 %v359, %v335
        %v362 = vmul.f32 %v359, %v336
        %v363 = vmul.f32 %v359, %v337
        %v364 = vmul.f32 %v359, %v338
        %v365 = vmul.f32 %v359, %v339
        %v366 = vmul.f32 %v359, %v340
        %v367 = vmul.f32 %v359, %v341
        %v368 = vmul.f32 %v359, %v342
        %v369 = vmul.f32 %v359, %v343
        %v370 = vmul.f32 %v359, %v344
        %v371 = vmul.f32 %v359, %v345
        %v372 = vadd.f32 %v347, %v360
        %v373 = vadd.f32 %v348, %v361
        %v374 = vadd.f32 %v349, %v362
        %v375 = vadd.f32 %v350, %v363
        %v376 = vadd.f32 %v351, %v364
        %v377 = vadd.f32 %v352, %v365
        %v378 = vadd.f32 %v353, %v366
        %v379 = vadd.f32 %v354, %v367
        %v380 = vadd.f32 %v355, %v368
        %v381 = vadd.f32 %v356, %v369
        %v382 = vadd.f32 %v357, %v370
        %v383 = vadd.f32 %v358, %v371
        %s384 = smul.u32 %s20, 4
        %s385 = sld [smem:[#allocation6 + %s384]]
        %v386 = vstv %s385
        %v387 = vadd.f32 %v386, 0.0
        %s388 = sld [smem:[#allocation7]]
        %v389 = vstv %s388
        %v390 = vmul.f32 %v389, %v372
        %v391 = vmul.f32 %v389, %v373
        %v392 = vadd.f32 %v387, %v390
        %v393 = vadd.f32 %v387, %v391
        %s394 = sld [smem:[#allocation7 + $0x4]]
        %v395 = vstv %s394
        %v396 = vmul.f32 %v395, %v375
        %v397 = vmul.f32 %v395, %v376
        %v398 = vadd.f32 %v392, %v396
        %v399 = vadd.f32 %v393, %v397
        %s400 = sld [smem:[#allocation7 + $0x8]]
        %v401 = vstv %s400
        %v402 = vmul.f32 %v401, %v378
        %v403 = vmul.f32 %v401, %v379
        %v404 = vadd.f32 %v398, %v402
        %v405 = vadd.f32 %v399, %v403
        %s406 = sld [smem:[#allocation7 + $0xc]]
        %v407 = vstv %s406
        %v408 = vmul.f32 %v407, %v381
        %v409 = vmul.f32 %v407, %v382
        %v410 = vadd.f32 %v404, %v408
        %v411 = vadd.f32 %v405, %v409
        %s412 = sld [smem:[#allocation7 + $0x10]]
        %v413 = vstv %s412
        %v414 = vmul.f32 %v413, %v372
        %v415 = vmul.f32 %v413, %v373
        %418 = vrot.lane.b32.xlu0 %v414, 127
        %v419 = vpop.permute.xlu0 %418
        %420 = vrot.lane.b32.xlu0 %v415, 127
        %v421 = vpop.permute.xlu0 %420
        %v424 = vadd.f32 %v410, %v419
        %v425 = vadd.f32 %v411, %v421
        %s426 = sld [smem:[#allocation7 + $0x14]]
        %v427 = vstv %s426
        %v428 = vmul.f32 %v427, %v375
        %v429 = vmul.f32 %v427, %v376
        %432 = vrot.lane.b32.xlu0 %v428, 127
        %v433 = vpop.permute.xlu0 %432
        %434 = vrot.lane.b32.xlu0 %v429, 127
        %v435 = vpop.permute.xlu0 %434
        %v438 = vadd.f32 %v424, %v433
        %v439 = vadd.f32 %v425, %v435
        %s440 = sld [smem:[#allocation7 + $0x18]]
        %v441 = vstv %s440
        %v442 = vmul.f32 %v441, %v378
        %v443 = vmul.f32 %v441, %v379
        %446 = vrot.lane.b32.xlu0 %v442, 127
        %v447 = vpop.permute.xlu0 %446
        %448 = vrot.lane.b32.xlu0 %v443, 127
        %v449 = vpop.permute.xlu0 %448
        %v452 = vadd.f32 %v438, %v447
        %v453 = vadd.f32 %v439, %v449
        %s454 = sld [smem:[#allocation7 + $0x1c]]
        %v455 = vstv %s454
        %v456 = vmul.f32 %v455, %v381
        %v457 = vmul.f32 %v455, %v382
        %460 = vrot.lane.b32.xlu0 %v456, 127
        %v461 = vpop.permute.xlu0 %460
        %462 = vrot.lane.b32.xlu0 %v457, 127
        %v463 = vpop.permute.xlu0 %462
        %v466 = vadd.f32 %v452, %v461
        %v467 = vadd.f32 %v453, %v463
        %s468 = sld [smem:[#allocation7 + $0x20]]
        %v469 = vstv %s468
        %v470 = vmul.f32 %v469, %v372
        %v471 = vmul.f32 %v469, %v373
        %474 = vrot.lane.b32.xlu0 %v470, 126
        %v475 = vpop.permute.xlu0 %474
        %476 = vrot.lane.b32.xlu0 %v471, 126
        %v477 = vpop.permute.xlu0 %476
        %v480 = vadd.f32 %v466, %v475
        %v481 = vadd.f32 %v467, %v477
        %s482 = sld [smem:[#allocation7 + $0x24]]
        %v483 = vstv %s482
        %v484 = vmul.f32 %v483, %v375
        %v485 = vmul.f32 %v483, %v376
        %488 = vrot.lane.b32.xlu0 %v484, 126
        %v489 = vpop.permute.xlu0 %488
        %490 = vrot.lane.b32.xlu0 %v485, 126
        %v491 = vpop.permute.xlu0 %490
        %v494 = vadd.f32 %v480, %v489
        %v495 = vadd.f32 %v481, %v491
        %s496 = sld [smem:[#allocation7 + $0x28]]
        %v497 = vstv %s496
        %v498 = vmul.f32 %v497, %v378
        %v499 = vmul.f32 %v497, %v379
        %502 = vrot.lane.b32.xlu0 %v498, 126
        %v503 = vpop.permute.xlu0 %502
        %504 = vrot.lane.b32.xlu0 %v499, 126
        %v505 = vpop.permute.xlu0 %504
        %v508 = vadd.f32 %v494, %v503
        %v509 = vadd.f32 %v495, %v505
        %s510 = sld [smem:[#allocation7 + $0x2c]]
        %v511 = vstv %s510
        %v512 = vmul.f32 %v511, %v381
        %v513 = vmul.f32 %v511, %v382
        %516 = vrot.lane.b32.xlu0 %v512, 126
        %v517 = vpop.permute.xlu0 %516
        %518 = vrot.lane.b32.xlu0 %v513, 126
        %v519 = vpop.permute.xlu0 %518
        %v522 = vadd.f32 %v508, %v517
        %v523 = vadd.f32 %v509, %v519
        %s524 = sld [smem:[#allocation7 + $0x30]]
        %v525 = vstv %s524
        %v526 = vmul.f32 %v525, %v372
        %v527 = vmul.f32 %v525, %v373
        %v528 = vmul.f32 %v525, %v374
        %vm532 = vcmask 1046528
        %v533 = vrot.slane %v526, 1
        %v534 = vrot.slane %v527, 1
        %v535 = vsel %vm532, %v533, %v534
        %v536 = vrot.slane %v528, 1
        %v537 = vsel %vm532, %v534, %v536
        %v540 = vadd.f32 %v522, %v535
        %v541 = vadd.f32 %v523, %v537
        %s542 = sld [smem:[#allocation7 + $0x34]]
        %v543 = vstv %s542
        %v544 = vmul.f32 %v543, %v375
        %v545 = vmul.f32 %v543, %v376
        %v546 = vmul.f32 %v543, %v377
        %v550 = vrot.slane %v544, 1
        %v551 = vrot.slane %v545, 1
        %v552 = vsel %vm532, %v550, %v551
        %v553 = vrot.slane %v546, 1
        %v554 = vsel %vm532, %v551, %v553
        %v557 = vadd.f32 %v540, %v552
        %v558 = vadd.f32 %v541, %v554
        %s559 = sld [smem:[#allocation7 + $0x38]]
        %v560 = vstv %s559
        %v561 = vmul.f32 %v560, %v378
        %v562 = vmul.f32 %v560, %v379
        %v563 = vmul.f32 %v560, %v380
        %v567 = vrot.slane %v561, 1
        %v568 = vrot.slane %v562, 1
        %v569 = vsel %vm532, %v567, %v568
        %v570 = vrot.slane %v563, 1
        %v571 = vsel %vm532, %v568, %v570
        %v574 = vadd.f32 %v557, %v569
        %v575 = vadd.f32 %v558, %v571
        %s576 = sld [smem:[#allocation7 + $0x3c]]
        %v577 = vstv %s576
        %v578 = vmul.f32 %v577, %v381
        %v579 = vmul.f32 %v577, %v382
        %v580 = vmul.f32 %v577, %v383
        %v584 = vrot.slane %v578, 1
        %v585 = vrot.slane %v579, 1
        %v586 = vsel %vm532, %v584, %v585
        %v587 = vrot.slane %v580, 1
        %v588 = vsel %vm532, %v585, %v587
        %v591 = vadd.f32 %v574, %v586
        %v592 = vadd.f32 %v575, %v588
        %s593 = sld [smem:[#allocation7 + $0x40]]
        %v594 = vstv %s593
        %v595 = vmul.f32 %v594, %v372
        %v596 = vmul.f32 %v594, %v373
        %v597 = vmul.f32 %v594, %v374
        %v601 = vrot.slane %v595, 1
        %v602 = vrot.slane %v596, 1
        %v603 = vsel %vm532, %v601, %v602
        %v604 = vrot.slane %v597, 1
        %v605 = vsel %vm532, %v602, %v604
        %606 = vrot.lane.b32.xlu0 %v603, 127
        %v607 = vpop.permute.xlu0 %606
        %608 = vrot.lane.b32.xlu0 %v605, 127
        %v609 = vpop.permute.xlu0 %608
        %v612 = vadd.f32 %v591, %v607
        %v613 = vadd.f32 %v592, %v609
        %s614 = sld [smem:[#allocation7 + $0x44]]
        %v615 = vstv %s614
        %v616 = vmul.f32 %v615, %v375
        %v617 = vmul.f32 %v615, %v376
        %v618 = vmul.f32 %v615, %v377
        %v622 = vrot.slane %v616, 1
        %v623 = vrot.slane %v617, 1
        %v624 = vsel %vm532, %v622, %v623
        %v625 = vrot.slane %v618, 1
        %v626 = vsel %vm532, %v623, %v625
        %627 = vrot.lane.b32.xlu0 %v624, 127
        %v628 = vpop.permute.xlu0 %627
        %629 = vrot.lane.b32.xlu0 %v626, 127
        %v630 = vpop.permute.xlu0 %629
        %v633 = vadd.f32 %v612, %v628
        %v634 = vadd.f32 %v613, %v630
        %s635 = sld [smem:[#allocation7 + $0x48]]
        %v636 = vstv %s635
        %v637 = vmul.f32 %v636, %v378
        %v638 = vmul.f32 %v636, %v379
        %v639 = vmul.f32 %v636, %v380
        %v643 = vrot.slane %v637, 1
        %v644 = vrot.slane %v638, 1
        %v645 = vsel %vm532, %v643, %v644
        %v646 = vrot.slane %v639, 1
        %v647 = vsel %vm532, %v644, %v646
        %648 = vrot.lane.b32.xlu0 %v645, 127
        %v649 = vpop.permute.xlu0 %648
        %650 = vrot.lane.b32.xlu0 %v647, 127
        %v651 = vpop.permute.xlu0 %650
        %v654 = vadd.f32 %v633, %v649
        %v655 = vadd.f32 %v634, %v651
        %s656 = sld [smem:[#allocation7 + $0x4c]]
        %v657 = vstv %s656
        %v658 = vmul.f32 %v657, %v381
        %v659 = vmul.f32 %v657, %v382
        %v660 = vmul.f32 %v657, %v383
        %v664 = vrot.slane %v658, 1
        %v665 = vrot.slane %v659, 1
        %v666 = vsel %vm532, %v664, %v665
        %v667 = vrot.slane %v660, 1
        %v668 = vsel %vm532, %v665, %v667
        %669 = vrot.lane.b32.xlu0 %v666, 127
        %v670 = vpop.permute.xlu0 %669
        %671 = vrot.lane.b32.xlu0 %v668, 127
        %v672 = vpop.permute.xlu0 %671
        %v675 = vadd.f32 %v654, %v670
        %v676 = vadd.f32 %v655, %v672
        %s677 = sld [smem:[#allocation7 + $0x50]]
        %v678 = vstv %s677
        %v679 = vmul.f32 %v678, %v372
        %v680 = vmul.f32 %v678, %v373
        %v681 = vmul.f32 %v678, %v374
        %v685 = vrot.slane %v679, 1
        %v686 = vrot.slane %v680, 1
        %v687 = vsel %vm532, %v685, %v686
        %v688 = vrot.slane %v681, 1
        %v689 = vsel %vm532, %v686, %v688
        %690 = vrot.lane.b32.xlu0 %v687, 126
        %v691 = vpop.permute.xlu0 %690
        %692 = vrot.lane.b32.xlu0 %v689, 126
        %v693 = vpop.permute.xlu0 %692
        %v696 = vadd.f32 %v675, %v691
        %v697 = vadd.f32 %v676, %v693
        %s698 = sld [smem:[#allocation7 + $0x54]]
        %v699 = vstv %s698
        %v700 = vmul.f32 %v699, %v375
        %v701 = vmul.f32 %v699, %v376
        %v702 = vmul.f32 %v699, %v377
        %v706 = vrot.slane %v700, 1
        %v707 = vrot.slane %v701, 1
        %v708 = vsel %vm532, %v706, %v707
        %v709 = vrot.slane %v702, 1
        %v710 = vsel %vm532, %v707, %v709
        %711 = vrot.lane.b32.xlu0 %v708, 126
        %v712 = vpop.permute.xlu0 %711
        %713 = vrot.lane.b32.xlu0 %v710, 126
        %v714 = vpop.permute.xlu0 %713
        %v717 = vadd.f32 %v696, %v712
        %v718 = vadd.f32 %v697, %v714
        %s719 = sld [smem:[#allocation7 + $0x58]]
        %v720 = vstv %s719
        %v721 = vmul.f32 %v720, %v378
        %v722 = vmul.f32 %v720, %v379
        %v723 = vmul.f32 %v720, %v380
        %v727 = vrot.slane %v721, 1
        %v728 = vrot.slane %v722, 1
        %v729 = vsel %vm532, %v727, %v728
        %v730 = vrot.slane %v723, 1
        %v731 = vsel %vm532, %v728, %v730
        %732 = vrot.lane.b32.xlu0 %v729, 126
        %v733 = vpop.permute.xlu0 %732
        %734 = vrot.lane.b32.xlu0 %v731, 126
        %v735 = vpop.permute.xlu0 %734
        %v738 = vadd.f32 %v717, %v733
        %v739 = vadd.f32 %v718, %v735
        %s740 = sld [smem:[#allocation7 + $0x5c]]
        %v741 = vstv %s740
        %v742 = vmul.f32 %v741, %v381
        %v743 = vmul.f32 %v741, %v382
        %v744 = vmul.f32 %v741, %v383
        %v748 = vrot.slane %v742, 1
        %v749 = vrot.slane %v743, 1
        %v750 = vsel %vm532, %v748, %v749
        %v751 = vrot.slane %v744, 1
        %v752 = vsel %vm532, %v749, %v751
        %753 = vrot.lane.b32.xlu0 %v750, 126
        %v754 = vpop.permute.xlu0 %753
        %755 = vrot.lane.b32.xlu0 %v752, 126
        %v756 = vpop.permute.xlu0 %755
        %v759 = vadd.f32 %v738, %v754
        %v760 = vadd.f32 %v739, %v756
        %s761 = sld [smem:[#allocation7 + $0x60]]
        %v762 = vstv %s761
        %v763 = vmul.f32 %v762, %v372
        %v764 = vmul.f32 %v762, %v373
        %v765 = vmul.f32 %v762, %v374
        %vm769 = vcmask 1045504
        %v770 = vrot.slane %v763, 2
        %v771 = vrot.slane %v764, 2
        %v772 = vsel %vm769, %v770, %v771
        %v773 = vrot.slane %v765, 2
        %v774 = vsel %vm769, %v771, %v773
        %v777 = vadd.f32 %v759, %v772
        %v778 = vadd.f32 %v760, %v774
        %s779 = sld [smem:[#allocation7 + $0x64]]
        %v780 = vstv %s779
        %v781 = vmul.f32 %v780, %v375
        %v782 = vmul.f32 %v780, %v376
        %v783 = vmul.f32 %v780, %v377
        %v787 = vrot.slane %v781, 2
        %v788 = vrot.slane %v782, 2
        %v789 = vsel %vm769, %v787, %v788
        %v790 = vrot.slane %v783, 2
        %v791 = vsel %vm769, %v788, %v790
        %v794 = vadd.f32 %v777, %v789
        %v795 = vadd.f32 %v778, %v791
        %s796 = sld [smem:[#allocation7 + $0x68]]
        %v797 = vstv %s796
        %v798 = vmul.f32 %v797, %v378
        %v799 = vmul.f32 %v797, %v379
        %v800 = vmul.f32 %v797, %v380
        %v804 = vrot.slane %v798, 2
        %v805 = vrot.slane %v799, 2
        %v806 = vsel %vm769, %v804, %v805
        %v807 = vrot.slane %v800, 2
        %v808 = vsel %vm769, %v805, %v807
        %v811 = vadd.f32 %v794, %v806
        %v812 = vadd.f32 %v795, %v808
        %s813 = sld [smem:[#allocation7 + $0x6c]]
        %v814 = vstv %s813
        %v815 = vmul.f32 %v814, %v381
        %v816 = vmul.f32 %v814, %v382
        %v817 = vmul.f32 %v814, %v383
        %v821 = vrot.slane %v815, 2
        %v822 = vrot.slane %v816, 2
        %v823 = vsel %vm769, %v821, %v822
        %v824 = vrot.slane %v817, 2
        %v825 = vsel %vm769, %v822, %v824
        %v828 = vadd.f32 %v811, %v823
        %v829 = vadd.f32 %v812, %v825
        %s830 = sld [smem:[#allocation7 + $0x70]]
        %v831 = vstv %s830
        %v832 = vmul.f32 %v831, %v372
        %v833 = vmul.f32 %v831, %v373
        %v834 = vmul.f32 %v831, %v374
        %v838 = vrot.slane %v832, 2
        %v839 = vrot.slane %v833, 2
        %v840 = vsel %vm769, %v838, %v839
        %v841 = vrot.slane %v834, 2
        %v842 = vsel %vm769, %v839, %v841
        %843 = vrot.lane.b32.xlu0 %v840, 127
        %v844 = vpop.permute.xlu0 %843
        %845 = vrot.lane.b32.xlu0 %v842, 127
        %v846 = vpop.permute.xlu0 %845
        %v849 = vadd.f32 %v828, %v844
        %v850 = vadd.f32 %v829, %v846
        %s851 = sld [smem:[#allocation7 + $0x74]]
        %v852 = vstv %s851
        %v853 = vmul.f32 %v852, %v375
        %v854 = vmul.f32 %v852, %v376
        %v855 = vmul.f32 %v852, %v377
        %v859 = vrot.slane %v853, 2
        %v860 = vrot.slane %v854, 2
        %v861 = vsel %vm769, %v859, %v860
        %v862 = vrot.slane %v855, 2
        %v863 = vsel %vm769, %v860, %v862
        %864 = vrot.lane.b32.xlu0 %v861, 127
        %v865 = vpop.permute.xlu0 %864
        %866 = vrot.lane.b32.xlu0 %v863, 127
        %v867 = vpop.permute.xlu0 %866
        %v870 = vadd.f32 %v849, %v865
        %v871 = vadd.f32 %v850, %v867
        %s872 = sld [smem:[#allocation7 + $0x78]]
        %v873 = vstv %s872
        %v874 = vmul.f32 %v873, %v378
        %v875 = vmul.f32 %v873, %v379
        %v876 = vmul.f32 %v873, %v380
        %v880 = vrot.slane %v874, 2
        %v881 = vrot.slane %v875, 2
        %v882 = vsel %vm769, %v880, %v881
        %v883 = vrot.slane %v876, 2
        %v884 = vsel %vm769, %v881, %v883
        %885 = vrot.lane.b32.xlu0 %v882, 127
        %v886 = vpop.permute.xlu0 %885
        %887 = vrot.lane.b32.xlu0 %v884, 127
        %v888 = vpop.permute.xlu0 %887
        %v891 = vadd.f32 %v870, %v886
        %v892 = vadd.f32 %v871, %v888
        %s893 = sld [smem:[#allocation7 + $0x7c]]
        %v894 = vstv %s893
        %v895 = vmul.f32 %v894, %v381
        %v896 = vmul.f32 %v894, %v382
        %v897 = vmul.f32 %v894, %v383
        %v901 = vrot.slane %v895, 2
        %v902 = vrot.slane %v896, 2
        %v903 = vsel %vm769, %v901, %v902
        %v904 = vrot.slane %v897, 2
        %v905 = vsel %vm769, %v902, %v904
        %906 = vrot.lane.b32.xlu0 %v903, 127
        %v907 = vpop.permute.xlu0 %906
        %908 = vrot.lane.b32.xlu0 %v905, 127
        %v909 = vpop.permute.xlu0 %908
        %v912 = vadd.f32 %v891, %v907
        %v913 = vadd.f32 %v892, %v909
        %s914 = sld [smem:[#allocation7 + $0x80]]
        %v915 = vstv %s914
        %v916 = vmul.f32 %v915, %v372
        %v917 = vmul.f32 %v915, %v373
        %v918 = vmul.f32 %v915, %v374
        %v922 = vrot.slane %v916, 2
        %v923 = vrot.slane %v917, 2
        %v924 = vsel %vm769, %v922, %v923
        %v925 = vrot.slane %v918, 2
        %v926 = vsel %vm769, %v923, %v925
        %927 = vrot.lane.b32.xlu0 %v924, 126
        %v928 = vpop.permute.xlu0 %927
        %929 = vrot.lane.b32.xlu0 %v926, 126
        %v930 = vpop.permute.xlu0 %929
        %v933 = vadd.f32 %v912, %v928
        %v934 = vadd.f32 %v913, %v930
        %s935 = sld [smem:[#allocation7 + $0x84]]
        %v936 = vstv %s935
        %v937 = vmul.f32 %v936, %v375
        %v938 = vmul.f32 %v936, %v376
        %v939 = vmul.f32 %v936, %v377
        %v943 = vrot.slane %v937, 2
        %v944 = vrot.slane %v938, 2
        %v945 = vsel %vm769, %v943, %v944
        %v946 = vrot.slane %v939, 2
        %v947 = vsel %vm769, %v944, %v946
        %948 = vrot.lane.b32.xlu0 %v945, 126
        %v949 = vpop.permute.xlu0 %948
        %950 = vrot.lane.b32.xlu0 %v947, 126
        %v951 = vpop.permute.xlu0 %950
        %v954 = vadd.f32 %v933, %v949
        %v955 = vadd.f32 %v934, %v951
        %s956 = sld [smem:[#allocation7 + $0x88]]
        %v957 = vstv %s956
        %v958 = vmul.f32 %v957, %v378
        %v959 = vmul.f32 %v957, %v379
        %v960 = vmul.f32 %v957, %v380
        %v964 = vrot.slane %v958, 2
        %v965 = vrot.slane %v959, 2
        %v966 = vsel %vm769, %v964, %v965
        %v967 = vrot.slane %v960, 2
        %v968 = vsel %vm769, %v965, %v967
        %969 = vrot.lane.b32.xlu0 %v966, 126
        %v970 = vpop.permute.xlu0 %969
        %971 = vrot.lane.b32.xlu0 %v968, 126
        %v972 = vpop.permute.xlu0 %971
        %v975 = vadd.f32 %v954, %v970
        %v976 = vadd.f32 %v955, %v972
        %s977 = sld [smem:[#allocation7 + $0x8c]]
        %v978 = vstv %s977
        %v979 = vmul.f32 %v978, %v381
        %v980 = vmul.f32 %v978, %v382
        %v981 = vmul.f32 %v978, %v383
        %v985 = vrot.slane %v979, 2
        %v986 = vrot.slane %v980, 2
        %v987 = vsel %vm769, %v985, %v986
        %v988 = vrot.slane %v981, 2
        %v989 = vsel %vm769, %v986, %v988
        %990 = vrot.lane.b32.xlu0 %v987, 126
        %v991 = vpop.permute.xlu0 %990
        %992 = vrot.lane.b32.xlu0 %v989, 126
        %v993 = vpop.permute.xlu0 %992
        %v996 = vadd.f32 %v975, %v991
        %v997 = vadd.f32 %v976, %v993
        %v1001 = vrot.slane %v334, 1
        %v1002 = vrot.slane %v335, 1
        %v1003 = vsel %vm532, %v1001, %v1002
        %v1004 = vrot.slane %v336, 1
        %v1005 = vsel %vm532, %v1002, %v1004
        %1006 = vrot.lane.b32.xlu0 %v1003, 127
        %v1007 = vpop.permute.xlu0 %1006
        %1008 = vrot.lane.b32.xlu0 %v1005, 127
        %v1009 = vpop.permute.xlu0 %1008
        %v1012 = vsub.f32 %v996, %v1007
        %v1013 = vsub.f32 %v997, %v1009
        %v1014 = vmul.f32 %v1012, %v1012
        %v1015 = vmul.f32 %v1013, %v1013
        %v1016 = vadd.f32 %v1014, 0.0
        %v1017 = vadd.f32 %v1015, 0.0
        %s1018 = sadd.s32 %s384, 1
        %s1019 = sld [smem:[#allocation6 + %s1018]]
        %v1020 = vstv %s1019
        %v1021 = vadd.f32 %v1020, 0.0
        %s1022 = sld [smem:[#allocation7 + $0x1]]
        %v1023 = vstv %s1022
        %v1024 = vmul.f32 %v1023, %v372
        %v1025 = vmul.f32 %v1023, %v373
        %v1026 = vadd.f32 %v1021, %v1024
        %v1027 = vadd.f32 %v1021, %v1025
        %s1028 = sld [smem:[#allocation7 + $0x5]]
        %v1029 = vstv %s1028
        %v1030 = vmul.f32 %v1029, %v375
        %v1031 = vmul.f32 %v1029, %v376
        %v1032 = vadd.f32 %v1026, %v1030
        %v1033 = vadd.f32 %v1027, %v1031
        %s1034 = sld [smem:[#allocation7 + $0x9]]
        %v1035 = vstv %s1034
        %v1036 = vmul.f32 %v1035, %v378
        %v1037 = vmul.f32 %v1035, %v379
        %v1038 = vadd.f32 %v1032, %v1036
        %v1039 = vadd.f32 %v1033, %v1037
        %s1040 = sld [smem:[#allocation7 + $0xd]]
        %v1041 = vstv %s1040
        %v1042 = vmul.f32 %v1041, %v381
        %v1043 = vmul.f32 %v1041, %v382
        %v1044 = vadd.f32 %v1038, %v1042
        %v1045 = vadd.f32 %v1039, %v1043
        %s1046 = sld [smem:[#allocation7 + $0x11]]
        %v1047 = vstv %s1046
        %v1048 = vmul.f32 %v1047, %v372
        %v1049 = vmul.f32 %v1047, %v373
        %1052 = vrot.lane.b32.xlu0 %v1048, 127
        %v1053 = vpop.permute.xlu0 %1052
        %1054 = vrot.lane.b32.xlu0 %v1049, 127
        %v1055 = vpop.permute.xlu0 %1054
        %v1058 = vadd.f32 %v1044, %v1053
        %v1059 = vadd.f32 %v1045, %v1055
        %s1060 = sld [smem:[#allocation7 + $0x15]]
        %v1061 = vstv %s1060
        %v1062 = vmul.f32 %v1061, %v375
        %v1063 = vmul.f32 %v1061, %v376
        %1066 = vrot.lane.b32.xlu0 %v1062, 127
        %v1067 = vpop.permute.xlu0 %1066
        %1068 = vrot.lane.b32.xlu0 %v1063, 127
        %v1069 = vpop.permute.xlu0 %1068
        %v1072 = vadd.f32 %v1058, %v1067
        %v1073 = vadd.f32 %v1059, %v1069
        %s1074 = sld [smem:[#allocation7 + $0x19]]
        %v1075 = vstv %s1074
        %v1076 = vmul.f32 %v1075, %v378
        %v1077 = vmul.f32 %v1075, %v379
        %1080 = vrot.lane.b32.xlu0 %v1076, 127
        %v1081 = vpop.permute.xlu0 %1080
        %1082 = vrot.lane.b32.xlu0 %v1077, 127
        %v1083 = vpop.permute.xlu0 %1082
        %v1086 = vadd.f32 %v1072, %v1081
        %v1087 = vadd.f32 %v1073, %v1083
        %s1088 = sld [smem:[#allocation7 + $0x1d]]
        %v1089 = vstv %s1088
        %v1090 = vmul.f32 %v1089, %v381
        %v1091 = vmul.f32 %v1089, %v382
        %1094 = vrot.lane.b32.xlu0 %v1090, 127
        %v1095 = vpop.permute.xlu0 %1094
        %1096 = vrot.lane.b32.xlu0 %v1091, 127
        %v1097 = vpop.permute.xlu0 %1096
        %v1100 = vadd.f32 %v1086, %v1095
        %v1101 = vadd.f32 %v1087, %v1097
        %s1102 = sld [smem:[#allocation7 + $0x21]]
        %v1103 = vstv %s1102
        %v1104 = vmul.f32 %v1103, %v372
        %v1105 = vmul.f32 %v1103, %v373
        %1108 = vrot.lane.b32.xlu0 %v1104, 126
        %v1109 = vpop.permute.xlu0 %1108
        %1110 = vrot.lane.b32.xlu0 %v1105, 126
        %v1111 = vpop.permute.xlu0 %1110
        %v1114 = vadd.f32 %v1100, %v1109
        %v1115 = vadd.f32 %v1101, %v1111
        %s1116 = sld [smem:[#allocation7 + $0x25]]
        %v1117 = vstv %s1116
        %v1118 = vmul.f32 %v1117, %v375
        %v1119 = vmul.f32 %v1117, %v376
        %1122 = vrot.lane.b32.xlu0 %v1118, 126
        %v1123 = vpop.permute.xlu0 %1122
        %1124 = vrot.lane.b32.xlu0 %v1119, 126
        %v1125 = vpop.permute.xlu0 %1124
        %v1128 = vadd.f32 %v1114, %v1123
        %v1129 = vadd.f32 %v1115, %v1125
        %s1130 = sld [smem:[#allocation7 + $0x29]]
        %v1131 = vstv %s1130
        %v1132 = vmul.f32 %v1131, %v378
        %v1133 = vmul.f32 %v1131, %v379
        %1136 = vrot.lane.b32.xlu0 %v1132, 126
        %v1137 = vpop.permute.xlu0 %1136
        %1138 = vrot.lane.b32.xlu0 %v1133, 126
        %v1139 = vpop.permute.xlu0 %1138
        %v1142 = vadd.f32 %v1128, %v1137
        %v1143 = vadd.f32 %v1129, %v1139
        %s1144 = sld [smem:[#allocation7 + $0x2d]]
        %v1145 = vstv %s1144
        %v1146 = vmul.f32 %v1145, %v381
        %v1147 = vmul.f32 %v1145, %v382
        %1150 = vrot.lane.b32.xlu0 %v1146, 126
        %v1151 = vpop.permute.xlu0 %1150
        %1152 = vrot.lane.b32.xlu0 %v1147, 126
        %v1153 = vpop.permute.xlu0 %1152
        %v1156 = vadd.f32 %v1142, %v1151
        %v1157 = vadd.f32 %v1143, %v1153
        %s1158 = sld [smem:[#allocation7 + $0x31]]
        %v1159 = vstv %s1158
        %v1160 = vmul.f32 %v1159, %v372
        %v1161 = vmul.f32 %v1159, %v373
        %v1162 = vmul.f32 %v1159, %v374
        %v1166 = vrot.slane %v1160, 1
        %v1167 = vrot.slane %v1161, 1
        %v1168 = vsel %vm532, %v1166, %v1167
        %v1169 = vrot.slane %v1162, 1
        %v1170 = vsel %vm532, %v1167, %v1169
        %v1173 = vadd.f32 %v1156, %v1168
        %v1174 = vadd.f32 %v1157, %v1170
        %s1175 = sld [smem:[#allocation7 + $0x35]]
        %v1176 = vstv %s1175
        %v1177 = vmul.f32 %v1176, %v375
        %v1178 = vmul.f32 %v1176, %v376
        %v1179 = vmul.f32 %v1176, %v377
        %v1183 = vrot.slane %v1177, 1
        %v1184 = vrot.slane %v1178, 1
        %v1185 = vsel %vm532, %v1183, %v1184
        %v1186 = vrot.slane %v1179, 1
        %v1187 = vsel %vm532, %v1184, %v1186
        %v1190 = vadd.f32 %v1173, %v1185
        %v1191 = vadd.f32 %v1174, %v1187
        %s1192 = sld [smem:[#allocation7 + $0x39]]
        %v1193 = vstv %s1192
        %v1194 = vmul.f32 %v1193, %v378
        %v1195 = vmul.f32 %v1193, %v379
        %v1196 = vmul.f32 %v1193, %v380
        %v1200 = vrot.slane %v1194, 1
        %v1201 = vrot.slane %v1195, 1
        %v1202 = vsel %vm532, %v1200, %v1201
        %v1203 = vrot.slane %v1196, 1
        %v1204 = vsel %vm532, %v1201, %v1203
        %v1207 = vadd.f32 %v1190, %v1202
        %v1208 = vadd.f32 %v1191, %v1204
        %s1209 = sld [smem:[#allocation7 + $0x3d]]
        %v1210 = vstv %s1209
        %v1211 = vmul.f32 %v1210, %v381
        %v1212 = vmul.f32 %v1210, %v382
        %v1213 = vmul.f32 %v1210, %v383
        %v1217 = vrot.slane %v1211, 1
        %v1218 = vrot.slane %v1212, 1
        %v1219 = vsel %vm532, %v1217, %v1218
        %v1220 = vrot.slane %v1213, 1
        %v1221 = vsel %vm532, %v1218, %v1220
        %v1224 = vadd.f32 %v1207, %v1219
        %v1225 = vadd.f32 %v1208, %v1221
        %s1226 = sld [smem:[#allocation7 + $0x41]]
        %v1227 = vstv %s1226
        %v1228 = vmul.f32 %v1227, %v372
        %v1229 = vmul.f32 %v1227, %v373
        %v1230 = vmul.f32 %v1227, %v374
        %v1234 = vrot.slane %v1228, 1
        %v1235 = vrot.slane %v1229, 1
        %v1236 = vsel %vm532, %v1234, %v1235
        %v1237 = vrot.slane %v1230, 1
        %v1238 = vsel %vm532, %v1235, %v1237
        %1239 = vrot.lane.b32.xlu0 %v1236, 127
        %v1240 = vpop.permute.xlu0 %1239
        %1241 = vrot.lane.b32.xlu0 %v1238, 127
        %v1242 = vpop.permute.xlu0 %1241
        %v1245 = vadd.f32 %v1224, %v1240
        %v1246 = vadd.f32 %v1225, %v1242
        %s1247 = sld [smem:[#allocation7 + $0x45]]
        %v1248 = vstv %s1247
        %v1249 = vmul.f32 %v1248, %v375
        %v1250 = vmul.f32 %v1248, %v376
        %v1251 = vmul.f32 %v1248, %v377
        %v1255 = vrot.slane %v1249, 1
        %v1256 = vrot.slane %v1250, 1
        %v1257 = vsel %vm532, %v1255, %v1256
        %v1258 = vrot.slane %v1251, 1
        %v1259 = vsel %vm532, %v1256, %v1258
        %1260 = vrot.lane.b32.xlu0 %v1257, 127
        %v1261 = vpop.permute.xlu0 %1260
        %1262 = vrot.lane.b32.xlu0 %v1259, 127
        %v1263 = vpop.permute.xlu0 %1262
        %v1266 = vadd.f32 %v1245, %v1261
        %v1267 = vadd.f32 %v1246, %v1263
        %s1268 = sld [smem:[#allocation7 + $0x49]]
        %v1269 = vstv %s1268
        %v1270 = vmul.f32 %v1269, %v378
        %v1271 = vmul.f32 %v1269, %v379
        %v1272 = vmul.f32 %v1269, %v380
        %v1276 = vrot.slane %v1270, 1
        %v1277 = vrot.slane %v1271, 1
        %v1278 = vsel %vm532, %v1276, %v1277
        %v1279 = vrot.slane %v1272, 1
        %v1280 = vsel %vm532, %v1277, %v1279
        %1281 = vrot.lane.b32.xlu0 %v1278, 127
        %v1282 = vpop.permute.xlu0 %1281
        %1283 = vrot.lane.b32.xlu0 %v1280, 127
        %v1284 = vpop.permute.xlu0 %1283
        %v1287 = vadd.f32 %v1266, %v1282
        %v1288 = vadd.f32 %v1267, %v1284
        %s1289 = sld [smem:[#allocation7 + $0x4d]]
        %v1290 = vstv %s1289
        %v1291 = vmul.f32 %v1290, %v381
        %v1292 = vmul.f32 %v1290, %v382
        %v1293 = vmul.f32 %v1290, %v383
        %v1297 = vrot.slane %v1291, 1
        %v1298 = vrot.slane %v1292, 1
        %v1299 = vsel %vm532, %v1297, %v1298
        %v1300 = vrot.slane %v1293, 1
        %v1301 = vsel %vm532, %v1298, %v1300
        %1302 = vrot.lane.b32.xlu0 %v1299, 127
        %v1303 = vpop.permute.xlu0 %1302
        %1304 = vrot.lane.b32.xlu0 %v1301, 127
        %v1305 = vpop.permute.xlu0 %1304
        %v1308 = vadd.f32 %v1287, %v1303
        %v1309 = vadd.f32 %v1288, %v1305
        %s1310 = sld [smem:[#allocation7 + $0x51]]
        %v1311 = vstv %s1310
        %v1312 = vmul.f32 %v1311, %v372
        %v1313 = vmul.f32 %v1311, %v373
        %v1314 = vmul.f32 %v1311, %v374
        %v1318 = vrot.slane %v1312, 1
        %v1319 = vrot.slane %v1313, 1
        %v1320 = vsel %vm532, %v1318, %v1319
        %v1321 = vrot.slane %v1314, 1
        %v1322 = vsel %vm532, %v1319, %v1321
        %1323 = vrot.lane.b32.xlu0 %v1320, 126
        %v1324 = vpop.permute.xlu0 %1323
        %1325 = vrot.lane.b32.xlu0 %v1322, 126
        %v1326 = vpop.permute.xlu0 %1325
        %v1329 = vadd.f32 %v1308, %v1324
        %v1330 = vadd.f32 %v1309, %v1326
        %s1331 = sld [smem:[#allocation7 + $0x55]]
        %v1332 = vstv %s1331
        %v1333 = vmul.f32 %v1332, %v375
        %v1334 = vmul.f32 %v1332, %v376
        %v1335 = vmul.f32 %v1332, %v377
        %v1339 = vrot.slane %v1333, 1
        %v1340 = vrot.slane %v1334, 1
        %v1341 = vsel %vm532, %v1339, %v1340
        %v1342 = vrot.slane %v1335, 1
        %v1343 = vsel %vm532, %v1340, %v1342
        %1344 = vrot.lane.b32.xlu0 %v1341, 126
        %v1345 = vpop.permute.xlu0 %1344
        %1346 = vrot.lane.b32.xlu0 %v1343, 126
        %v1347 = vpop.permute.xlu0 %1346
        %v1350 = vadd.f32 %v1329, %v1345
        %v1351 = vadd.f32 %v1330, %v1347
        %s1352 = sld [smem:[#allocation7 + $0x59]]
        %v1353 = vstv %s1352
        %v1354 = vmul.f32 %v1353, %v378
        %v1355 = vmul.f32 %v1353, %v379
        %v1356 = vmul.f32 %v1353, %v380
        %v1360 = vrot.slane %v1354, 1
        %v1361 = vrot.slane %v1355, 1
        %v1362 = vsel %vm532, %v1360, %v1361
        %v1363 = vrot.slane %v1356, 1
        %v1364 = vsel %vm532, %v1361, %v1363
        %1365 = vrot.lane.b32.xlu0 %v1362, 126
        %v1366 = vpop.permute.xlu0 %1365
        %1367 = vrot.lane.b32.xlu0 %v1364, 126
        %v1368 = vpop.permute.xlu0 %1367
        %v1371 = vadd.f32 %v1350, %v1366
        %v1372 = vadd.f32 %v1351, %v1368
        %s1373 = sld [smem:[#allocation7 + $0x5d]]
        %v1374 = vstv %s1373
        %v1375 = vmul.f32 %v1374, %v381
        %v1376 = vmul.f32 %v1374, %v382
        %v1377 = vmul.f32 %v1374, %v383
        %v1381 = vrot.slane %v1375, 1
        %v1382 = vrot.slane %v1376, 1
        %v1383 = vsel %vm532, %v1381, %v1382
        %v1384 = vrot.slane %v1377, 1
        %v1385 = vsel %vm532, %v1382, %v1384
        %1386 = vrot.lane.b32.xlu0 %v1383, 126
        %v1387 = vpop.permute.xlu0 %1386
        %1388 = vrot.lane.b32.xlu0 %v1385, 126
        %v1389 = vpop.permute.xlu0 %1388
        %v1392 = vadd.f32 %v1371, %v1387
        %v1393 = vadd.f32 %v1372, %v1389
        %s1394 = sld [smem:[#allocation7 + $0x61]]
        %v1395 = vstv %s1394
        %v1396 = vmul.f32 %v1395, %v372
        %v1397 = vmul.f32 %v1395, %v373
        %v1398 = vmul.f32 %v1395, %v374
        %v1402 = vrot.slane %v1396, 2
        %v1403 = vrot.slane %v1397, 2
        %v1404 = vsel %vm769, %v1402, %v1403
        %v1405 = vrot.slane %v1398, 2
        %v1406 = vsel %vm769, %v1403, %v1405
        %v1409 = vadd.f32 %v1392, %v1404
        %v1410 = vadd.f32 %v1393, %v1406
        %s1411 = sld [smem:[#allocation7 + $0x65]]
        %v1412 = vstv %s1411
        %v1413 = vmul.f32 %v1412, %v375
        %v1414 = vmul.f32 %v1412, %v376
        %v1415 = vmul.f32 %v1412, %v377
        %v1419 = vrot.slane %v1413, 2
        %v1420 = vrot.slane %v1414, 2
        %v1421 = vsel %vm769, %v1419, %v1420
        %v1422 = vrot.slane %v1415, 2
        %v1423 = vsel %vm769, %v1420, %v1422
        %v1426 = vadd.f32 %v1409, %v1421
        %v1427 = vadd.f32 %v1410, %v1423
        %s1428 = sld [smem:[#allocation7 + $0x69]]
        %v1429 = vstv %s1428
        %v1430 = vmul.f32 %v1429, %v378
        %v1431 = vmul.f32 %v1429, %v379
        %v1432 = vmul.f32 %v1429, %v380
        %v1436 = vrot.slane %v1430, 2
        %v1437 = vrot.slane %v1431, 2
        %v1438 = vsel %vm769, %v1436, %v1437
        %v1439 = vrot.slane %v1432, 2
        %v1440 = vsel %vm769, %v1437, %v1439
        %v1443 = vadd.f32 %v1426, %v1438
        %v1444 = vadd.f32 %v1427, %v1440
        %s1445 = sld [smem:[#allocation7 + $0x6d]]
        %v1446 = vstv %s1445
        %v1447 = vmul.f32 %v1446, %v381
        %v1448 = vmul.f32 %v1446, %v382
        %v1449 = vmul.f32 %v1446, %v383
        %v1453 = vrot.slane %v1447, 2
        %v1454 = vrot.slane %v1448, 2
        %v1455 = vsel %vm769, %v1453, %v1454
        %v1456 = vrot.slane %v1449, 2
        %v1457 = vsel %vm769, %v1454, %v1456
        %v1460 = vadd.f32 %v1443, %v1455
        %v1461 = vadd.f32 %v1444, %v1457
        %s1462 = sld [smem:[#allocation7 + $0x71]]
        %v1463 = vstv %s1462
        %v1464 = vmul.f32 %v1463, %v372
        %v1465 = vmul.f32 %v1463, %v373
        %v1466 = vmul.f32 %v1463, %v374
        %v1470 = vrot.slane %v1464, 2
        %v1471 = vrot.slane %v1465, 2
        %v1472 = vsel %vm769, %v1470, %v1471
        %v1473 = vrot.slane %v1466, 2
        %v1474 = vsel %vm769, %v1471, %v1473
        %1475 = vrot.lane.b32.xlu0 %v1472, 127
        %v1476 = vpop.permute.xlu0 %1475
        %1477 = vrot.lane.b32.xlu0 %v1474, 127
        %v1478 = vpop.permute.xlu0 %1477
        %v1481 = vadd.f32 %v1460, %v1476
        %v1482 = vadd.f32 %v1461, %v1478
        %s1483 = sld [smem:[#allocation7 + $0x75]]
        %v1484 = vstv %s1483
        %v1485 = vmul.f32 %v1484, %v375
        %v1486 = vmul.f32 %v1484, %v376
        %v1487 = vmul.f32 %v1484, %v377
        %v1491 = vrot.slane %v1485, 2
        %v1492 = vrot.slane %v1486, 2
        %v1493 = vsel %vm769, %v1491, %v1492
        %v1494 = vrot.slane %v1487, 2
        %v1495 = vsel %vm769, %v1492, %v1494
        %1496 = vrot.lane.b32.xlu0 %v1493, 127
        %v1497 = vpop.permute.xlu0 %1496
        %1498 = vrot.lane.b32.xlu0 %v1495, 127
        %v1499 = vpop.permute.xlu0 %1498
        %v1502 = vadd.f32 %v1481, %v1497
        %v1503 = vadd.f32 %v1482, %v1499
        %s1504 = sld [smem:[#allocation7 + $0x79]]
        %v1505 = vstv %s1504
        %v1506 = vmul.f32 %v1505, %v378
        %v1507 = vmul.f32 %v1505, %v379
        %v1508 = vmul.f32 %v1505, %v380
        %v1512 = vrot.slane %v1506, 2
        %v1513 = vrot.slane %v1507, 2
        %v1514 = vsel %vm769, %v1512, %v1513
        %v1515 = vrot.slane %v1508, 2
        %v1516 = vsel %vm769, %v1513, %v1515
        %1517 = vrot.lane.b32.xlu0 %v1514, 127
        %v1518 = vpop.permute.xlu0 %1517
        %1519 = vrot.lane.b32.xlu0 %v1516, 127
        %v1520 = vpop.permute.xlu0 %1519
        %v1523 = vadd.f32 %v1502, %v1518
        %v1524 = vadd.f32 %v1503, %v1520
        %s1525 = sld [smem:[#allocation7 + $0x7d]]
        %v1526 = vstv %s1525
        %v1527 = vmul.f32 %v1526, %v381
        %v1528 = vmul.f32 %v1526, %v382
        %v1529 = vmul.f32 %v1526, %v383
        %v1533 = vrot.slane %v1527, 2
        %v1534 = vrot.slane %v1528, 2
        %v1535 = vsel %vm769, %v1533, %v1534
        %v1536 = vrot.slane %v1529, 2
        %v1537 = vsel %vm769, %v1534, %v1536
        %1538 = vrot.lane.b32.xlu0 %v1535, 127
        %v1539 = vpop.permute.xlu0 %1538
        %1540 = vrot.lane.b32.xlu0 %v1537, 127
        %v1541 = vpop.permute.xlu0 %1540
        %v1544 = vadd.f32 %v1523, %v1539
        %v1545 = vadd.f32 %v1524, %v1541
        %s1546 = sld [smem:[#allocation7 + $0x81]]
        %v1547 = vstv %s1546
        %v1548 = vmul.f32 %v1547, %v372
        %v1549 = vmul.f32 %v1547, %v373
        %v1550 = vmul.f32 %v1547, %v374
        %v1554 = vrot.slane %v1548, 2
        %v1555 = vrot.slane %v1549, 2
        %v1556 = vsel %vm769, %v1554, %v1555
        %v1557 = vrot.slane %v1550, 2
        %v1558 = vsel %vm769, %v1555, %v1557
        %1559 = vrot.lane.b32.xlu0 %v1556, 126
        %v1560 = vpop.permute.xlu0 %1559
        %1561 = vrot.lane.b32.xlu0 %v1558, 126
        %v1562 = vpop.permute.xlu0 %1561
        %v1565 = vadd.f32 %v1544, %v1560
        %v1566 = vadd.f32 %v1545, %v1562
        %s1567 = sld [smem:[#allocation7 + $0x85]]
        %v1568 = vstv %s1567
        %v1569 = vmul.f32 %v1568, %v375
        %v1570 = vmul.f32 %v1568, %v376
        %v1571 = vmul.f32 %v1568, %v377
        %v1575 = vrot.slane %v1569, 2
        %v1576 = vrot.slane %v1570, 2
        %v1577 = vsel %vm769, %v1575, %v1576
        %v1578 = vrot.slane %v1571, 2
        %v1579 = vsel %vm769, %v1576, %v1578
        %1580 = vrot.lane.b32.xlu0 %v1577, 126
        %v1581 = vpop.permute.xlu0 %1580
        %1582 = vrot.lane.b32.xlu0 %v1579, 126
        %v1583 = vpop.permute.xlu0 %1582
        %v1586 = vadd.f32 %v1565, %v1581
        %v1587 = vadd.f32 %v1566, %v1583
        %s1588 = sld [smem:[#allocation7 + $0x89]]
        %v1589 = vstv %s1588
        %v1590 = vmul.f32 %v1589, %v378
        %v1591 = vmul.f32 %v1589, %v379
        %v1592 = vmul.f32 %v1589, %v380
        %v1596 = vrot.slane %v1590, 2
        %v1597 = vrot.slane %v1591, 2
        %v1598 = vsel %vm769, %v1596, %v1597
        %v1599 = vrot.slane %v1592, 2
        %v1600 = vsel %vm769, %v1597, %v1599
        %1601 = vrot.lane.b32.xlu0 %v1598, 126
        %v1602 = vpop.permute.xlu0 %1601
        %1603 = vrot.lane.b32.xlu0 %v1600, 126
        %v1604 = vpop.permute.xlu0 %1603
        %v1607 = vadd.f32 %v1586, %v1602
        %v1608 = vadd.f32 %v1587, %v1604
        %s1609 = sld [smem:[#allocation7 + $0x8d]]
        %v1610 = vstv %s1609
        %v1611 = vmul.f32 %v1610, %v381
        %v1612 = vmul.f32 %v1610, %v382
        %v1613 = vmul.f32 %v1610, %v383
        %v1617 = vrot.slane %v1611, 2
        %v1618 = vrot.slane %v1612, 2
        %v1619 = vsel %vm769, %v1617, %v1618
        %v1620 = vrot.slane %v1613, 2
        %v1621 = vsel %vm769, %v1618, %v1620
        %1622 = vrot.lane.b32.xlu0 %v1619, 126
        %v1623 = vpop.permute.xlu0 %1622
        %1624 = vrot.lane.b32.xlu0 %v1621, 126
        %v1625 = vpop.permute.xlu0 %1624
        %v1628 = vadd.f32 %v1607, %v1623
        %v1629 = vadd.f32 %v1608, %v1625
        %v1633 = vrot.slane %v337, 1
        %v1634 = vrot.slane %v338, 1
        %v1635 = vsel %vm532, %v1633, %v1634
        %v1636 = vrot.slane %v339, 1
        %v1637 = vsel %vm532, %v1634, %v1636
        %1638 = vrot.lane.b32.xlu0 %v1635, 127
        %v1639 = vpop.permute.xlu0 %1638
        %1640 = vrot.lane.b32.xlu0 %v1637, 127
        %v1641 = vpop.permute.xlu0 %1640
        %v1644 = vsub.f32 %v1628, %v1639
        %v1645 = vsub.f32 %v1629, %v1641
        %v1646 = vmul.f32 %v1644, %v1644
        %v1647 = vmul.f32 %v1645, %v1645
        %v1648 = vadd.f32 %v1016, %v1646
        %v1649 = vadd.f32 %v1017, %v1647
        %s1650 = sadd.s32 %s384, 2
        %s1651 = sld [smem:[#allocation6 + %s1650]]
        %v1652 = vstv %s1651
        %v1653 = vadd.f32 %v1652, 0.0
        %s1654 = sld [smem:[#allocation7 + $0x2]]
        %v1655 = vstv %s1654
        %v1656 = vmul.f32 %v1655, %v372
        %v1657 = vmul.f32 %v1655, %v373
        %v1658 = vadd.f32 %v1653, %v1656
        %v1659 = vadd.f32 %v1653, %v1657
        %s1660 = sld [smem:[#allocation7 + $0x6]]
        %v1661 = vstv %s1660
        %v1662 = vmul.f32 %v1661, %v375
        %v1663 = vmul.f32 %v1661, %v376
        %v1664 = vadd.f32 %v1658, %v1662
        %v1665 = vadd.f32 %v1659, %v1663
        %s1666 = sld [smem:[#allocation7 + $0xa]]
        %v1667 = vstv %s1666
        %v1668 = vmul.f32 %v1667, %v378
        %v1669 = vmul.f32 %v1667, %v379
        %v1670 = vadd.f32 %v1664, %v1668
        %v1671 = vadd.f32 %v1665, %v1669
        %s1672 = sld [smem:[#allocation7 + $0xe]]
        %v1673 = vstv %s1672
        %v1674 = vmul.f32 %v1673, %v381
        %v1675 = vmul.f32 %v1673, %v382
        %v1676 = vadd.f32 %v1670, %v1674
        %v1677 = vadd.f32 %v1671, %v1675
        %s1678 = sld [smem:[#allocation7 + $0x12]]
        %v1679 = vstv %s1678
        %v1680 = vmul.f32 %v1679, %v372
        %v1681 = vmul.f32 %v1679, %v373
        %1684 = vrot.lane.b32.xlu0 %v1680, 127
        %v1685 = vpop.permute.xlu0 %1684
        %1686 = vrot.lane.b32.xlu0 %v1681, 127
        %v1687 = vpop.permute.xlu0 %1686
        %v1690 = vadd.f32 %v1676, %v1685
        %v1691 = vadd.f32 %v1677, %v1687
        %s1692 = sld [smem:[#allocation7 + $0x16]]
        %v1693 = vstv %s1692
        %v1694 = vmul.f32 %v1693, %v375
        %v1695 = vmul.f32 %v1693, %v376
        %1698 = vrot.lane.b32.xlu0 %v1694, 127
        %v1699 = vpop.permute.xlu0 %1698
        %1700 = vrot.lane.b32.xlu0 %v1695, 127
        %v1701 = vpop.permute.xlu0 %1700
        %v1704 = vadd.f32 %v1690, %v1699
        %v1705 = vadd.f32 %v1691, %v1701
        %s1706 = sld [smem:[#allocation7 + $0x1a]]
        %v1707 = vstv %s1706
        %v1708 = vmul.f32 %v1707, %v378
        %v1709 = vmul.f32 %v1707, %v379
        %1712 = vrot.lane.b32.xlu0 %v1708, 127
        %v1713 = vpop.permute.xlu0 %1712
        %1714 = vrot.lane.b32.xlu0 %v1709, 127
        %v1715 = vpop.permute.xlu0 %1714
        %v1718 = vadd.f32 %v1704, %v1713
        %v1719 = vadd.f32 %v1705, %v1715
        %s1720 = sld [smem:[#allocation7 + $0x1e]]
        %v1721 = vstv %s1720
        %v1722 = vmul.f32 %v1721, %v381
        %v1723 = vmul.f32 %v1721, %v382
        %1726 = vrot.lane.b32.xlu0 %v1722, 127
        %v1727 = vpop.permute.xlu0 %1726
        %1728 = vrot.lane.b32.xlu0 %v1723, 127
        %v1729 = vpop.permute.xlu0 %1728
        %v1732 = vadd.f32 %v1718, %v1727
        %v1733 = vadd.f32 %v1719, %v1729
        %s1734 = sld [smem:[#allocation7 + $0x22]]
        %v1735 = vstv %s1734
        %v1736 = vmul.f32 %v1735, %v372
        %v1737 = vmul.f32 %v1735, %v373
        %1740 = vrot.lane.b32.xlu0 %v1736, 126
        %v1741 = vpop.permute.xlu0 %1740
        %1742 = vrot.lane.b32.xlu0 %v1737, 126
        %v1743 = vpop.permute.xlu0 %1742
        %v1746 = vadd.f32 %v1732, %v1741
        %v1747 = vadd.f32 %v1733, %v1743
        %s1748 = sld [smem:[#allocation7 + $0x26]]
        %v1749 = vstv %s1748
        %v1750 = vmul.f32 %v1749, %v375
        %v1751 = vmul.f32 %v1749, %v376
        %1754 = vrot.lane.b32.xlu0 %v1750, 126
        %v1755 = vpop.permute.xlu0 %1754
        %1756 = vrot.lane.b32.xlu0 %v1751, 126
        %v1757 = vpop.permute.xlu0 %1756
        %v1760 = vadd.f32 %v1746, %v1755
        %v1761 = vadd.f32 %v1747, %v1757
        %s1762 = sld [smem:[#allocation7 + $0x2a]]
        %v1763 = vstv %s1762
        %v1764 = vmul.f32 %v1763, %v378
        %v1765 = vmul.f32 %v1763, %v379
        %1768 = vrot.lane.b32.xlu0 %v1764, 126
        %v1769 = vpop.permute.xlu0 %1768
        %1770 = vrot.lane.b32.xlu0 %v1765, 126
        %v1771 = vpop.permute.xlu0 %1770
        %v1774 = vadd.f32 %v1760, %v1769
        %v1775 = vadd.f32 %v1761, %v1771
        %s1776 = sld [smem:[#allocation7 + $0x2e]]
        %v1777 = vstv %s1776
        %v1778 = vmul.f32 %v1777, %v381
        %v1779 = vmul.f32 %v1777, %v382
        %1782 = vrot.lane.b32.xlu0 %v1778, 126
        %v1783 = vpop.permute.xlu0 %1782
        %1784 = vrot.lane.b32.xlu0 %v1779, 126
        %v1785 = vpop.permute.xlu0 %1784
        %v1788 = vadd.f32 %v1774, %v1783
        %v1789 = vadd.f32 %v1775, %v1785
        %s1790 = sld [smem:[#allocation7 + $0x32]]
        %v1791 = vstv %s1790
        %v1792 = vmul.f32 %v1791, %v372
        %v1793 = vmul.f32 %v1791, %v373
        %v1794 = vmul.f32 %v1791, %v374
        %v1798 = vrot.slane %v1792, 1
        %v1799 = vrot.slane %v1793, 1
        %v1800 = vsel %vm532, %v1798, %v1799
        %v1801 = vrot.slane %v1794, 1
        %v1802 = vsel %vm532, %v1799, %v1801
        %v1805 = vadd.f32 %v1788, %v1800
        %v1806 = vadd.f32 %v1789, %v1802
        %s1807 = sld [smem:[#allocation7 + $0x36]]
        %v1808 = vstv %s1807
        %v1809 = vmul.f32 %v1808, %v375
        %v1810 = vmul.f32 %v1808, %v376
        %v1811 = vmul.f32 %v1808, %v377
        %v1815 = vrot.slane %v1809, 1
        %v1816 = vrot.slane %v1810, 1
        %v1817 = vsel %vm532, %v1815, %v1816
        %v1818 = vrot.slane %v1811, 1
        %v1819 = vsel %vm532, %v1816, %v1818
        %v1822 = vadd.f32 %v1805, %v1817
        %v1823 = vadd.f32 %v1806, %v1819
        %s1824 = sld [smem:[#allocation7 + $0x3a]]
        %v1825 = vstv %s1824
        %v1826 = vmul.f32 %v1825, %v378
        %v1827 = vmul.f32 %v1825, %v379
        %v1828 = vmul.f32 %v1825, %v380
        %v1832 = vrot.slane %v1826, 1
        %v1833 = vrot.slane %v1827, 1
        %v1834 = vsel %vm532, %v1832, %v1833
        %v1835 = vrot.slane %v1828, 1
        %v1836 = vsel %vm532, %v1833, %v1835
        %v1839 = vadd.f32 %v1822, %v1834
        %v1840 = vadd.f32 %v1823, %v1836
        %s1841 = sld [smem:[#allocation7 + $0x3e]]
        %v1842 = vstv %s1841
        %v1843 = vmul.f32 %v1842, %v381
        %v1844 = vmul.f32 %v1842, %v382
        %v1845 = vmul.f32 %v1842, %v383
        %v1849 = vrot.slane %v1843, 1
        %v1850 = vrot.slane %v1844, 1
        %v1851 = vsel %vm532, %v1849, %v1850
        %v1852 = vrot.slane %v1845, 1
        %v1853 = vsel %vm532, %v1850, %v1852
        %v1856 = vadd.f32 %v1839, %v1851
        %v1857 = vadd.f32 %v1840, %v1853
        %s1858 = sld [smem:[#allocation7 + $0x42]]
        %v1859 = vstv %s1858
        %v1860 = vmul.f32 %v1859, %v372
        %v1861 = vmul.f32 %v1859, %v373
        %v1862 = vmul.f32 %v1859, %v374
        %v1866 = vrot.slane %v1860, 1
        %v1867 = vrot.slane %v1861, 1
        %v1868 = vsel %vm532, %v1866, %v1867
        %v1869 = vrot.slane %v1862, 1
        %v1870 = vsel %vm532, %v1867, %v1869
        %1871 = vrot.lane.b32.xlu0 %v1868, 127
        %v1872 = vpop.permute.xlu0 %1871
        %1873 = vrot.lane.b32.xlu0 %v1870, 127
        %v1874 = vpop.permute.xlu0 %1873
        %v1877 = vadd.f32 %v1856, %v1872
        %v1878 = vadd.f32 %v1857, %v1874
        %s1879 = sld [smem:[#allocation7 + $0x46]]
        %v1880 = vstv %s1879
        %v1881 = vmul.f32 %v1880, %v375
        %v1882 = vmul.f32 %v1880, %v376
        %v1883 = vmul.f32 %v1880, %v377
        %v1887 = vrot.slane %v1881, 1
        %v1888 = vrot.slane %v1882, 1
        %v1889 = vsel %vm532, %v1887, %v1888
        %v1890 = vrot.slane %v1883, 1
        %v1891 = vsel %vm532, %v1888, %v1890
        %1892 = vrot.lane.b32.xlu0 %v1889, 127
        %v1893 = vpop.permute.xlu0 %1892
        %1894 = vrot.lane.b32.xlu0 %v1891, 127
        %v1895 = vpop.permute.xlu0 %1894
        %v1898 = vadd.f32 %v1877, %v1893
        %v1899 = vadd.f32 %v1878, %v1895
        %s1900 = sld [smem:[#allocation7 + $0x4a]]
        %v1901 = vstv %s1900
        %v1902 = vmul.f32 %v1901, %v378
        %v1903 = vmul.f32 %v1901, %v379
        %v1904 = vmul.f32 %v1901, %v380
        %v1908 = vrot.slane %v1902, 1
        %v1909 = vrot.slane %v1903, 1
        %v1910 = vsel %vm532, %v1908, %v1909
        %v1911 = vrot.slane %v1904, 1
        %v1912 = vsel %vm532, %v1909, %v1911
        %1913 = vrot.lane.b32.xlu0 %v1910, 127
        %v1914 = vpop.permute.xlu0 %1913
        %1915 = vrot.lane.b32.xlu0 %v1912, 127
        %v1916 = vpop.permute.xlu0 %1915
        %v1919 = vadd.f32 %v1898, %v1914
        %v1920 = vadd.f32 %v1899, %v1916
        %s1921 = sld [smem:[#allocation7 + $0x4e]]
        %v1922 = vstv %s1921
        %v1923 = vmul.f32 %v1922, %v381
        %v1924 = vmul.f32 %v1922, %v382
        %v1925 = vmul.f32 %v1922, %v383
        %v1929 = vrot.slane %v1923, 1
        %v1930 = vrot.slane %v1924, 1
        %v1931 = vsel %vm532, %v1929, %v1930
        %v1932 = vrot.slane %v1925, 1
        %v1933 = vsel %vm532, %v1930, %v1932
        %1934 = vrot.lane.b32.xlu0 %v1931, 127
        %v1935 = vpop.permute.xlu0 %1934
        %1936 = vrot.lane.b32.xlu0 %v1933, 127
        %v1937 = vpop.permute.xlu0 %1936
        %v1940 = vadd.f32 %v1919, %v1935
        %v1941 = vadd.f32 %v1920, %v1937
        %s1942 = sld [smem:[#allocation7 + $0x52]]
        %v1943 = vstv %s1942
        %v1944 = vmul.f32 %v1943, %v372
        %v1945 = vmul.f32 %v1943, %v373
        %v1946 = vmul.f32 %v1943, %v374
        %v1950 = vrot.slane %v1944, 1
        %v1951 = vrot.slane %v1945, 1
        %v1952 = vsel %vm532, %v1950, %v1951
        %v1953 = vrot.slane %v1946, 1
        %v1954 = vsel %vm532, %v1951, %v1953
        %1955 = vrot.lane.b32.xlu0 %v1952, 126
        %v1956 = vpop.permute.xlu0 %1955
        %1957 = vrot.lane.b32.xlu0 %v1954, 126
        %v1958 = vpop.permute.xlu0 %1957
        %v1961 = vadd.f32 %v1940, %v1956
        %v1962 = vadd.f32 %v1941, %v1958
        %s1963 = sld [smem:[#allocation7 + $0x56]]
        %v1964 = vstv %s1963
        %v1965 = vmul.f32 %v1964, %v375
        %v1966 = vmul.f32 %v1964, %v376
        %v1967 = vmul.f32 %v1964, %v377
        %v1971 = vrot.slane %v1965, 1
        %v1972 = vrot.slane %v1966, 1
        %v1973 = vsel %vm532, %v1971, %v1972
        %v1974 = vrot.slane %v1967, 1
        %v1975 = vsel %vm532, %v1972, %v1974
        %1976 = vrot.lane.b32.xlu0 %v1973, 126
        %v1977 = vpop.permute.xlu0 %1976
        %1978 = vrot.lane.b32.xlu0 %v1975, 126
        %v1979 = vpop.permute.xlu0 %1978
        %v1982 = vadd.f32 %v1961, %v1977
        %v1983 = vadd.f32 %v1962, %v1979
        %s1984 = sld [smem:[#allocation7 + $0x5a]]
        %v1985 = vstv %s1984
        %v1986 = vmul.f32 %v1985, %v378
        %v1987 = vmul.f32 %v1985, %v379
        %v1988 = vmul.f32 %v1985, %v380
        %v1992 = vrot.slane %v1986, 1
        %v1993 = vrot.slane %v1987, 1
        %v1994 = vsel %vm532, %v1992, %v1993
        %v1995 = vrot.slane %v1988, 1
        %v1996 = vsel %vm532, %v1993, %v1995
        %1997 = vrot.lane.b32.xlu0 %v1994, 126
        %v1998 = vpop.permute.xlu0 %1997
        %1999 = vrot.lane.b32.xlu0 %v1996, 126
        %v2000 = vpop.permute.xlu0 %1999
        %v2003 = vadd.f32 %v1982, %v1998
        %v2004 = vadd.f32 %v1983, %v2000
        %s2005 = sld [smem:[#allocation7 + $0x5e]]
        %v2006 = vstv %s2005
        %v2007 = vmul.f32 %v2006, %v381
        %v2008 = vmul.f32 %v2006, %v382
        %v2009 = vmul.f32 %v2006, %v383
        %v2013 = vrot.slane %v2007, 1
        %v2014 = vrot.slane %v2008, 1
        %v2015 = vsel %vm532, %v2013, %v2014
        %v2016 = vrot.slane %v2009, 1
        %v2017 = vsel %vm532, %v2014, %v2016
        %2018 = vrot.lane.b32.xlu0 %v2015, 126
        %v2019 = vpop.permute.xlu0 %2018
        %2020 = vrot.lane.b32.xlu0 %v2017, 126
        %v2021 = vpop.permute.xlu0 %2020
        %v2024 = vadd.f32 %v2003, %v2019
        %v2025 = vadd.f32 %v2004, %v2021
        %s2026 = sld [smem:[#allocation7 + $0x62]]
        %v2027 = vstv %s2026
        %v2028 = vmul.f32 %v2027, %v372
        %v2029 = vmul.f32 %v2027, %v373
        %v2030 = vmul.f32 %v2027, %v374
        %v2034 = vrot.slane %v2028, 2
        %v2035 = vrot.slane %v2029, 2
        %v2036 = vsel %vm769, %v2034, %v2035
        %v2037 = vrot.slane %v2030, 2
        %v2038 = vsel %vm769, %v2035, %v2037
        %v2041 = vadd.f32 %v2024, %v2036
        %v2042 = vadd.f32 %v2025, %v2038
        %s2043 = sld [smem:[#allocation7 + $0x66]]
        %v2044 = vstv %s2043
        %v2045 = vmul.f32 %v2044, %v375
        %v2046 = vmul.f32 %v2044, %v376
        %v2047 = vmul.f32 %v2044, %v377
        %v2051 = vrot.slane %v2045, 2
        %v2052 = vrot.slane %v2046, 2
        %v2053 = vsel %vm769, %v2051, %v2052
        %v2054 = vrot.slane %v2047, 2
        %v2055 = vsel %vm769, %v2052, %v2054
        %v2058 = vadd.f32 %v2041, %v2053
        %v2059 = vadd.f32 %v2042, %v2055
        %s2060 = sld [smem:[#allocation7 + $0x6a]]
        %v2061 = vstv %s2060
        %v2062 = vmul.f32 %v2061, %v378
        %v2063 = vmul.f32 %v2061, %v379
        %v2064 = vmul.f32 %v2061, %v380
        %v2068 = vrot.slane %v2062, 2
        %v2069 = vrot.slane %v2063, 2
        %v2070 = vsel %vm769, %v2068, %v2069
        %v2071 = vrot.slane %v2064, 2
        %v2072 = vsel %vm769, %v2069, %v2071
        %v2075 = vadd.f32 %v2058, %v2070
        %v2076 = vadd.f32 %v2059, %v2072
        %s2077 = sld [smem:[#allocation7 + $0x6e]]
        %v2078 = vstv %s2077
        %v2079 = vmul.f32 %v2078, %v381
        %v2080 = vmul.f32 %v2078, %v382
        %v2081 = vmul.f32 %v2078, %v383
        %v2085 = vrot.slane %v2079, 2
        %v2086 = vrot.slane %v2080, 2
        %v2087 = vsel %vm769, %v2085, %v2086
        %v2088 = vrot.slane %v2081, 2
        %v2089 = vsel %vm769, %v2086, %v2088
        %v2092 = vadd.f32 %v2075, %v2087
        %v2093 = vadd.f32 %v2076, %v2089
        %s2094 = sld [smem:[#allocation7 + $0x72]]
        %v2095 = vstv %s2094
        %v2096 = vmul.f32 %v2095, %v372
        %v2097 = vmul.f32 %v2095, %v373
        %v2098 = vmul.f32 %v2095, %v374
        %v2102 = vrot.slane %v2096, 2
        %v2103 = vrot.slane %v2097, 2
        %v2104 = vsel %vm769, %v2102, %v2103
        %v2105 = vrot.slane %v2098, 2
        %v2106 = vsel %vm769, %v2103, %v2105
        %2107 = vrot.lane.b32.xlu0 %v2104, 127
        %v2108 = vpop.permute.xlu0 %2107
        %2109 = vrot.lane.b32.xlu0 %v2106, 127
        %v2110 = vpop.permute.xlu0 %2109
        %v2113 = vadd.f32 %v2092, %v2108
        %v2114 = vadd.f32 %v2093, %v2110
        %s2115 = sld [smem:[#allocation7 + $0x76]]
        %v2116 = vstv %s2115
        %v2117 = vmul.f32 %v2116, %v375
        %v2118 = vmul.f32 %v2116, %v376
        %v2119 = vmul.f32 %v2116, %v377
        %v2123 = vrot.slane %v2117, 2
        %v2124 = vrot.slane %v2118, 2
        %v2125 = vsel %vm769, %v2123, %v2124
        %v2126 = vrot.slane %v2119, 2
        %v2127 = vsel %vm769, %v2124, %v2126
        %2128 = vrot.lane.b32.xlu0 %v2125, 127
        %v2129 = vpop.permute.xlu0 %2128
        %2130 = vrot.lane.b32.xlu0 %v2127, 127
        %v2131 = vpop.permute.xlu0 %2130
        %v2134 = vadd.f32 %v2113, %v2129
        %v2135 = vadd.f32 %v2114, %v2131
        %s2136 = sld [smem:[#allocation7 + $0x7a]]
        %v2137 = vstv %s2136
        %v2138 = vmul.f32 %v2137, %v378
        %v2139 = vmul.f32 %v2137, %v379
        %v2140 = vmul.f32 %v2137, %v380
        %v2144 = vrot.slane %v2138, 2
        %v2145 = vrot.slane %v2139, 2
        %v2146 = vsel %vm769, %v2144, %v2145
        %v2147 = vrot.slane %v2140, 2
        %v2148 = vsel %vm769, %v2145, %v2147
        %2149 = vrot.lane.b32.xlu0 %v2146, 127
        %v2150 = vpop.permute.xlu0 %2149
        %2151 = vrot.lane.b32.xlu0 %v2148, 127
        %v2152 = vpop.permute.xlu0 %2151
        %v2155 = vadd.f32 %v2134, %v2150
        %v2156 = vadd.f32 %v2135, %v2152
        %s2157 = sld [smem:[#allocation7 + $0x7e]]
        %v2158 = vstv %s2157
        %v2159 = vmul.f32 %v2158, %v381
        %v2160 = vmul.f32 %v2158, %v382
        %v2161 = vmul.f32 %v2158, %v383
        %v2165 = vrot.slane %v2159, 2
        %v2166 = vrot.slane %v2160, 2
        %v2167 = vsel %vm769, %v2165, %v2166
        %v2168 = vrot.slane %v2161, 2
        %v2169 = vsel %vm769, %v2166, %v2168
        %2170 = vrot.lane.b32.xlu0 %v2167, 127
        %v2171 = vpop.permute.xlu0 %2170
        %2172 = vrot.lane.b32.xlu0 %v2169, 127
        %v2173 = vpop.permute.xlu0 %2172
        %v2176 = vadd.f32 %v2155, %v2171
        %v2177 = vadd.f32 %v2156, %v2173
        %s2178 = sld [smem:[#allocation7 + $0x82]]
        %v2179 = vstv %s2178
        %v2180 = vmul.f32 %v2179, %v372
        %v2181 = vmul.f32 %v2179, %v373
        %v2182 = vmul.f32 %v2179, %v374
        %v2186 = vrot.slane %v2180, 2
        %v2187 = vrot.slane %v2181, 2
        %v2188 = vsel %vm769, %v2186, %v2187
        %v2189 = vrot.slane %v2182, 2
        %v2190 = vsel %vm769, %v2187, %v2189
        %2191 = vrot.lane.b32.xlu0 %v2188, 126
        %v2192 = vpop.permute.xlu0 %2191
        %2193 = vrot.lane.b32.xlu0 %v2190, 126
        %v2194 = vpop.permute.xlu0 %2193
        %v2197 = vadd.f32 %v2176, %v2192
        %v2198 = vadd.f32 %v2177, %v2194
        %s2199 = sld [smem:[#allocation7 + $0x86]]
        %v2200 = vstv %s2199
        %v2201 = vmul.f32 %v2200, %v375
        %v2202 = vmul.f32 %v2200, %v376
        %v2203 = vmul.f32 %v2200, %v377
        %v2207 = vrot.slane %v2201, 2
        %v2208 = vrot.slane %v2202, 2
        %v2209 = vsel %vm769, %v2207, %v2208
        %v2210 = vrot.slane %v2203, 2
        %v2211 = vsel %vm769, %v2208, %v2210
        %2212 = vrot.lane.b32.xlu0 %v2209, 126
        %v2213 = vpop.permute.xlu0 %2212
        %2214 = vrot.lane.b32.xlu0 %v2211, 126
        %v2215 = vpop.permute.xlu0 %2214
        %v2218 = vadd.f32 %v2197, %v2213
        %v2219 = vadd.f32 %v2198, %v2215
        %s2220 = sld [smem:[#allocation7 + $0x8a]]
        %v2221 = vstv %s2220
        %v2222 = vmul.f32 %v2221, %v378
        %v2223 = vmul.f32 %v2221, %v379
        %v2224 = vmul.f32 %v2221, %v380
        %v2228 = vrot.slane %v2222, 2
        %v2229 = vrot.slane %v2223, 2
        %v2230 = vsel %vm769, %v2228, %v2229
        %v2231 = vrot.slane %v2224, 2
        %v2232 = vsel %vm769, %v2229, %v2231
        %2233 = vrot.lane.b32.xlu0 %v2230, 126
        %v2234 = vpop.permute.xlu0 %2233
        %2235 = vrot.lane.b32.xlu0 %v2232, 126
        %v2236 = vpop.permute.xlu0 %2235
        %v2239 = vadd.f32 %v2218, %v2234
        %v2240 = vadd.f32 %v2219, %v2236
        %s2241 = sld [smem:[#allocation7 + $0x8e]]
        %v2242 = vstv %s2241
        %v2243 = vmul.f32 %v2242, %v381
        %v2244 = vmul.f32 %v2242, %v382
        %v2245 = vmul.f32 %v2242, %v383
        %v2249 = vrot.slane %v2243, 2
        %v2250 = vrot.slane %v2244, 2
        %v2251 = vsel %vm769, %v2249, %v2250
        %v2252 = vrot.slane %v2245, 2
        %v2253 = vsel %vm769, %v2250, %v2252
        %2254 = vrot.lane.b32.xlu0 %v2251, 126
        %v2255 = vpop.permute.xlu0 %2254
        %2256 = vrot.lane.b32.xlu0 %v2253, 126
        %v2257 = vpop.permute.xlu0 %2256
        %v2260 = vadd.f32 %v2239, %v2255
        %v2261 = vadd.f32 %v2240, %v2257
        %v2265 = vrot.slane %v340, 1
        %v2266 = vrot.slane %v341, 1
        %v2267 = vsel %vm532, %v2265, %v2266
        %v2268 = vrot.slane %v342, 1
        %v2269 = vsel %vm532, %v2266, %v2268
        %2270 = vrot.lane.b32.xlu0 %v2267, 127
        %v2271 = vpop.permute.xlu0 %2270
        %2272 = vrot.lane.b32.xlu0 %v2269, 127
        %v2273 = vpop.permute.xlu0 %2272
        %v2276 = vsub.f32 %v2260, %v2271
        %v2277 = vsub.f32 %v2261, %v2273
        %v2278 = vmul.f32 %v2276, %v2276
        %v2279 = vmul.f32 %v2277, %v2277
        %v2280 = vadd.f32 %v1648, %v2278
        %v2281 = vadd.f32 %v1649, %v2279
        %s2282 = sadd.s32 %s384, 3
        %s2283 = sld [smem:[#allocation6 + %s2282]]
        %v2284 = vstv %s2283
        %v2285 = vadd.f32 %v2284, 0.0
        %s2286 = sld [smem:[#allocation7 + $0x3]]
        %v2287 = vstv %s2286
        %v2288 = vmul.f32 %v2287, %v372
        %v2289 = vmul.f32 %v2287, %v373
        %v2290 = vadd.f32 %v2285, %v2288
        %v2291 = vadd.f32 %v2285, %v2289
        %s2292 = sld [smem:[#allocation7 + $0x7]]
        %v2293 = vstv %s2292
        %v2294 = vmul.f32 %v2293, %v375
        %v2295 = vmul.f32 %v2293, %v376
        %v2296 = vadd.f32 %v2290, %v2294
        %v2297 = vadd.f32 %v2291, %v2295
        %s2298 = sld [smem:[#allocation7 + $0xb]]
        %v2299 = vstv %s2298
        %v2300 = vmul.f32 %v2299, %v378
        %v2301 = vmul.f32 %v2299, %v379
        %v2302 = vadd.f32 %v2296, %v2300
        %v2303 = vadd.f32 %v2297, %v2301
        %s2304 = sld [smem:[#allocation7 + $0xf]]
        %v2305 = vstv %s2304
        %v2306 = vmul.f32 %v2305, %v381
        %v2307 = vmul.f32 %v2305, %v382
        %v2308 = vadd.f32 %v2302, %v2306
        %v2309 = vadd.f32 %v2303, %v2307
        %s2310 = sld [smem:[#allocation7 + $0x13]]
        %v2311 = vstv %s2310
        %v2312 = vmul.f32 %v2311, %v372
        %v2313 = vmul.f32 %v2311, %v373
        %2316 = vrot.lane.b32.xlu0 %v2312, 127
        %v2317 = vpop.permute.xlu0 %2316
        %2318 = vrot.lane.b32.xlu0 %v2313, 127
        %v2319 = vpop.permute.xlu0 %2318
        %v2322 = vadd.f32 %v2308, %v2317
        %v2323 = vadd.f32 %v2309, %v2319
        %s2324 = sld [smem:[#allocation7 + $0x17]]
        %v2325 = vstv %s2324
        %v2326 = vmul.f32 %v2325, %v375
        %v2327 = vmul.f32 %v2325, %v376
        %2330 = vrot.lane.b32.xlu0 %v2326, 127
        %v2331 = vpop.permute.xlu0 %2330
        %2332 = vrot.lane.b32.xlu0 %v2327, 127
        %v2333 = vpop.permute.xlu0 %2332
        %v2336 = vadd.f32 %v2322, %v2331
        %v2337 = vadd.f32 %v2323, %v2333
        %s2338 = sld [smem:[#allocation7 + $0x1b]]
        %v2339 = vstv %s2338
        %v2340 = vmul.f32 %v2339, %v378
        %v2341 = vmul.f32 %v2339, %v379
        %2344 = vrot.lane.b32.xlu0 %v2340, 127
        %v2345 = vpop.permute.xlu0 %2344
        %2346 = vrot.lane.b32.xlu0 %v2341, 127
        %v2347 = vpop.permute.xlu0 %2346
        %v2350 = vadd.f32 %v2336, %v2345
        %v2351 = vadd.f32 %v2337, %v2347
        %s2352 = sld [smem:[#allocation7 + $0x1f]]
        %v2353 = vstv %s2352
        %v2354 = vmul.f32 %v2353, %v381
        %v2355 = vmul.f32 %v2353, %v382
        %2358 = vrot.lane.b32.xlu0 %v2354, 127
        %v2359 = vpop.permute.xlu0 %2358
        %2360 = vrot.lane.b32.xlu0 %v2355, 127
        %v2361 = vpop.permute.xlu0 %2360
        %v2364 = vadd.f32 %v2350, %v2359
        %v2365 = vadd.f32 %v2351, %v2361
        %s2366 = sld [smem:[#allocation7 + $0x23]]
        %v2367 = vstv %s2366
        %v2368 = vmul.f32 %v2367, %v372
        %v2369 = vmul.f32 %v2367, %v373
        %2372 = vrot.lane.b32.xlu0 %v2368, 126
        %v2373 = vpop.permute.xlu0 %2372
        %2374 = vrot.lane.b32.xlu0 %v2369, 126
        %v2375 = vpop.permute.xlu0 %2374
        %v2378 = vadd.f32 %v2364, %v2373
        %v2379 = vadd.f32 %v2365, %v2375
        %s2380 = sld [smem:[#allocation7 + $0x27]]
        %v2381 = vstv %s2380
        %v2382 = vmul.f32 %v2381, %v375
        %v2383 = vmul.f32 %v2381, %v376
        %2386 = vrot.lane.b32.xlu0 %v2382, 126
        %v2387 = vpop.permute.xlu0 %2386
        %2388 = vrot.lane.b32.xlu0 %v2383, 126
        %v2389 = vpop.permute.xlu0 %2388
        %v2392 = vadd.f32 %v2378, %v2387
        %v2393 = vadd.f32 %v2379, %v2389
        %s2394 = sld [smem:[#allocation7 + $0x2b]]
        %v2395 = vstv %s2394
        %v2396 = vmul.f32 %v2395, %v378
        %v2397 = vmul.f32 %v2395, %v379
        %2400 = vrot.lane.b32.xlu0 %v2396, 126
        %v2401 = vpop.permute.xlu0 %2400
        %2402 = vrot.lane.b32.xlu0 %v2397, 126
        %v2403 = vpop.permute.xlu0 %2402
        %v2406 = vadd.f32 %v2392, %v2401
        %v2407 = vadd.f32 %v2393, %v2403
        %s2408 = sld [smem:[#allocation7 + $0x2f]]
        %v2409 = vstv %s2408
        %v2410 = vmul.f32 %v2409, %v381
        %v2411 = vmul.f32 %v2409, %v382
        %2414 = vrot.lane.b32.xlu0 %v2410, 126
        %v2415 = vpop.permute.xlu0 %2414
        %2416 = vrot.lane.b32.xlu0 %v2411, 126
        %v2417 = vpop.permute.xlu0 %2416
        %v2420 = vadd.f32 %v2406, %v2415
        %v2421 = vadd.f32 %v2407, %v2417
        %s2422 = sld [smem:[#allocation7 + $0x33]]
        %v2423 = vstv %s2422
        %v2424 = vmul.f32 %v2423, %v372
        %v2425 = vmul.f32 %v2423, %v373
        %v2426 = vmul.f32 %v2423, %v374
        %v2430 = vrot.slane %v2424, 1
        %v2431 = vrot.slane %v2425, 1
        %v2432 = vsel %vm532, %v2430, %v2431
        %v2433 = vrot.slane %v2426, 1
        %v2434 = vsel %vm532, %v2431, %v2433
        %v2437 = vadd.f32 %v2420, %v2432
        %v2438 = vadd.f32 %v2421, %v2434
        %s2439 = sld [smem:[#allocation7 + $0x37]]
        %v2440 = vstv %s2439
        %v2441 = vmul.f32 %v2440, %v375
        %v2442 = vmul.f32 %v2440, %v376
        %v2443 = vmul.f32 %v2440, %v377
        %v2447 = vrot.slane %v2441, 1
        %v2448 = vrot.slane %v2442, 1
        %v2449 = vsel %vm532, %v2447, %v2448
        %v2450 = vrot.slane %v2443, 1
        %v2451 = vsel %vm532, %v2448, %v2450
        %v2454 = vadd.f32 %v2437, %v2449
        %v2455 = vadd.f32 %v2438, %v2451
        %s2456 = sld [smem:[#allocation7 + $0x3b]]
        %v2457 = vstv %s2456
        %v2458 = vmul.f32 %v2457, %v378
        %v2459 = vmul.f32 %v2457, %v379
        %v2460 = vmul.f32 %v2457, %v380
        %v2464 = vrot.slane %v2458, 1
        %v2465 = vrot.slane %v2459, 1
        %v2466 = vsel %vm532, %v2464, %v2465
        %v2467 = vrot.slane %v2460, 1
        %v2468 = vsel %vm532, %v2465, %v2467
        %v2471 = vadd.f32 %v2454, %v2466
        %v2472 = vadd.f32 %v2455, %v2468
        %s2473 = sld [smem:[#allocation7 + $0x3f]]
        %v2474 = vstv %s2473
        %v2475 = vmul.f32 %v2474, %v381
        %v2476 = vmul.f32 %v2474, %v382
        %v2477 = vmul.f32 %v2474, %v383
        %v2481 = vrot.slane %v2475, 1
        %v2482 = vrot.slane %v2476, 1
        %v2483 = vsel %vm532, %v2481, %v2482
        %v2484 = vrot.slane %v2477, 1
        %v2485 = vsel %vm532, %v2482, %v2484
        %v2488 = vadd.f32 %v2471, %v2483
        %v2489 = vadd.f32 %v2472, %v2485
        %s2490 = sld [smem:[#allocation7 + $0x43]]
        %v2491 = vstv %s2490
        %v2492 = vmul.f32 %v2491, %v372
        %v2493 = vmul.f32 %v2491, %v373
        %v2494 = vmul.f32 %v2491, %v374
        %v2498 = vrot.slane %v2492, 1
        %v2499 = vrot.slane %v2493, 1
        %v2500 = vsel %vm532, %v2498, %v2499
        %v2501 = vrot.slane %v2494, 1
        %v2502 = vsel %vm532, %v2499, %v2501
        %2503 = vrot.lane.b32.xlu0 %v2500, 127
        %v2504 = vpop.permute.xlu0 %2503
        %2505 = vrot.lane.b32.xlu0 %v2502, 127
        %v2506 = vpop.permute.xlu0 %2505
        %v2509 = vadd.f32 %v2488, %v2504
        %v2510 = vadd.f32 %v2489, %v2506
        %s2511 = sld [smem:[#allocation7 + $0x47]]
        %v2512 = vstv %s2511
        %v2513 = vmul.f32 %v2512, %v375
        %v2514 = vmul.f32 %v2512, %v376
        %v2515 = vmul.f32 %v2512, %v377
        %v2519 = vrot.slane %v2513, 1
        %v2520 = vrot.slane %v2514, 1
        %v2521 = vsel %vm532, %v2519, %v2520
        %v2522 = vrot.slane %v2515, 1
        %v2523 = vsel %vm532, %v2520, %v2522
        %2524 = vrot.lane.b32.xlu0 %v2521, 127
        %v2525 = vpop.permute.xlu0 %2524
        %2526 = vrot.lane.b32.xlu0 %v2523, 127
        %v2527 = vpop.permute.xlu0 %2526
        %v2530 = vadd.f32 %v2509, %v2525
        %v2531 = vadd.f32 %v2510, %v2527
        %s2532 = sld [smem:[#allocation7 + $0x4b]]
        %v2533 = vstv %s2532
        %v2534 = vmul.f32 %v2533, %v378
        %v2535 = vmul.f32 %v2533, %v379
        %v2536 = vmul.f32 %v2533, %v380
        %v2540 = vrot.slane %v2534, 1
        %v2541 = vrot.slane %v2535, 1
        %v2542 = vsel %vm532, %v2540, %v2541
        %v2543 = vrot.slane %v2536, 1
        %v2544 = vsel %vm532, %v2541, %v2543
        %2545 = vrot.lane.b32.xlu0 %v2542, 127
        %v2546 = vpop.permute.xlu0 %2545
        %2547 = vrot.lane.b32.xlu0 %v2544, 127
        %v2548 = vpop.permute.xlu0 %2547
        %v2551 = vadd.f32 %v2530, %v2546
        %v2552 = vadd.f32 %v2531, %v2548
        %s2553 = sld [smem:[#allocation7 + $0x4f]]
        %v2554 = vstv %s2553
        %v2555 = vmul.f32 %v2554, %v381
        %v2556 = vmul.f32 %v2554, %v382
        %v2557 = vmul.f32 %v2554, %v383
        %v2561 = vrot.slane %v2555, 1
        %v2562 = vrot.slane %v2556, 1
        %v2563 = vsel %vm532, %v2561, %v2562
        %v2564 = vrot.slane %v2557, 1
        %v2565 = vsel %vm532, %v2562, %v2564
        %2566 = vrot.lane.b32.xlu0 %v2563, 127
        %v2567 = vpop.permute.xlu0 %2566
        %2568 = vrot.lane.b32.xlu0 %v2565, 127
        %v2569 = vpop.permute.xlu0 %2568
        %v2572 = vadd.f32 %v2551, %v2567
        %v2573 = vadd.f32 %v2552, %v2569
        %s2574 = sld [smem:[#allocation7 + $0x53]]
        %v2575 = vstv %s2574
        %v2576 = vmul.f32 %v2575, %v372
        %v2577 = vmul.f32 %v2575, %v373
        %v2578 = vmul.f32 %v2575, %v374
        %v2582 = vrot.slane %v2576, 1
        %v2583 = vrot.slane %v2577, 1
        %v2584 = vsel %vm532, %v2582, %v2583
        %v2585 = vrot.slane %v2578, 1
        %v2586 = vsel %vm532, %v2583, %v2585
        %2587 = vrot.lane.b32.xlu0 %v2584, 126
        %v2588 = vpop.permute.xlu0 %2587
        %2589 = vrot.lane.b32.xlu0 %v2586, 126
        %v2590 = vpop.permute.xlu0 %2589
        %v2593 = vadd.f32 %v2572, %v2588
        %v2594 = vadd.f32 %v2573, %v2590
        %s2595 = sld [smem:[#allocation7 + $0x57]]
        %v2596 = vstv %s2595
        %v2597 = vmul.f32 %v2596, %v375
        %v2598 = vmul.f32 %v2596, %v376
        %v2599 = vmul.f32 %v2596, %v377
        %v2603 = vrot.slane %v2597, 1
        %v2604 = vrot.slane %v2598, 1
        %v2605 = vsel %vm532, %v2603, %v2604
        %v2606 = vrot.slane %v2599, 1
        %v2607 = vsel %vm532, %v2604, %v2606
        %2608 = vrot.lane.b32.xlu0 %v2605, 126
        %v2609 = vpop.permute.xlu0 %2608
        %2610 = vrot.lane.b32.xlu0 %v2607, 126
        %v2611 = vpop.permute.xlu0 %2610
        %v2614 = vadd.f32 %v2593, %v2609
        %v2615 = vadd.f32 %v2594, %v2611
        %s2616 = sld [smem:[#allocation7 + $0x5b]]
        %v2617 = vstv %s2616
        %v2618 = vmul.f32 %v2617, %v378
        %v2619 = vmul.f32 %v2617, %v379
        %v2620 = vmul.f32 %v2617, %v380
        %v2624 = vrot.slane %v2618, 1
        %v2625 = vrot.slane %v2619, 1
        %v2626 = vsel %vm532, %v2624, %v2625
        %v2627 = vrot.slane %v2620, 1
        %v2628 = vsel %vm532, %v2625, %v2627
        %2629 = vrot.lane.b32.xlu0 %v2626, 126
        %v2630 = vpop.permute.xlu0 %2629
        %2631 = vrot.lane.b32.xlu0 %v2628, 126
        %v2632 = vpop.permute.xlu0 %2631
        %v2635 = vadd.f32 %v2614, %v2630
        %v2636 = vadd.f32 %v2615, %v2632
        %s2637 = sld [smem:[#allocation7 + $0x5f]]
        %v2638 = vstv %s2637
        %v2639 = vmul.f32 %v2638, %v381
        %v2640 = vmul.f32 %v2638, %v382
        %v2641 = vmul.f32 %v2638, %v383
        %v2645 = vrot.slane %v2639, 1
        %v2646 = vrot.slane %v2640, 1
        %v2647 = vsel %vm532, %v2645, %v2646
        %v2648 = vrot.slane %v2641, 1
        %v2649 = vsel %vm532, %v2646, %v2648
        %2650 = vrot.lane.b32.xlu0 %v2647, 126
        %v2651 = vpop.permute.xlu0 %2650
        %2652 = vrot.lane.b32.xlu0 %v2649, 126
        %v2653 = vpop.permute.xlu0 %2652
        %v2656 = vadd.f32 %v2635, %v2651
        %v2657 = vadd.f32 %v2636, %v2653
        %s2658 = sld [smem:[#allocation7 + $0x63]]
        %v2659 = vstv %s2658
        %v2660 = vmul.f32 %v2659, %v372
        %v2661 = vmul.f32 %v2659, %v373
        %v2662 = vmul.f32 %v2659, %v374
        %v2666 = vrot.slane %v2660, 2
        %v2667 = vrot.slane %v2661, 2
        %v2668 = vsel %vm769, %v2666, %v2667
        %v2669 = vrot.slane %v2662, 2
        %v2670 = vsel %vm769, %v2667, %v2669
        %v2673 = vadd.f32 %v2656, %v2668
        %v2674 = vadd.f32 %v2657, %v2670
        %s2675 = sld [smem:[#allocation7 + $0x67]]
        %v2676 = vstv %s2675
        %v2677 = vmul.f32 %v2676, %v375
        %v2678 = vmul.f32 %v2676, %v376
        %v2679 = vmul.f32 %v2676, %v377
        %v2683 = vrot.slane %v2677, 2
        %v2684 = vrot.slane %v2678, 2
        %v2685 = vsel %vm769, %v2683, %v2684
        %v2686 = vrot.slane %v2679, 2
        %v2687 = vsel %vm769, %v2684, %v2686
        %v2690 = vadd.f32 %v2673, %v2685
        %v2691 = vadd.f32 %v2674, %v2687
        %s2692 = sld [smem:[#allocation7 + $0x6b]]
        %v2693 = vstv %s2692
        %v2694 = vmul.f32 %v2693, %v378
        %v2695 = vmul.f32 %v2693, %v379
        %v2696 = vmul.f32 %v2693, %v380
        %v2700 = vrot.slane %v2694, 2
        %v2701 = vrot.slane %v2695, 2
        %v2702 = vsel %vm769, %v2700, %v2701
        %v2703 = vrot.slane %v2696, 2
        %v2704 = vsel %vm769, %v2701, %v2703
        %v2707 = vadd.f32 %v2690, %v2702
        %v2708 = vadd.f32 %v2691, %v2704
        %s2709 = sld [smem:[#allocation7 + $0x6f]]
        %v2710 = vstv %s2709
        %v2711 = vmul.f32 %v2710, %v381
        %v2712 = vmul.f32 %v2710, %v382
        %v2713 = vmul.f32 %v2710, %v383
        %v2717 = vrot.slane %v2711, 2
        %v2718 = vrot.slane %v2712, 2
        %v2719 = vsel %vm769, %v2717, %v2718
        %v2720 = vrot.slane %v2713, 2
        %v2721 = vsel %vm769, %v2718, %v2720
        %v2724 = vadd.f32 %v2707, %v2719
        %v2725 = vadd.f32 %v2708, %v2721
        %s2726 = sld [smem:[#allocation7 + $0x73]]
        %v2727 = vstv %s2726
        %v2728 = vmul.f32 %v2727, %v372
        %v2729 = vmul.f32 %v2727, %v373
        %v2730 = vmul.f32 %v2727, %v374
        %v2734 = vrot.slane %v2728, 2
        %v2735 = vrot.slane %v2729, 2
        %v2736 = vsel %vm769, %v2734, %v2735
        %v2737 = vrot.slane %v2730, 2
        %v2738 = vsel %vm769, %v2735, %v2737
        %2739 = vrot.lane.b32.xlu0 %v2736, 127
        %v2740 = vpop.permute.xlu0 %2739
        %2741 = vrot.lane.b32.xlu0 %v2738, 127
        %v2742 = vpop.permute.xlu0 %2741
        %v2745 = vadd.f32 %v2724, %v2740
        %v2746 = vadd.f32 %v2725, %v2742
        %s2747 = sld [smem:[#allocation7 + $0x77]]
        %v2748 = vstv %s2747
        %v2749 = vmul.f32 %v2748, %v375
        %v2750 = vmul.f32 %v2748, %v376
        %v2751 = vmul.f32 %v2748, %v377
        %v2755 = vrot.slane %v2749, 2
        %v2756 = vrot.slane %v2750, 2
        %v2757 = vsel %vm769, %v2755, %v2756
        %v2758 = vrot.slane %v2751, 2
        %v2759 = vsel %vm769, %v2756, %v2758
        %2760 = vrot.lane.b32.xlu0 %v2757, 127
        %v2761 = vpop.permute.xlu0 %2760
        %2762 = vrot.lane.b32.xlu0 %v2759, 127
        %v2763 = vpop.permute.xlu0 %2762
        %v2766 = vadd.f32 %v2745, %v2761
        %v2767 = vadd.f32 %v2746, %v2763
        %s2768 = sld [smem:[#allocation7 + $0x7b]]
        %v2769 = vstv %s2768
        %v2770 = vmul.f32 %v2769, %v378
        %v2771 = vmul.f32 %v2769, %v379
        %v2772 = vmul.f32 %v2769, %v380
        %v2776 = vrot.slane %v2770, 2
        %v2777 = vrot.slane %v2771, 2
        %v2778 = vsel %vm769, %v2776, %v2777
        %v2779 = vrot.slane %v2772, 2
        %v2780 = vsel %vm769, %v2777, %v2779
        %2781 = vrot.lane.b32.xlu0 %v2778, 127
        %v2782 = vpop.permute.xlu0 %2781
        %2783 = vrot.lane.b32.xlu0 %v2780, 127
        %v2784 = vpop.permute.xlu0 %2783
        %v2787 = vadd.f32 %v2766, %v2782
        %v2788 = vadd.f32 %v2767, %v2784
        %s2789 = sld [smem:[#allocation7 + $0x7f]]
        %v2790 = vstv %s2789
        %v2791 = vmul.f32 %v2790, %v381
        %v2792 = vmul.f32 %v2790, %v382
        %v2793 = vmul.f32 %v2790, %v383
        %v2797 = vrot.slane %v2791, 2
        %v2798 = vrot.slane %v2792, 2
        %v2799 = vsel %vm769, %v2797, %v2798
        %v2800 = vrot.slane %v2793, 2
        %v2801 = vsel %vm769, %v2798, %v2800
        %2802 = vrot.lane.b32.xlu0 %v2799, 127
        %v2803 = vpop.permute.xlu0 %2802
        %2804 = vrot.lane.b32.xlu0 %v2801, 127
        %v2805 = vpop.permute.xlu0 %2804
        %v2808 = vadd.f32 %v2787, %v2803
        %v2809 = vadd.f32 %v2788, %v2805
        %s2810 = sld [smem:[#allocation7 + $0x83]]
        %v2811 = vstv %s2810
        %v2812 = vmul.f32 %v2811, %v372
        %v2813 = vmul.f32 %v2811, %v373
        %v2814 = vmul.f32 %v2811, %v374
        %v2818 = vrot.slane %v2812, 2
        %v2819 = vrot.slane %v2813, 2
        %v2820 = vsel %vm769, %v2818, %v2819
        %v2821 = vrot.slane %v2814, 2
        %v2822 = vsel %vm769, %v2819, %v2821
        %2823 = vrot.lane.b32.xlu0 %v2820, 126
        %v2824 = vpop.permute.xlu0 %2823
        %2825 = vrot.lane.b32.xlu0 %v2822, 126
        %v2826 = vpop.permute.xlu0 %2825
        %v2829 = vadd.f32 %v2808, %v2824
        %v2830 = vadd.f32 %v2809, %v2826
        %s2831 = sld [smem:[#allocation7 + $0x87]]
        %v2832 = vstv %s2831
        %v2833 = vmul.f32 %v2832, %v375
        %v2834 = vmul.f32 %v2832, %v376
        %v2835 = vmul.f32 %v2832, %v377
        %v2839 = vrot.slane %v2833, 2
        %v2840 = vrot.slane %v2834, 2
        %v2841 = vsel %vm769, %v2839, %v2840
        %v2842 = vrot.slane %v2835, 2
        %v2843 = vsel %vm769, %v2840, %v2842
        %2844 = vrot.lane.b32.xlu0 %v2841, 126
        %v2845 = vpop.permute.xlu0 %2844
        %2846 = vrot.lane.b32.xlu0 %v2843, 126
        %v2847 = vpop.permute.xlu0 %2846
        %v2850 = vadd.f32 %v2829, %v2845
        %v2851 = vadd.f32 %v2830, %v2847
        %s2852 = sld [smem:[#allocation7 + $0x8b]]
        %v2853 = vstv %s2852
        %v2854 = vmul.f32 %v2853, %v378
        %v2855 = vmul.f32 %v2853, %v379
        %v2856 = vmul.f32 %v2853, %v380
        %v2860 = vrot.slane %v2854, 2
        %v2861 = vrot.slane %v2855, 2
        %v2862 = vsel %vm769, %v2860, %v2861
        %v2863 = vrot.slane %v2856, 2
        %v2864 = vsel %vm769, %v2861, %v2863
        %2865 = vrot.lane.b32.xlu0 %v2862, 126
        %v2866 = vpop.permute.xlu0 %2865
        %2867 = vrot.lane.b32.xlu0 %v2864, 126
        %v2868 = vpop.permute.xlu0 %2867
        %v2871 = vadd.f32 %v2850, %v2866
        %v2872 = vadd.f32 %v2851, %v2868
        %s2873 = sld [smem:[#allocation7 + $0x8f]]
        %v2874 = vstv %s2873
        %v2875 = vmul.f32 %v2874, %v381
        %v2876 = vmul.f32 %v2874, %v382
        %v2877 = vmul.f32 %v2874, %v383
        %v2881 = vrot.slane %v2875, 2
        %v2882 = vrot.slane %v2876, 2
        %v2883 = vsel %vm769, %v2881, %v2882
        %v2884 = vrot.slane %v2877, 2
        %v2885 = vsel %vm769, %v2882, %v2884
        %2886 = vrot.lane.b32.xlu0 %v2883, 126
        %v2887 = vpop.permute.xlu0 %2886
        %2888 = vrot.lane.b32.xlu0 %v2885, 126
        %v2889 = vpop.permute.xlu0 %2888
        %v2892 = vadd.f32 %v2871, %v2887
        %v2893 = vadd.f32 %v2872, %v2889
        %v2897 = vrot.slane %v343, 1
        %v2898 = vrot.slane %v344, 1
        %v2899 = vsel %vm532, %v2897, %v2898
        %v2900 = vrot.slane %v345, 1
        %v2901 = vsel %vm532, %v2898, %v2900
        %2902 = vrot.lane.b32.xlu0 %v2899, 127
        %v2903 = vpop.permute.xlu0 %2902
        %2904 = vrot.lane.b32.xlu0 %v2901, 127
        %v2905 = vpop.permute.xlu0 %2904
        %v2908 = vsub.f32 %v2892, %v2903
        %v2909 = vsub.f32 %v2893, %v2905
        %v2910 = vmul.f32 %v2908, %v2908
        %v2911 = vmul.f32 %v2909, %v2909
        %v2912 = vadd.f32 %v2280, %v2910
        %v2913 = vadd.f32 %v2281, %v2911
        %vm2914 = vcmask 130048
        %v2915 = vsel %vm2914, %v2912, 0.0
        %v2916 = vsel %vm2914, %v2913, 0.0
        %v2917 = vadd.f32 %v2915, %v2916
        %2918 = vadd.xlane.f32.xlu0 %v2917
        %v2919 = vpop.xlane.xlu0 %2918
        %v2920 = vrot.slane %v2919, 4
        %v2921 = vadd.f32 %v2919, %v2920
        %v2922 = vrot.slane %v2921, 2
        %v2923 = vadd.f32 %v2921, %v2922
        %v2924 = vrot.slane %v2923, 1
        %v2925 = vadd.f32 %v2923, %v2924
        %s2926 = vtos %v2925
        %v2927 = vstv %s2926
        %2928 = vst [vmem:[%s319] sm:$0x1] %v2927
        %p2929 = scmp.lt.s32.totalorder %s20, 1
        %s2930 = scalar_select %p2929, %s20, 1
        %s2931 = scalar_lea.vmem %s6, %s2930
        // Predicated region
        $region61: #{gaussian_diffusion_forward.1} parent=43 // pred_check
          %p2932 = pneg %p174
        $region62: #{gaussian_diffusion_forward.1} parent=43 // pred_check_branch
          %2934 = sbr.rel (%p2932) target = $region64
        $region63: #{gaussian_diffusion_forward.1} parent=43 // pred_region
          _
        $region64: #{gaussian_diffusion_forward.1} parent=43 // pred_fallthru
          _
      $region44: #{gaussian_diffusion_forward.1} parent=5 // pred_fallthru
        _
      %p2935 = scmp.le.s32.totalorder 2, %s15
      // Predicated region
      $region65: #{gaussian_diffusion_forward.1} parent=5 // pred_check
        %p2936 = pneg %p2935
      $region66: #{gaussian_diffusion_forward.1} parent=5 // pred_check_branch
        %2938 = sbr.rel (%p2936) target = $region68
      $region67: #{gaussian_diffusion_forward.1} parent=5 // pred_region
        %s2939 = ssub.s32 %s15, 2
        // Predicated region
        $region69: #{gaussian_diffusion_forward.1} parent=67 // pred_check
          %p2940 = pneg %p180
        $region70: #{gaussian_diffusion_forward.1} parent=67 // pred_check_branch
          %2942 = sbr.rel (%p2940) target = $region72
        $region71: #{gaussian_diffusion_forward.1} parent=67 // pred_region
          %p2943 = scmp.lt.s32.totalorder %s21, 1
          %s2944 = scalar_select %p2943, %s21, 1
          %s2945 = scalar_lea.vmem %s6, %s2944
        $region72: #{gaussian_diffusion_forward.1} parent=67 // pred_fallthru
          _
      $region68: #{gaussian_diffusion_forward.1} parent=5 // pred_fallthru
        _
    $region6: #{gaussian_diffusion_forward.1} parent=1 // loop_footer
      %s19 = sadd.s32 1, %s15
    $region7: #{gaussian_diffusion_forward.1} parent=1 // loop_footer_branch
      %14 = sbr.rel target = $region3
    $region8: #{gaussian_diffusion_forward.1} parent=1 // loop_exit
      _
    %2946 = vsyncpa [#allocation3], 1
    %s2947 = scalar_lea.sflag [#allocation3], 1
    %2948 = vsyncpa %s2947, 1
    %2949 = vsyncpa [#allocation5], 1
    %2950 = vsyncpa [#allocation8], 1

</llo_original>
